<compile_context>
chip_gen: v7x
topology: tpu7x:2x2x1
jax: 0.10.0
libtpu: 0.0.40
codegen_flags: <defaults>
</compile_context>

<pallas_src>
import functools

import jax
import jax.numpy as jnp
from jax.experimental import pallas as pl
from jax.experimental.pallas import tpu as pltpu


def _ipe_kernel(x_ref, s_ref, b_ref, e_ref, o_ref, *, atoms):
    # x_ref: (R, KD)   packed positions, KD >= pack (extra columns are zero)
    # s_ref: (KD, K4)  one-hot slot selector: S[q, c] = 1 iff c // atoms == q
    # b_ref: (1, K4)   within-slot column index (c % atoms), -2 on padded cols
    # e_ref: (K4, N)   block-diagonal embedding table kron(I_pack, E_pad)
    # o_ref: (R, N)    packed output, N = pack * d_pad (multiple of 128)
    xc = jnp.clip(x_ref[...] * atoms, 0.0, float(atoms - 1))        # (R, KD)

    # Broadcast slot q's clipped position across its own K-columns with a tiny
    # K=KD matmul on the idle MXU slot.  S entries are exactly 0/1, so with
    # HIGHEST precision C[r, c] == xc[r, c // atoms] exactly.
    c = jnp.dot(xc, s_ref[...],
                precision=jax.lax.Precision.HIGHEST,
                preferred_element_type=jnp.float32)                 # (R, K4)

    # Single tent: (1 - frac) at the floor column, frac at the ceil column,
    # 0 elsewhere (and 0 on padded K columns, where b = -2 and E rows are 0).
    # Reproduces E[floor]*(1-frac) + E[ceil]*frac incl. the clip-at-edges case.
    w = jnp.maximum(0.0, 1.0 - jnp.abs(b_ref[...] - c))             # (R, K4)

    # Gather-by-matmul against the block-diagonal table -> lane-dense output.
    o_ref[...] = jnp.dot(w, e_ref[...],
                         precision=jax.lax.Precision.HIGHEST,
                         preferred_element_type=jnp.float32).astype(o_ref.dtype)


def interpole_positional_embedding(x, embedding_weight, *,
                                   tile_m=8192, out_dtype=jnp.float32):
    """x: float array of any shape (positions ~[0,1]); embedding_weight: (atoms, D).

    Returns x.shape + (D,) in `out_dtype` (default float32) — same forward as
    the PyTorch module.
    """
    atoms, embed_dim = embedding_weight.shape
    orig_shape = x.shape
    m = int(x.size)

    # Lane-dense packing: pad D so a packed output row is a multiple of 128.
    if embed_dim >= 128:
        d_pad = pl.cdiv(embed_dim, 128) * 128
        pack = 1
    else:
        d_pad = int(pl.next_power_of_2(embed_dim))
        pack = 128 // d_pad
    kdim = max(pack, 8)                      # selector-matmul K, sublane multiple

    # Tile selection: big tiles to amortize ~0.35us/step, >=4 steps when the
    # input allows (2 steps per v7x TensorCore), out block capped at ~4 MiB.
    row_unit = 8 * pack
    target_steps = 4
    tm_cap = max(row_unit, ((4 * 1024 * 1024) // (4 * d_pad)) // row_unit * row_unit)
    tm = min(tile_m, tm_cap, max(row_unit, pl.cdiv(m, target_steps)))
    tm = pl.cdiv(tm, row_unit) * row_unit
    m_pad = pl.cdiv(m, tm) * tm

    # Pack `pack` consecutive positions per row; pad the lane dim to kdim.
    x_flat = jnp.reshape(x, (m,)).astype(jnp.float32)
    if m_pad != m:
        x_flat = jnp.pad(x_flat, (0, m_pad - m))
    rows = m_pad // pack
    x2d = x_flat.reshape(rows, pack)
    if kdim != pack:
        x2d = jnp.pad(x2d, ((0, 0), (0, kdim - pack)))

    # Constants (DMA'd once: constant index_maps).
    k4 = pl.cdiv(pack * atoms, 128) * 128
    e_pad = jnp.pad(embedding_weight.astype(jnp.float32),
                    ((0, 0), (0, d_pad - embed_dim)))
    e4 = jnp.kron(jnp.eye(pack, dtype=jnp.float32), e_pad)     # (pack*atoms, pack*d_pad)
    e4 = jnp.pad(e4, ((0, k4 - pack * atoms), (0, 0)))         # zero-padded K rows

    col = jnp.arange(k4)
    sel = ((col[None, :] // atoms == jnp.arange(kdim)[:, None])
           & (col[None, :] < pack * atoms)).astype(jnp.float32)          # (kdim, k4)
    brow = jnp.where(col < pack * atoms,
                     (col % atoms).astype(jnp.float32), -2.0)[None, :]   # (1, k4)

    r_tile = tm // pack
    n_out = pack * d_pad
    grid = (m_pad // tm,)

    cost = pl.CostEstimate(
        flops=2 * rows * k4 * (n_out + kdim),
        transcendentals=0,
        bytes_accessed=4 * (rows * kdim + rows * n_out + k4 * n_out
                            + kdim * k4 + k4),
    )

    out = pl.pallas_call(
        functools.partial(_ipe_kernel, atoms=atoms),
        out_shape=jax.ShapeDtypeStruct((rows, n_out), out_dtype),
        grid_spec=pltpu.PrefetchScalarGridSpec(
            num_scalar_prefetch=0,
            grid=grid,
            in_specs=[
                pl.BlockSpec((r_tile, kdim), lambda i: (i, 0)),   # positions
                pl.BlockSpec((kdim, k4), lambda i: (0, 0)),       # slot selector
                pl.BlockSpec((1, k4), lambda i: (0, 0)),          # within-slot index
                pl.BlockSpec((k4, n_out), lambda i: (0, 0)),      # block-diag table
            ],
            out_specs=pl.BlockSpec((r_tile, n_out), lambda i: (i, 0)),
        ),
        compiler_params=pltpu.CompilerParams(
            dimension_semantics=("parallel",),
            vmem_limit_bytes=40 * 1024 * 1024,
        ),
        cost_estimate=cost,
    )(x2d, sel, brow, e4)

    # (rows, pack*d_pad) -> (m_pad, d_pad) is a free contiguous reshape; then
    # strip row/lane padding.
    out = out.reshape(m_pad, d_pad)[:m, :embed_dim]
    return out.reshape(orig_shape + (embed_dim,))


def _reference(x, emb, atoms):
    xv = x.astype(jnp.float32) * atoms
    xf = jnp.floor(xv)
    fi = jnp.clip(xf, 0, atoms - 1).astype(jnp.int32)
    ci = jnp.clip(jnp.ceil(xv), 0, atoms - 1).astype(jnp.int32)
    frac = (xv - xf)[..., None]
    return jnp.take(emb, fi, axis=0) * (1.0 - frac) + jnp.take(emb, ci, axis=0) * frac


if __name__ == "__main__":
    embed_dim = 32
    embed_atoms = 51

    key = jax.random.PRNGKey(0)
    k_emb, k_x = jax.random.split(key)

    # nn.Embedding default init: N(0, 1)
    embedding_weight = jax.random.normal(k_emb, (embed_atoms, embed_dim), jnp.float32)

    # Input: normalized positions in [0, 1), NCHW-shaped float tensor.
    x = jax.random.uniform(k_x, (2, 4, 16, 16), jnp.float32)

    out = jax.block_until_ready(
        interpole_positional_embedding(x, embedding_weight))

    ref = _reference(x, embedding_weight, embed_atoms)
    assert out.shape == x.shape + (embed_dim,)
    assert jnp.allclose(out, ref, atol=1e-5, rtol=1e-5)

    # Edge cases: exact 0, exact 1 (clipped ceil/floor), near-1, mid-bin.
    x_edge = jnp.array([0.0, 1.0, 1.0 - 1e-7, 0.999, 0.5, 0.0196],
                       jnp.float32).reshape(1, 6)
    out_e = jax.block_until_ready(
        interpole_positional_embedding(x_edge, embedding_weight))
    ref_e = _reference(x_edge, embedding_weight, embed_atoms)
    assert jnp.allclose(out_e, ref_e, atol=1e-5, rtol=1e-5)

    print("KERNEL_OK")
</pallas_src>

<mosaic_0001>
module attributes {stable_mosaic.version = 11 : i64} {
  func.func @_ipe_kernel(%arg0: i32, %arg1: memref<128x8xf32, #tpu.memory_space<vmem>>, %arg2: memref<8x256xf32, #tpu.memory_space<vmem>>, %arg3: memref<1x256xf32, #tpu.memory_space<vmem>>, %arg4: memref<256x128xf32, #tpu.memory_space<vmem>>, %arg5: memref<128x128xf32, #tpu.memory_space<vmem>>) attributes {dimension_semantics = [#tpu.dimension_semantics<parallel>], iteration_bounds = array<i64: 4>, scalar_prefetch = 0 : i64, scratch_operands = 0 : i64, tpu.core_type = #tpu.core_type<tc>, window_params = [{transform_indices = @transform_0, window_bounds = array<i64: 128, 8>}, {pipeline_mode = #tpu.pipeline_mode<synchronous>, transform_indices = @transform_1, window_bounds = array<i64: 8, 256>}, {pipeline_mode = #tpu.pipeline_mode<synchronous>, transform_indices = @transform_2, window_bounds = array<i64: 1, 256>}, {pipeline_mode = #tpu.pipeline_mode<synchronous>, transform_indices = @transform_3, window_bounds = array<i64: 256, 128>}, {transform_indices = @transform_4, window_bounds = array<i64: 128, 128>}]} {
    %c0 = arith.constant 0 : index
    %c0_0 = arith.constant 0 : index
    %0 = vector.load %arg1[%c0, %c0_0] : memref<128x8xf32, #tpu.memory_space<vmem>>, vector<128x8xf32>
    %cst = arith.constant 5.100000e+01 : f32
    %1 = vector.broadcast %cst : f32 to vector<128x8xf32>
    %2 = arith.mulf %0, %1 : vector<128x8xf32>
    %cst_1 = arith.constant 0.000000e+00 : f32
    %cst_2 = arith.constant 5.000000e+01 : f32
    %3 = vector.broadcast %cst_1 : f32 to vector<128x8xf32>
    %4 = arith.maximumf %3, %2 : vector<128x8xf32>
    %5 = vector.broadcast %cst_2 : f32 to vector<128x8xf32>
    %6 = arith.minimumf %5, %4 : vector<128x8xf32>
    %c0_3 = arith.constant 0 : index
    %c0_4 = arith.constant 0 : index
    %7 = vector.load %arg2[%c0_3, %c0_4] : memref<8x256xf32, #tpu.memory_space<vmem>>, vector<8x256xf32>
    %cst_5 = arith.constant dense<0.000000e+00> : vector<128x256xf32>
    %8 = tpu.matmul %6, %7, %cst_5 {dimension_numbers = #tpu.dot_dimension_numbers<[1], [0], [0], [1], [0, 0, 1, 1], [], []>, precision = #tpu.contract_precision<fp32>} : vector<128x8xf32>, vector<8x256xf32>, vector<128x256xf32> -> vector<128x256xf32>
    %c0_6 = arith.constant 0 : index
    %c0_7 = arith.constant 0 : index
    %9 = vector.load %arg3[%c0_6, %c0_7] : memref<1x256xf32, #tpu.memory_space<vmem>>, vector<1x256xf32>
    %10 = vector.broadcast %9 : vector<1x256xf32> to vector<128x256xf32>
    %11 = arith.subf %10, %8 : vector<128x256xf32>
    %12 = math.absf %11 : vector<128x256xf32>
    %cst_8 = arith.constant 1.000000e+00 : f32
    %13 = vector.broadcast %cst_8 : f32 to vector<128x256xf32>
    %14 = arith.subf %13, %12 : vector<128x256xf32>
    %cst_9 = arith.constant 0.000000e+00 : f32
    %15 = vector.broadcast %cst_9 : f32 to vector<128x256xf32>
    %16 = arith.maximumf %15, %14 : vector<128x256xf32>
    %c0_10 = arith.constant 0 : index
    %c0_11 = arith.constant 0 : index
    %17 = vector.load %arg4[%c0_10, %c0_11] : memref<256x128xf32, #tpu.memory_space<vmem>>, vector<256x128xf32>
    %cst_12 = arith.constant dense<0.000000e+00> : vector<128x128xf32>
    %18 = tpu.matmul %16, %17, %cst_12 {dimension_numbers = #tpu.dot_dimension_numbers<[1], [0], [0], [1], [0, 0, 1, 1], [], []>, precision = #tpu.contract_precision<fp32>} : vector<128x256xf32>, vector<256x128xf32>, vector<128x128xf32> -> vector<128x128xf32>
    %c0_13 = arith.constant 0 : index
    %c0_14 = arith.constant 0 : index
    %19 = vector.load %arg5[%c0_13, %c0_14] : memref<128x128xf32, #tpu.memory_space<vmem>>, vector<128x128xf32>
    tpu.vector_store %arg5[%c0_13, %c0_14], %18 {strides = array<i32>} : memref<128x128xf32, #tpu.memory_space<vmem>>, vector<128x128xf32>,
    return
  }
  func.func @transform_0(%arg0: i32) -> (i32, i32) {
    %c0_i32 = arith.constant 0 : i32
    %c0_i32_0 = arith.constant 0 : i32
    return %arg0, %c0_i32 : i32, i32
  }
  func.func @transform_1(%arg0: i32) -> (i32, i32) {
    %c0_i32 = arith.constant 0 : i32
    %c0_i32_0 = arith.constant 0 : i32
    %c0_i32_1 = arith.constant 0 : i32
    return %c0_i32, %c0_i32_0 : i32, i32
  }
  func.func @transform_2(%arg0: i32) -> (i32, i32) {
    %c0_i32 = arith.constant 0 : i32
    %c0_i32_0 = arith.constant 0 : i32
    %c0_i32_1 = arith.constant 0 : i32
    return %c0_i32, %c0_i32_0 : i32, i32
  }
  func.func @transform_3(%arg0: i32) -> (i32, i32) {
    %c0_i32 = arith.constant 0 : i32
    %c0_i32_0 = arith.constant 0 : i32
    %c0_i32_1 = arith.constant 0 : i32
    return %c0_i32, %c0_i32_0 : i32, i32
  }
  func.func @transform_4(%arg0: i32) -> (i32, i32) {
    %c0_i32 = arith.constant 0 : i32
    %c0_i32_0 = arith.constant 0 : i32
    return %arg0, %c0_i32 : i32, i32
  }
}

</mosaic_0001>

<llo_original>
// kernel: tpu_custom_call.1
$region0: #{tpu_custom_call.1}
  #allocation0 [shape = 'u32[]', space=smem, size = 0x4, offset = 0x4, fixed_abs, tag = 'smem constant byte address 0x4 - core index']
  #allocation1 [shape = 'u32[144,128]{1,0:T(1,128)}', space=vmem, size = 0x12000, scoped, tag = 'internal scratch']
  %s0 = inlined_call_operand.vmem [shape: f32[512,8], index: 0, kind: input, shape index: {}]
  %s1 = inlined_call_operand.vmem [shape: f32[8,256], index: 1, kind: input, shape index: {}]
  %s2 = inlined_call_operand.vmem [shape: f32[1,256], index: 2, kind: input, shape index: {}]
  %s3 = inlined_call_operand.vmem [shape: f32[256,128], index: 3, kind: input, shape index: {}]
  %s4 = inlined_call_operand.hbm [shape: f32[512,128], index: 4, kind: output, shape index: {}]
  %s5 = sld [smem:[#allocation0]]
  $region49: #{tpu_custom_call.1} parent=0
    _
  %s7 = ssub.s32 1, %s5
  %s8 = scalar_select 0, %s7, %s5
  $region1: #{tpu_custom_call.1} parent=0
    #allocation2 [shape = 'u8[131072]{0}', space=vmem, size = 0x20000, scoped, tag = 'output window, operand 0']
    #allocation3 [shape = 's32[2]{0}', space=sflag, size = 0x8, scoped, tag = 'scoped memory for tpu_custom_call.1']
    %9 = vsyncpa [#allocation3], 0
    %s10 = scalar_lea.sflag [#allocation3], 1
    %11 = vsyncpa %s10, 0
    loop: start=0, step=1, limit=6
    $region2: #{tpu_custom_call.1} parent=1 // loop_pre_header
      _
    $region3: #{tpu_custom_call.1} parent=1 // loop_header
      %s13 = sphi 0, %s17
      %p14 = scmp.ge.s32.totalorder %s13, 6
      %s23 = sphi 0, %s25
      %s26 = sphi 0, %s23
      %s27 = sphi 0, %s26
      %s43 = sphi 0, %s27
      %s47 = sphi 0, %s47
      %s49 = sphi 0, %s47
      %s50 = sphi 0, %s49
      %s64 = sphi 0, %s50
      %s68 = sphi 0, %s68
      %s70 = sphi 0, %s68
      %s71 = sphi 0, %s70
      %s85 = sphi 0, %s71
      %s89 = sphi 0, %s89
      %s91 = sphi 0, %s89
      %s92 = sphi 0, %s91
      %s106 = sphi 0, %s92
      %s112 = sphi 0, %s114
      %s115 = sphi 0, %s112
      %s116 = sphi 0, %s115
      %s132 = sphi 0, %s116
    $region4: #{tpu_custom_call.1} parent=1 // loop_header_branch
      %16 = sbr.rel (%p14) target = $region8
    $region5: #{tpu_custom_call.1} parent=1 // loop_body
      %s18 = ssub.s32 %s13, 1
      %s19 = ssub.s32 %s13, 2
      %s20 = sadd.s32 %s13, 1
      %s21 = ssub.s32 %s13, %s20
      %p22 = scmp.eq.s32.totalorder %s21, 0
      %s24 = sadd.s32 %s23, 1
      %s25 = scalar_select %p22, %s23, %s24
      %p28 = pneg %p22
      %p29 = scmp.eq.s32.totalorder %s13, 3
      %p30 = por %p28, %p29
      %p31 = scmp.ne.s32.totalorder %s23, %s26
      %p32 = scmp.eq.s32.totalorder %s13, 0
      %p33 = por %p31, %p32
      %p34 = scmp.ne.s32.totalorder %s23, %s26
      %p35 = scmp.eq.s32.totalorder %s18, 3
      %p36 = por %p34, %p35
      %p37 = scmp.ne.s32.totalorder %s26, %s27
      %p38 = scmp.eq.s32.totalorder %s18, 0
      %p39 = por %p37, %p38
      %p40 = scmp.ne.s32.totalorder %s26, %s27
      %p41 = scmp.eq.s32.totalorder %s19, 3
      %p42 = por %p40, %p41
      %p44 = scmp.ne.s32.totalorder %s27, %s43
      %p45 = scmp.eq.s32.totalorder %s19, 0
      %p46 = por %p44, %p45
      %s48 = sadd.s32 %s47, 1
      %p51 = scmp.eq.s32.totalorder %s13, 3
      %p52 = scmp.ne.s32.totalorder %s47, %s49
      %p53 = scmp.eq.s32.totalorder %s13, 0
      %p54 = por %p52, %p53
      %p55 = scmp.ne.s32.totalorder %s47, %s49
      %p56 = scmp.eq.s32.totalorder %s18, 3
      %p57 = por %p55, %p56
      %p58 = scmp.ne.s32.totalorder %s49, %s50
      %p59 = scmp.eq.s32.totalorder %s18, 0
      %p60 = por %p58, %p59
      %p61 = scmp.ne.s32.totalorder %s49, %s50
      %p62 = scmp.eq.s32.totalorder %s19, 3
      %p63 = por %p61, %p62
      %p65 = scmp.ne.s32.totalorder %s50, %s64
      %p66 = scmp.eq.s32.totalorder %s19, 0
      %p67 = por %p65, %p66
      %s69 = sadd.s32 %s68, 1
      %p72 = scmp.eq.s32.totalorder %s13, 3
      %p73 = scmp.ne.s32.totalorder %s68, %s70
      %p74 = scmp.eq.s32.totalorder %s13, 0
      %p75 = por %p73, %p74
      %p76 = scmp.ne.s32.totalorder %s68, %s70
      %p77 = scmp.eq.s32.totalorder %s18, 3
      %p78 = por %p76, %p77
      %p79 = scmp.ne.s32.totalorder %s70, %s71
      %p80 = scmp.eq.s32.totalorder %s18, 0
      %p81 = por %p79, %p80
      %p82 = scmp.ne.s32.totalorder %s70, %s71
      %p83 = scmp.eq.s32.totalorder %s19, 3
      %p84 = por %p82, %p83
      %p86 = scmp.ne.s32.totalorder %s71, %s85
      %p87 = scmp.eq.s32.totalorder %s19, 0
      %p88 = por %p86, %p87
      %s90 = sadd.s32 %s89, 1
      %p93 = scmp.eq.s32.totalorder %s13, 3
      %p94 = scmp.ne.s32.totalorder %s89, %s91
      %p95 = scmp.eq.s32.totalorder %s13, 0
      %p96 = por %p94, %p95
      %p97 = scmp.ne.s32.totalorder %s89, %s91
      %p98 = scmp.eq.s32.totalorder %s18, 3
      %p99 = por %p97, %p98
      %p100 = scmp.ne.s32.totalorder %s91, %s92
      %p101 = scmp.eq.s32.totalorder %s18, 0
      %p102 = por %p100, %p101
      %p103 = scmp.ne.s32.totalorder %s91, %s92
      %p104 = scmp.eq.s32.totalorder %s19, 3
      %p105 = por %p103, %p104
      %p107 = scmp.ne.s32.totalorder %s92, %s106
      %p108 = scmp.eq.s32.totalorder %s19, 0
      %p109 = por %p107, %p108
      %s110 = ssub.s32 %s13, %s20
      %p111 = scmp.eq.s32.totalorder %s110, 0
      %s113 = sadd.s32 %s112, 1
      %s114 = scalar_select %p111, %s112, %s113
      %p117 = pneg %p111
      %p118 = scmp.eq.s32.totalorder %s13, 3
      %p119 = por %p117, %p118
      %p120 = scmp.ne.s32.totalorder %s112, %s115
      %p121 = scmp.eq.s32.totalorder %s13, 0
      %p122 = por %p120, %p121
      %p123 = scmp.ne.s32.totalorder %s112, %s115
      %p124 = scmp.eq.s32.totalorder %s18, 3
      %p125 = por %p123, %p124
      %p126 = scmp.ne.s32.totalorder %s115, %s116
      %p127 = scmp.eq.s32.totalorder %s18, 0
      %p128 = por %p126, %p127
      %p129 = scmp.ne.s32.totalorder %s115, %s116
      %p130 = scmp.eq.s32.totalorder %s19, 3
      %p131 = por %p129, %p130
      %p133 = scmp.ne.s32.totalorder %s116, %s132
      %p134 = scmp.eq.s32.totalorder %s19, 0
      %p135 = por %p133, %p134
      %p136 = scmp.le.s32.totalorder 1, %s13
      %p137 = scmp.lt.s32.totalorder %s13, 5
      %p138 = pnand %p136, %p137
      %p139 = pneg %p138
      // Predicated region
      $region9: #{tpu_custom_call.1} parent=5 // pred_check
        _
      $region10: #{tpu_custom_call.1} parent=5 // pred_check_branch
        %141 = sbr.rel (%p138) target = $region12
      $region11: #{tpu_custom_call.1} parent=5 // pred_region
        %s142 = ssub.s32 %s13, 1
        // Predicated region
        $region13: #{tpu_custom_call.1} parent=11 // pred_check
          %p143 = pneg %p60
        $region14: #{tpu_custom_call.1} parent=11 // pred_check_branch
          %145 = sbr.rel (%p143) target = $region16
        $region15: #{tpu_custom_call.1} parent=11 // pred_region
          _
        $region16: #{tpu_custom_call.1} parent=11 // pred_fallthru
          _
        // Predicated region
        $region17: #{tpu_custom_call.1} parent=11 // pred_check
          %p146 = pneg %p81
        $region18: #{tpu_custom_call.1} parent=11 // pred_check_branch
          %148 = sbr.rel (%p146) target = $region20
        $region19: #{tpu_custom_call.1} parent=11 // pred_region
          _
        $region20: #{tpu_custom_call.1} parent=11 // pred_fallthru
          _
        // Predicated region
        $region21: #{tpu_custom_call.1} parent=11 // pred_check
          %p149 = pneg %p102
        $region22: #{tpu_custom_call.1} parent=11 // pred_check_branch
          %151 = sbr.rel (%p149) target = $region24
        $region23: #{tpu_custom_call.1} parent=11 // pred_region
          _
        $region24: #{tpu_custom_call.1} parent=11 // pred_fallthru
          _
      $region12: #{tpu_custom_call.1} parent=5 // pred_fallthru
        _
      %p152 = scmp.lt.s32.totalorder %s13, 4
      // Predicated region
      $region25: #{tpu_custom_call.1} parent=5 // pred_check
        %p153 = pneg %p152
      $region26: #{tpu_custom_call.1} parent=5 // pred_check_branch
        %155 = sbr.rel (%p153) target = $region28
      $region27: #{tpu_custom_call.1} parent=5 // pred_region
        // Predicated region
        $region29: #{tpu_custom_call.1} parent=27 // pred_check
          %p156 = pneg %p33
        $region30: #{tpu_custom_call.1} parent=27 // pred_check_branch
          %158 = sbr.rel (%p156) target = $region32
        $region31: #{tpu_custom_call.1} parent=27 // pred_region
          %s159 = smul.u32 16, %s13
          %p160 = scmp.lt.s32.totalorder %s159, 63
          %s161 = scalar_select %p160, %s159, 63
          %s162 = smul.addr %s161, 8
          %s163 = scalar_lea.vmem %s0, %s162
          %s164 = smul.u32 16, %s13
        $region32: #{tpu_custom_call.1} parent=27 // pred_fallthru
          _
      $region28: #{tpu_custom_call.1} parent=5 // pred_fallthru
        _
      %p165 = scmp.le.s32.totalorder 1, %s13
      %p166 = scmp.lt.s32.totalorder %s13, 5
      %p167 = pnand %p165, %p166
      %p168 = pneg %p167
      // Predicated region
      $region33: #{tpu_custom_call.1} parent=5 // pred_check
        _
      $region34: #{tpu_custom_call.1} parent=5 // pred_check_branch
        %170 = sbr.rel (%p167) target = $region36
      $region35: #{tpu_custom_call.1} parent=5 // pred_region
        %s171 = ssub.s32 %s13, 1
        %s172 = smul.u32 16, %s18
        %p173 = scmp.lt.s32.totalorder %s172, 63
        %s174 = scalar_select %p173, %s172, 63
        %s175 = smul.addr %s174, 8
        %s176 = scalar_lea.vmem %s0, %s175
        %p177 = pneg %p39
        %p178 = pneg %p36
        %p179 = pneg %p60
        %p180 = pneg %p57
        %p181 = pneg %p81
        %p182 = pneg %p78
        %p183 = pneg %p102
        %p184 = pneg %p99
        %p185 = pneg %p128
        %p186 = pneg %p125
        %s187 = sand.u32 %s115, 1
        %s188 = scalar_lea.sflag [#allocation3], %s187
        %s189 = sand.u32 %s115, 1
        %s190 = smul.addr %s189, 128
        %s191 = scalar_lea.vmem [#allocation2], %s190
        %s192 = smul.u32 16, %s18
        %p193 = scmp.lt.s32.totalorder %s192, 63
        %s194 = scalar_select %p193, %s192, 63
        %s195 = smul.addr %s194, 8
        %s196 = scalar_lea.vmem %s0, %s195
        %s197 = smul.u32 16, %s18
        %s198 = smul.u32 16, %s18
        %v199 = vld [vmem:[%s196] sm:$0xff]
        %v200 = vld [vmem:[%s196 + $0x8] sm:$0xff]
        %v201 = vld [vmem:[%s196 + $0x10] sm:$0xff]
        %v202 = vld [vmem:[%s196 + $0x18] sm:$0xff]
        %v203 = vld [vmem:[%s196 + $0x20] sm:$0xff]
        %v204 = vld [vmem:[%s196 + $0x28] sm:$0xff]
        %v205 = vld [vmem:[%s196 + $0x30] sm:$0xff]
        %v206 = vld [vmem:[%s196 + $0x38] sm:$0xff]
        %v207 = vld [vmem:[%s196 + $0x40] sm:$0xff]
        %v208 = vld [vmem:[%s196 + $0x48] sm:$0xff]
        %v209 = vld [vmem:[%s196 + $0x50] sm:$0xff]
        %v210 = vld [vmem:[%s196 + $0x58] sm:$0xff]
        %v211 = vld [vmem:[%s196 + $0x60] sm:$0xff]
        %v212 = vld [vmem:[%s196 + $0x68] sm:$0xff]
        %v213 = vld [vmem:[%s196 + $0x70] sm:$0xff]
        %v214 = vld [vmem:[%s196 + $0x78] sm:$0xff]
        %v215 = vmul.f32 %v199, 51.0
        %v216 = vmul.f32 %v200, 51.0
        %v217 = vmul.f32 %v201, 51.0
        %v218 = vmul.f32 %v202, 51.0
        %v219 = vmul.f32 %v203, 51.0
        %v220 = vmul.f32 %v204, 51.0
        %v221 = vmul.f32 %v205, 51.0
        %v222 = vmul.f32 %v206, 51.0
        %v223 = vmul.f32 %v207, 51.0
        %v224 = vmul.f32 %v208, 51.0
        %v225 = vmul.f32 %v209, 51.0
        %v226 = vmul.f32 %v210, 51.0
        %v227 = vmul.f32 %v211, 51.0
        %v228 = vmul.f32 %v212, 51.0
        %v229 = vmul.f32 %v213, 51.0
        %v230 = vmul.f32 %v214, 51.0
        %v231 = vmax.f32 %v215, 0.0
        %v232 = vmax.f32 %v216, 0.0
        %v233 = vmax.f32 %v217, 0.0
        %v234 = vmax.f32 %v218, 0.0
        %v235 = vmax.f32 %v219, 0.0
        %v236 = vmax.f32 %v220, 0.0
        %v237 = vmax.f32 %v221, 0.0
        %v238 = vmax.f32 %v222, 0.0
        %v239 = vmax.f32 %v223, 0.0
        %v240 = vmax.f32 %v224, 0.0
        %v241 = vmax.f32 %v225, 0.0
        %v242 = vmax.f32 %v226, 0.0
        %v243 = vmax.f32 %v227, 0.0
        %v244 = vmax.f32 %v228, 0.0
        %v245 = vmax.f32 %v229, 0.0
        %v246 = vmax.f32 %v230, 0.0
        %v247 = vmin.f32 %v231, 50.0
        %v248 = vmin.f32 %v232, 50.0
        %v249 = vmin.f32 %v233, 50.0
        %v250 = vmin.f32 %v234, 50.0
        %v251 = vmin.f32 %v235, 50.0
        %v252 = vmin.f32 %v236, 50.0
        %v253 = vmin.f32 %v237, 50.0
        %v254 = vmin.f32 %v238, 50.0
        %v255 = vmin.f32 %v239, 50.0
        %v256 = vmin.f32 %v240, 50.0
        %v257 = vmin.f32 %v241, 50.0
        %v258 = vmin.f32 %v242, 50.0
        %v259 = vmin.f32 %v243, 50.0
        %v260 = vmin.f32 %v244, 50.0
        %v261 = vmin.f32 %v245, 50.0
        %v262 = vmin.f32 %v246, 50.0
        %v263 = vld [vmem:[%s1] sm:$0xff]
        %v264 = vld [vmem:[%s1 + $0x8] sm:$0xff]
        %vm265 = vcmask 64512
        %v267 = vsel %vm265, %v247, 0
        %v270 = vsel %vm265, %v248, 0
        %v273 = vsel %vm265, %v249, 0
        %v276 = vsel %vm265, %v250, 0
        %v279 = vsel %vm265, %v251, 0
        %v282 = vsel %vm265, %v252, 0
        %v285 = vsel %vm265, %v253, 0
        %v288 = vsel %vm265, %v254, 0
        %v291 = vsel %vm265, %v255, 0
        %v294 = vsel %vm265, %v256, 0
        %v297 = vsel %vm265, %v257, 0
        %v300 = vsel %vm265, %v258, 0
        %v303 = vsel %vm265, %v259, 0
        %v306 = vsel %vm265, %v260, 0
        %v309 = vsel %vm265, %v261, 0
        %v312 = vsel %vm265, %v262, 0
        %v314 = vand.u32 %v264, 4294901760
        %315 = vmatprep.subr.mxu0 %v314
        %v316 = vand.u32 %v263, 4294901760
        %317 = vmatpush1.msra.mxu0 %v316
        %318 = vmatprep.subr.mxu0 0.0
        %319 = vmatpush1.msra.mxu0 0.0
        %320 = vmatprep.subr.mxu0 0.0
        %321 = vmatpush1.msra.mxu0 0.0
        %322 = vmatprep.subr.mxu0 0.0
        %323 = vmatpush1.msra.mxu0 0.0
        %324 = vmatprep.subr.mxu0 0.0
        %325 = vmatpush1.msra.mxu0 0.0
        %326 = vmatprep.subr.mxu0 0.0
        %327 = vmatpush1.msra.mxu0 0.0
        %328 = vmatprep.subr.mxu0 0.0
        %329 = vmatpush1.msra.mxu0 0.0
        %330 = vmatprep.subr.mxu0 0.0
        %331 = vmatpush1.msra.mxu0 0.0
        %332 = vmatprep.subr.mxu0 0.0
        %333 = vmatpush1.msra.mxu0 0.0
        %334 = vmatprep.subr.mxu0 0.0
        %335 = vmatpush1.msra.mxu0 0.0
        %336 = vmatprep.subr.mxu0 0.0
        %337 = vmatpush1.msra.mxu0 0.0
        %338 = vmatprep.subr.mxu0 0.0
        %339 = vmatpush1.msra.mxu0 0.0
        %340 = vmatprep.subr.mxu0 0.0
        %341 = vmatpush1.msra.mxu0 0.0
        %342 = vmatprep.subr.mxu0 0.0
        %343 = vmatpush1.msra.mxu0 0.0
        %344 = vmatprep.subr.mxu0 0.0
        %345 = vmatpush1.msra.mxu0 0.0
        %346 = vmatprep.subr.mxu0 0.0
        %347 = vmatpush1.msra.mxu0 0.0
        %348 = vmatprep.subr.mxu0 0.0
        %349 = vmatpush1.msra.mxu0 0.0
        %350 = vmatprep.subr.mxu0 0.0
        %351 = vmatpush1.msra.mxu0 0.0
        %352 = vmatprep.subr.mxu0 0.0
        %353 = vmatpush1.msra.mxu0 0.0
        %354 = vmatprep.subr.mxu0 0.0
        %355 = vmatpush1.msra.mxu0 0.0
        %356 = vmatprep.subr.mxu0 0.0
        %357 = vmatpush1.msra.mxu0 0.0
        %358 = vmatprep.subr.mxu0 0.0
        %359 = vmatpush1.msra.mxu0 0.0
        %360 = vmatprep.subr.mxu0 0.0
        %361 = vmatpush1.msra.mxu0 0.0
        %362 = vmatprep.subr.mxu0 0.0
        %363 = vmatpush1.msra.mxu0 0.0
        %364 = vmatprep.subr.mxu0 0.0
        %365 = vmatpush1.msra.mxu0 0.0
        %366 = vmatprep.subr.mxu0 0.0
        %367 = vmatpush1.msra.mxu0 0.0
        %368 = vmatprep.subr.mxu0 0.0
        %369 = vmatpush1.msra.mxu0 0.0
        %370 = vmatprep.subr.mxu0 0.0
        %371 = vmatpush1.msra.mxu0 0.0
        %372 = vmatprep.subr.mxu0 0.0
        %373 = vmatpush1.msra.mxu0 0.0
        %374 = vmatprep.subr.mxu0 0.0
        %375 = vmatpush1.msra.mxu0 0.0
        %376 = vmatprep.subr.mxu0 0.0
        %377 = vmatpush1.msra.mxu0 0.0
        %378 = vmatprep.subr.mxu0 0.0
        %379 = vmatpush1.msra.mxu0 0.0
        %380 = vmatprep.mubr.f32.mxu0 0.0
        %v381 = vand.u32 %v267, 4294901760
        %v382 = vsub.f32 %v267, %v381
        %v383 = vand.u32 %v382, 4294901760
        %v384 = vsub.f32 %v382, %v383
        %v385 = vand.u32 %v384, 4294901760
        %386 = vmatmul.mubr.f32.gmra.mrb[0].mxu0 %v385
        %v387 = vpop.f32.mrb[0].mxu0
        %v388 = vadd.f32 0.0, %v387
        %v389 = vpop.f32.mrb[0].mxu0
        %v390 = vadd.f32 0.0, %v389
        %391 = vmatprep.mubr.f32.mxu0 0.0
        %v392 = vand.u32 %v270, 4294901760
        %v393 = vsub.f32 %v270, %v392
        %v394 = vand.u32 %v393, 4294901760
        %v395 = vsub.f32 %v393, %v394
        %v396 = vand.u32 %v395, 4294901760
        %397 = vmatmul.mubr.f32.gmra.mrb[0].mxu0 %v396
        %v398 = vpop.f32.mrb[0].mxu0
        %v399 = vadd.f32 0.0, %v398
        %v400 = vpop.f32.mrb[0].mxu0
        %v401 = vadd.f32 0.0, %v400
        %402 = vmatprep.mubr.f32.mxu0 0.0
        %v403 = vand.u32 %v273, 4294901760
        %v404 = vsub.f32 %v273, %v403
        %v405 = vand.u32 %v404, 4294901760
        %v406 = vsub.f32 %v404, %v405
        %v407 = vand.u32 %v406, 4294901760
        %408 = vmatmul.mubr.f32.gmra.mrb[0].mxu0 %v407
        %v409 = vpop.f32.mrb[0].mxu0
        %v410 = vadd.f32 0.0, %v409
        %v411 = vpop.f32.mrb[0].mxu0
        %v412 = vadd.f32 0.0, %v411
        %413 = vmatprep.mubr.f32.mxu0 0.0
        %v414 = vand.u32 %v276, 4294901760
        %v415 = vsub.f32 %v276, %v414
        %v416 = vand.u32 %v415, 4294901760
        %v417 = vsub.f32 %v415, %v416
        %v418 = vand.u32 %v417, 4294901760
        %419 = vmatmul.mubr.f32.gmra.mrb[0].mxu0 %v418
        %v420 = vpop.f32.mrb[0].mxu0
        %v421 = vadd.f32 0.0, %v420
        %v422 = vpop.f32.mrb[0].mxu0
        %v423 = vadd.f32 0.0, %v422
        %424 = vmatprep.mubr.f32.mxu0 0.0
        %v425 = vand.u32 %v279, 4294901760
        %v426 = vsub.f32 %v279, %v425
        %v427 = vand.u32 %v426, 4294901760
        %v428 = vsub.f32 %v426, %v427
        %v429 = vand.u32 %v428, 4294901760
        %430 = vmatmul.mubr.f32.gmra.mrb[0].mxu0 %v429
        %v431 = vpop.f32.mrb[0].mxu0
        %v432 = vadd.f32 0.0, %v431
        %v433 = vpop.f32.mrb[0].mxu0
        %v434 = vadd.f32 0.0, %v433
        %435 = vmatprep.mubr.f32.mxu0 0.0
        %v436 = vand.u32 %v282, 4294901760
        %v437 = vsub.f32 %v282, %v436
        %v438 = vand.u32 %v437, 4294901760
        %v439 = vsub.f32 %v437, %v438
        %v440 = vand.u32 %v439, 4294901760
        %441 = vmatmul.mubr.f32.gmra.mrb[0].mxu0 %v440
        %v442 = vpop.f32.mrb[0].mxu0
        %v443 = vadd.f32 0.0, %v442
        %v444 = vpop.f32.mrb[0].mxu0
        %v445 = vadd.f32 0.0, %v444
        %446 = vmatprep.mubr.f32.mxu0 0.0
        %v447 = vand.u32 %v285, 4294901760
        %v448 = vsub.f32 %v285, %v447
        %v449 = vand.u32 %v448, 4294901760
        %v450 = vsub.f32 %v448, %v449
        %v451 = vand.u32 %v450, 4294901760
        %452 = vmatmul.mubr.f32.gmra.mrb[0].mxu0 %v451
        %v453 = vpop.f32.mrb[0].mxu0
        %v454 = vadd.f32 0.0, %v453
        %v455 = vpop.f32.mrb[0].mxu0
        %v456 = vadd.f32 0.0, %v455
        %457 = vmatprep.mubr.f32.mxu0 0.0
        %v458 = vand.u32 %v288, 4294901760
        %v459 = vsub.f32 %v288, %v458
        %v460 = vand.u32 %v459, 4294901760
        %v461 = vsub.f32 %v459, %v460
        %v462 = vand.u32 %v461, 4294901760
        %463 = vmatmul.mubr.f32.gmra.mrb[0].mxu0 %v462
        %v464 = vpop.f32.mrb[0].mxu0
        %v465 = vadd.f32 0.0, %v464
        %v466 = vpop.f32.mrb[0].mxu0
        %v467 = vadd.f32 0.0, %v466
        %468 = vmatprep.mubr.f32.mxu0 0.0
        %v469 = vand.u32 %v291, 4294901760
        %v470 = vsub.f32 %v291, %v469
        %v471 = vand.u32 %v470, 4294901760
        %v472 = vsub.f32 %v470, %v471
        %v473 = vand.u32 %v472, 4294901760
        %474 = vmatmul.mubr.f32.gmra.mrb[0].mxu0 %v473
        %v475 = vpop.f32.mrb[0].mxu0
        %v476 = vadd.f32 0.0, %v475
        %v477 = vpop.f32.mrb[0].mxu0
        %v478 = vadd.f32 0.0, %v477
        %479 = vmatprep.mubr.f32.mxu0 0.0
        %v480 = vand.u32 %v294, 4294901760
        %v481 = vsub.f32 %v294, %v480
        %v482 = vand.u32 %v481, 4294901760
        %v483 = vsub.f32 %v481, %v482
        %v484 = vand.u32 %v483, 4294901760
        %485 = vmatmul.mubr.f32.gmra.mrb[0].mxu0 %v484
        %v486 = vpop.f32.mrb[0].mxu0
        %v487 = vadd.f32 0.0, %v486
        %v488 = vpop.f32.mrb[0].mxu0
        %v489 = vadd.f32 0.0, %v488
        %490 = vmatprep.mubr.f32.mxu0 0.0
        %v491 = vand.u32 %v297, 4294901760
        %v492 = vsub.f32 %v297, %v491
        %v493 = vand.u32 %v492, 4294901760
        %v494 = vsub.f32 %v492, %v493
        %v495 = vand.u32 %v494, 4294901760
        %496 = vmatmul.mubr.f32.gmra.mrb[0].mxu0 %v495
        %v497 = vpop.f32.mrb[0].mxu0
        %v498 = vadd.f32 0.0, %v497
        %v499 = vpop.f32.mrb[0].mxu0
        %v500 = vadd.f32 0.0, %v499
        %501 = vmatprep.mubr.f32.mxu0 0.0
        %v502 = vand.u32 %v300, 4294901760
        %v503 = vsub.f32 %v300, %v502
        %v504 = vand.u32 %v503, 4294901760
        %v505 = vsub.f32 %v503, %v504
        %v506 = vand.u32 %v505, 4294901760
        %507 = vmatmul.mubr.f32.gmra.mrb[0].mxu0 %v506
        %v508 = vpop.f32.mrb[0].mxu0
        %v509 = vadd.f32 0.0, %v508
        %v510 = vpop.f32.mrb[0].mxu0
        %v511 = vadd.f32 0.0, %v510
        %512 = vmatprep.mubr.f32.mxu0 0.0
        %v513 = vand.u32 %v303, 4294901760
        %v514 = vsub.f32 %v303, %v513
        %v515 = vand.u32 %v514, 4294901760
        %v516 = vsub.f32 %v514, %v515
        %v517 = vand.u32 %v516, 4294901760
        %518 = vmatmul.mubr.f32.gmra.mrb[0].mxu0 %v517
        %v519 = vpop.f32.mrb[0].mxu0
        %v520 = vadd.f32 0.0, %v519
        %v521 = vpop.f32.mrb[0].mxu0
        %v522 = vadd.f32 0.0, %v521
        %523 = vmatprep.mubr.f32.mxu0 0.0
        %v524 = vand.u32 %v306, 4294901760
        %v525 = vsub.f32 %v306, %v524
        %v526 = vand.u32 %v525, 4294901760
        %v527 = vsub.f32 %v525, %v526
        %v528 = vand.u32 %v527, 4294901760
        %529 = vmatmul.mubr.f32.gmra.mrb[0].mxu0 %v528
        %v530 = vpop.f32.mrb[0].mxu0
        %v531 = vadd.f32 0.0, %v530
        %v532 = vpop.f32.mrb[0].mxu0
        %v533 = vadd.f32 0.0, %v532
        %534 = vmatprep.mubr.f32.mxu0 0.0
        %v535 = vand.u32 %v309, 4294901760
        %v536 = vsub.f32 %v309, %v535
        %v537 = vand.u32 %v536, 4294901760
        %v538 = vsub.f32 %v536, %v537
        %v539 = vand.u32 %v538, 4294901760
        %540 = vmatmul.mubr.f32.gmra.mrb[0].mxu0 %v539
        %v541 = vpop.f32.mrb[0].mxu0
        %v542 = vadd.f32 0.0, %v541
        %v543 = vpop.f32.mrb[0].mxu0
        %v544 = vadd.f32 0.0, %v543
        %545 = vmatprep.mubr.f32.mxu0 0.0
        %v546 = vand.u32 %v312, 4294901760
        %v547 = vsub.f32 %v312, %v546
        %v548 = vand.u32 %v547, 4294901760
        %v549 = vsub.f32 %v547, %v548
        %v550 = vand.u32 %v549, 4294901760
        %551 = vmatmul.mubr.f32.gmra.mrb[0].mxu0 %v550
        %v552 = vpop.f32.mrb[0].mxu0
        %v553 = vadd.f32 0.0, %v552
        %v554 = vpop.f32.mrb[0].mxu0
        %v555 = vadd.f32 0.0, %v554
        %556 = vdwg.mxu0
        %v557 = vand.u32 %v264, 4294901760
        %v558 = vsub.f32 %v264, %v557
        %v559 = vand.u32 %v558, 4294901760
        %v560 = vsub.f32 %v558, %v559
        %v561 = vand.u32 %v560, 4294901760
        %562 = vmatprep.subr.mxu0 %v561
        %v563 = vand.u32 %v263, 4294901760
        %v564 = vsub.f32 %v263, %v563
        %v565 = vand.u32 %v564, 4294901760
        %v566 = vsub.f32 %v564, %v565
        %v567 = vand.u32 %v566, 4294901760
        %568 = vmatpush1.msra.mxu0 %v567
        %569 = vmatprep.subr.mxu0 0.0
        %570 = vmatpush1.msra.mxu0 0.0
        %571 = vmatprep.subr.mxu0 0.0
        %572 = vmatpush1.msra.mxu0 0.0
        %573 = vmatprep.subr.mxu0 0.0
        %574 = vmatpush1.msra.mxu0 0.0
        %575 = vmatprep.subr.mxu0 0.0
        %576 = vmatpush1.msra.mxu0 0.0
        %577 = vmatprep.subr.mxu0 0.0
        %578 = vmatpush1.msra.mxu0 0.0
        %579 = vmatprep.subr.mxu0 0.0
        %580 = vmatpush1.msra.mxu0 0.0
        %581 = vmatprep.subr.mxu0 0.0
        %582 = vmatpush1.msra.mxu0 0.0
        %583 = vmatprep.subr.mxu0 0.0
        %584 = vmatpush1.msra.mxu0 0.0
        %585 = vmatprep.subr.mxu0 0.0
        %586 = vmatpush1.msra.mxu0 0.0
        %587 = vmatprep.subr.mxu0 0.0
        %588 = vmatpush1.msra.mxu0 0.0
        %589 = vmatprep.subr.mxu0 0.0
        %590 = vmatpush1.msra.mxu0 0.0
        %591 = vmatprep.subr.mxu0 0.0
        %592 = vmatpush1.msra.mxu0 0.0
        %593 = vmatprep.subr.mxu0 0.0
        %594 = vmatpush1.msra.mxu0 0.0
        %595 = vmatprep.subr.mxu0 0.0
        %596 = vmatpush1.msra.mxu0 0.0
        %597 = vmatprep.subr.mxu0 0.0
        %598 = vmatpush1.msra.mxu0 0.0
        %599 = vmatprep.subr.mxu0 0.0
        %600 = vmatpush1.msra.mxu0 0.0
        %601 = vmatprep.subr.mxu0 0.0
        %602 = vmatpush1.msra.mxu0 0.0
        %603 = vmatprep.subr.mxu0 0.0
        %604 = vmatpush1.msra.mxu0 0.0
        %605 = vmatprep.subr.mxu0 0.0
        %606 = vmatpush1.msra.mxu0 0.0
        %607 = vmatprep.subr.mxu0 0.0
        %608 = vmatpush1.msra.mxu0 0.0
        %609 = vmatprep.subr.mxu0 0.0
        %610 = vmatpush1.msra.mxu0 0.0
        %611 = vmatprep.subr.mxu0 0.0
        %612 = vmatpush1.msra.mxu0 0.0
        %613 = vmatprep.subr.mxu0 0.0
        %614 = vmatpush1.msra.mxu0 0.0
        %615 = vmatprep.subr.mxu0 0.0
        %616 = vmatpush1.msra.mxu0 0.0
        %617 = vmatprep.subr.mxu0 0.0
        %618 = vmatpush1.msra.mxu0 0.0
        %619 = vmatprep.subr.mxu0 0.0
        %620 = vmatpush1.msra.mxu0 0.0
        %621 = vmatprep.subr.mxu0 0.0
        %622 = vmatpush1.msra.mxu0 0.0
        %623 = vmatprep.subr.mxu0 0.0
        %624 = vmatpush1.msra.mxu0 0.0
        %625 = vmatprep.subr.mxu0 0.0
        %626 = vmatpush1.msra.mxu0 0.0
        %627 = vmatprep.subr.mxu0 0.0
        %628 = vmatpush1.msra.mxu0 0.0
        %629 = vmatprep.subr.mxu0 0.0
        %630 = vmatpush1.msra.mxu0 0.0
        %631 = vmatprep.mubr.f32.mxu0 0.0
        %v632 = vand.u32 %v267, 4294901760
        %633 = vmatmul.mubr.f32.gmra.mrb[0].mxu0 %v632
        %v634 = vpop.f32.mrb[0].mxu0
        %v635 = vadd.f32 %v388, %v634
        %v636 = vpop.f32.mrb[0].mxu0
        %v637 = vadd.f32 %v390, %v636
        %638 = vmatprep.mubr.f32.mxu0 0.0
        %v639 = vand.u32 %v270, 4294901760
        %640 = vmatmul.mubr.f32.gmra.mrb[0].mxu0 %v639
        %v641 = vpop.f32.mrb[0].mxu0
        %v642 = vadd.f32 %v399, %v641
        %v643 = vpop.f32.mrb[0].mxu0
        %v644 = vadd.f32 %v401, %v643
        %645 = vmatprep.mubr.f32.mxu0 0.0
        %v646 = vand.u32 %v273, 4294901760
        %647 = vmatmul.mubr.f32.gmra.mrb[0].mxu0 %v646
        %v648 = vpop.f32.mrb[0].mxu0
        %v649 = vadd.f32 %v410, %v648
        %v650 = vpop.f32.mrb[0].mxu0
        %v651 = vadd.f32 %v412, %v650
        %652 = vmatprep.mubr.f32.mxu0 0.0
        %v653 = vand.u32 %v276, 4294901760
        %654 = vmatmul.mubr.f32.gmra.mrb[0].mxu0 %v653
        %v655 = vpop.f32.mrb[0].mxu0
        %v656 = vadd.f32 %v421, %v655
        %v657 = vpop.f32.mrb[0].mxu0
        %v658 = vadd.f32 %v423, %v657
        %659 = vmatprep.mubr.f32.mxu0 0.0
        %v660 = vand.u32 %v279, 4294901760
        %661 = vmatmul.mubr.f32.gmra.mrb[0].mxu0 %v660
        %v662 = vpop.f32.mrb[0].mxu0
        %v663 = vadd.f32 %v432, %v662
        %v664 = vpop.f32.mrb[0].mxu0
        %v665 = vadd.f32 %v434, %v664
        %666 = vmatprep.mubr.f32.mxu0 0.0
        %v667 = vand.u32 %v282, 4294901760
        %668 = vmatmul.mubr.f32.gmra.mrb[0].mxu0 %v667
        %v669 = vpop.f32.mrb[0].mxu0
        %v670 = vadd.f32 %v443, %v669
        %v671 = vpop.f32.mrb[0].mxu0
        %v672 = vadd.f32 %v445, %v671
        %673 = vmatprep.mubr.f32.mxu0 0.0
        %v674 = vand.u32 %v285, 4294901760
        %675 = vmatmul.mubr.f32.gmra.mrb[0].mxu0 %v674
        %v676 = vpop.f32.mrb[0].mxu0
        %v677 = vadd.f32 %v454, %v676
        %v678 = vpop.f32.mrb[0].mxu0
        %v679 = vadd.f32 %v456, %v678
        %680 = vmatprep.mubr.f32.mxu0 0.0
        %v681 = vand.u32 %v288, 4294901760
        %682 = vmatmul.mubr.f32.gmra.mrb[0].mxu0 %v681
        %v683 = vpop.f32.mrb[0].mxu0
        %v684 = vadd.f32 %v465, %v683
        %v685 = vpop.f32.mrb[0].mxu0
        %v686 = vadd.f32 %v467, %v685
        %687 = vmatprep.mubr.f32.mxu0 0.0
        %v688 = vand.u32 %v291, 4294901760
        %689 = vmatmul.mubr.f32.gmra.mrb[0].mxu0 %v688
        %v690 = vpop.f32.mrb[0].mxu0
        %v691 = vadd.f32 %v476, %v690
        %v692 = vpop.f32.mrb[0].mxu0
        %v693 = vadd.f32 %v478, %v692
        %694 = vmatprep.mubr.f32.mxu0 0.0
        %v695 = vand.u32 %v294, 4294901760
        %696 = vmatmul.mubr.f32.gmra.mrb[0].mxu0 %v695
        %v697 = vpop.f32.mrb[0].mxu0
        %v698 = vadd.f32 %v487, %v697
        %v699 = vpop.f32.mrb[0].mxu0
        %v700 = vadd.f32 %v489, %v699
        %701 = vmatprep.mubr.f32.mxu0 0.0
        %v702 = vand.u32 %v297, 4294901760
        %703 = vmatmul.mubr.f32.gmra.mrb[0].mxu0 %v702
        %v704 = vpop.f32.mrb[0].mxu0
        %v705 = vadd.f32 %v498, %v704
        %v706 = vpop.f32.mrb[0].mxu0
        %v707 = vadd.f32 %v500, %v706
        %708 = vmatprep.mubr.f32.mxu0 0.0
        %v709 = vand.u32 %v300, 4294901760
        %710 = vmatmul.mubr.f32.gmra.mrb[0].mxu0 %v709
        %v711 = vpop.f32.mrb[0].mxu0
        %v712 = vadd.f32 %v509, %v711
        %v713 = vpop.f32.mrb[0].mxu0
        %v714 = vadd.f32 %v511, %v713
        %715 = vmatprep.mubr.f32.mxu0 0.0
        %v716 = vand.u32 %v303, 4294901760
        %717 = vmatmul.mubr.f32.gmra.mrb[0].mxu0 %v716
        %v718 = vpop.f32.mrb[0].mxu0
        %v719 = vadd.f32 %v520, %v718
        %v720 = vpop.f32.mrb[0].mxu0
        %v721 = vadd.f32 %v522, %v720
        %722 = vmatprep.mubr.f32.mxu0 0.0
        %v723 = vand.u32 %v306, 4294901760
        %724 = vmatmul.mubr.f32.gmra.mrb[0].mxu0 %v723
        %v725 = vpop.f32.mrb[0].mxu0
        %v726 = vadd.f32 %v531, %v725
        %v727 = vpop.f32.mrb[0].mxu0
        %v728 = vadd.f32 %v533, %v727
        %729 = vmatprep.mubr.f32.mxu0 0.0
        %v730 = vand.u32 %v309, 4294901760
        %731 = vmatmul.mubr.f32.gmra.mrb[0].mxu0 %v730
        %v732 = vpop.f32.mrb[0].mxu0
        %v733 = vadd.f32 %v542, %v732
        %v734 = vpop.f32.mrb[0].mxu0
        %v735 = vadd.f32 %v544, %v734
        %736 = vmatprep.mubr.f32.mxu0 0.0
        %v737 = vand.u32 %v312, 4294901760
        %738 = vmatmul.mubr.f32.gmra.mrb[0].mxu0 %v737
        %v739 = vpop.f32.mrb[0].mxu0
        %v740 = vadd.f32 %v553, %v739
        %v741 = vpop.f32.mrb[0].mxu0
        %v742 = vadd.f32 %v555, %v741
        %743 = vdwg.mxu0
        %v744 = vand.u32 %v264, 4294901760
        %v745 = vsub.f32 %v264, %v744
        %746 = vmatprep.subr.mxu0 %v745
        %v747 = vand.u32 %v263, 4294901760
        %v748 = vsub.f32 %v263, %v747
        %749 = vmatpush1.msra.mxu0 %v748
        %750 = vmatprep.subr.mxu0 0.0
        %751 = vmatpush1.msra.mxu0 0.0
        %752 = vmatprep.subr.mxu0 0.0
        %753 = vmatpush1.msra.mxu0 0.0
        %754 = vmatprep.subr.mxu0 0.0
        %755 = vmatpush1.msra.mxu0 0.0
        %756 = vmatprep.subr.mxu0 0.0
        %757 = vmatpush1.msra.mxu0 0.0
        %758 = vmatprep.subr.mxu0 0.0
        %759 = vmatpush1.msra.mxu0 0.0
        %760 = vmatprep.subr.mxu0 0.0
        %761 = vmatpush1.msra.mxu0 0.0
        %762 = vmatprep.subr.mxu0 0.0
        %763 = vmatpush1.msra.mxu0 0.0
        %764 = vmatprep.subr.mxu0 0.0
        %765 = vmatpush1.msra.mxu0 0.0
        %766 = vmatprep.subr.mxu0 0.0
        %767 = vmatpush1.msra.mxu0 0.0
        %768 = vmatprep.subr.mxu0 0.0
        %769 = vmatpush1.msra.mxu0 0.0
        %770 = vmatprep.subr.mxu0 0.0
        %771 = vmatpush1.msra.mxu0 0.0
        %772 = vmatprep.subr.mxu0 0.0
        %773 = vmatpush1.msra.mxu0 0.0
        %774 = vmatprep.subr.mxu0 0.0
        %775 = vmatpush1.msra.mxu0 0.0
        %776 = vmatprep.subr.mxu0 0.0
        %777 = vmatpush1.msra.mxu0 0.0
        %778 = vmatprep.subr.mxu0 0.0
        %779 = vmatpush1.msra.mxu0 0.0
        %780 = vmatprep.subr.mxu0 0.0
        %781 = vmatpush1.msra.mxu0 0.0
        %782 = vmatprep.subr.mxu0 0.0
        %783 = vmatpush1.msra.mxu0 0.0
        %784 = vmatprep.subr.mxu0 0.0
        %785 = vmatpush1.msra.mxu0 0.0
        %786 = vmatprep.subr.mxu0 0.0
        %787 = vmatpush1.msra.mxu0 0.0
        %788 = vmatprep.subr.mxu0 0.0
        %789 = vmatpush1.msra.mxu0 0.0
        %790 = vmatprep.subr.mxu0 0.0
        %791 = vmatpush1.msra.mxu0 0.0
        %792 = vmatprep.subr.mxu0 0.0
        %793 = vmatpush1.msra.mxu0 0.0
        %794 = vmatprep.subr.mxu0 0.0
        %795 = vmatpush1.msra.mxu0 0.0
        %796 = vmatprep.subr.mxu0 0.0
        %797 = vmatpush1.msra.mxu0 0.0
        %798 = vmatprep.subr.mxu0 0.0
        %799 = vmatpush1.msra.mxu0 0.0
        %800 = vmatprep.subr.mxu0 0.0
        %801 = vmatpush1.msra.mxu0 0.0
        %802 = vmatprep.subr.mxu0 0.0
        %803 = vmatpush1.msra.mxu0 0.0
        %804 = vmatprep.subr.mxu0 0.0
        %805 = vmatpush1.msra.mxu0 0.0
        %806 = vmatprep.subr.mxu0 0.0
        %807 = vmatpush1.msra.mxu0 0.0
        %808 = vmatprep.subr.mxu0 0.0
        %809 = vmatpush1.msra.mxu0 0.0
        %810 = vmatprep.subr.mxu0 0.0
        %811 = vmatpush1.msra.mxu0 0.0
        %812 = vmatprep.mubr.f32.mxu0 0.0
        %v813 = vand.u32 %v267, 4294901760
        %v814 = vsub.f32 %v267, %v813
        %815 = vmatmul.mubr.f32.gmra.mrb[0].mxu0 %v814
        %v816 = vpop.f32.mrb[0].mxu0
        %v817 = vadd.f32 %v635, %v816
        %v818 = vpop.f32.mrb[0].mxu0
        %v819 = vadd.f32 %v637, %v818
        %820 = vmatprep.mubr.f32.mxu0 0.0
        %v821 = vand.u32 %v270, 4294901760
        %v822 = vsub.f32 %v270, %v821
        %823 = vmatmul.mubr.f32.gmra.mrb[0].mxu0 %v822
        %v824 = vpop.f32.mrb[0].mxu0
        %v825 = vadd.f32 %v642, %v824
        %v826 = vpop.f32.mrb[0].mxu0
        %v827 = vadd.f32 %v644, %v826
        %828 = vmatprep.mubr.f32.mxu0 0.0
        %v829 = vand.u32 %v273, 4294901760
        %v830 = vsub.f32 %v273, %v829
        %831 = vmatmul.mubr.f32.gmra.mrb[0].mxu0 %v830
        %v832 = vpop.f32.mrb[0].mxu0
        %v833 = vadd.f32 %v649, %v832
        %v834 = vpop.f32.mrb[0].mxu0
        %v835 = vadd.f32 %v651, %v834
        %836 = vmatprep.mubr.f32.mxu0 0.0
        %v837 = vand.u32 %v276, 4294901760
        %v838 = vsub.f32 %v276, %v837
        %839 = vmatmul.mubr.f32.gmra.mrb[0].mxu0 %v838
        %v840 = vpop.f32.mrb[0].mxu0
        %v841 = vadd.f32 %v656, %v840
        %v842 = vpop.f32.mrb[0].mxu0
        %v843 = vadd.f32 %v658, %v842
        %844 = vmatprep.mubr.f32.mxu0 0.0
        %v845 = vand.u32 %v279, 4294901760
        %v846 = vsub.f32 %v279, %v845
        %847 = vmatmul.mubr.f32.gmra.mrb[0].mxu0 %v846
        %v848 = vpop.f32.mrb[0].mxu0
        %v849 = vadd.f32 %v663, %v848
        %v850 = vpop.f32.mrb[0].mxu0
        %v851 = vadd.f32 %v665, %v850
        %852 = vmatprep.mubr.f32.mxu0 0.0
        %v853 = vand.u32 %v282, 4294901760
        %v854 = vsub.f32 %v282, %v853
        %855 = vmatmul.mubr.f32.gmra.mrb[0].mxu0 %v854
        %v856 = vpop.f32.mrb[0].mxu0
        %v857 = vadd.f32 %v670, %v856
        %v858 = vpop.f32.mrb[0].mxu0
        %v859 = vadd.f32 %v672, %v858
        %860 = vmatprep.mubr.f32.mxu0 0.0
        %v861 = vand.u32 %v285, 4294901760
        %v862 = vsub.f32 %v285, %v861
        %863 = vmatmul.mubr.f32.gmra.mrb[0].mxu0 %v862
        %v864 = vpop.f32.mrb[0].mxu0
        %v865 = vadd.f32 %v677, %v864
        %v866 = vpop.f32.mrb[0].mxu0
        %v867 = vadd.f32 %v679, %v866
        %868 = vmatprep.mubr.f32.mxu0 0.0
        %v869 = vand.u32 %v288, 4294901760
        %v870 = vsub.f32 %v288, %v869
        %871 = vmatmul.mubr.f32.gmra.mrb[0].mxu0 %v870
        %v872 = vpop.f32.mrb[0].mxu0
        %v873 = vadd.f32 %v684, %v872
        %v874 = vpop.f32.mrb[0].mxu0
        %v875 = vadd.f32 %v686, %v874
        %876 = vmatprep.mubr.f32.mxu0 0.0
        %v877 = vand.u32 %v291, 4294901760
        %v878 = vsub.f32 %v291, %v877
        %879 = vmatmul.mubr.f32.gmra.mrb[0].mxu0 %v878
        %v880 = vpop.f32.mrb[0].mxu0
        %v881 = vadd.f32 %v691, %v880
        %v882 = vpop.f32.mrb[0].mxu0
        %v883 = vadd.f32 %v693, %v882
        %884 = vmatprep.mubr.f32.mxu0 0.0
        %v885 = vand.u32 %v294, 4294901760
        %v886 = vsub.f32 %v294, %v885
        %887 = vmatmul.mubr.f32.gmra.mrb[0].mxu0 %v886
        %v888 = vpop.f32.mrb[0].mxu0
        %v889 = vadd.f32 %v698, %v888
        %v890 = vpop.f32.mrb[0].mxu0
        %v891 = vadd.f32 %v700, %v890
        %892 = vmatprep.mubr.f32.mxu0 0.0
        %v893 = vand.u32 %v297, 4294901760
        %v894 = vsub.f32 %v297, %v893
        %895 = vmatmul.mubr.f32.gmra.mrb[0].mxu0 %v894
        %v896 = vpop.f32.mrb[0].mxu0
        %v897 = vadd.f32 %v705, %v896
        %v898 = vpop.f32.mrb[0].mxu0
        %v899 = vadd.f32 %v707, %v898
        %900 = vmatprep.mubr.f32.mxu0 0.0
        %v901 = vand.u32 %v300, 4294901760
        %v902 = vsub.f32 %v300, %v901
        %903 = vmatmul.mubr.f32.gmra.mrb[0].mxu0 %v902
        %v904 = vpop.f32.mrb[0].mxu0
        %v905 = vadd.f32 %v712, %v904
        %v906 = vpop.f32.mrb[0].mxu0
        %v907 = vadd.f32 %v714, %v906
        %908 = vmatprep.mubr.f32.mxu0 0.0
        %v909 = vand.u32 %v303, 4294901760
        %v910 = vsub.f32 %v303, %v909
        %911 = vmatmul.mubr.f32.gmra.mrb[0].mxu0 %v910
        %v912 = vpop.f32.mrb[0].mxu0
        %v913 = vadd.f32 %v719, %v912
        %v914 = vpop.f32.mrb[0].mxu0
        %v915 = vadd.f32 %v721, %v914
        %916 = vmatprep.mubr.f32.mxu0 0.0
        %v917 = vand.u32 %v306, 4294901760
        %v918 = vsub.f32 %v306, %v917
        %919 = vmatmul.mubr.f32.gmra.mrb[0].mxu0 %v918
        %v920 = vpop.f32.mrb[0].mxu0
        %v921 = vadd.f32 %v726, %v920
        %v922 = vpop.f32.mrb[0].mxu0
        %v923 = vadd.f32 %v728, %v922
        %924 = vmatprep.mubr.f32.mxu0 0.0
        %v925 = vand.u32 %v309, 4294901760
        %v926 = vsub.f32 %v309, %v925
        %927 = vmatmul.mubr.f32.gmra.mrb[0].mxu0 %v926
        %v928 = vpop.f32.mrb[0].mxu0
        %v929 = vadd.f32 %v733, %v928
        %v930 = vpop.f32.mrb[0].mxu0
        %v931 = vadd.f32 %v735, %v930
        %932 = vmatprep.mubr.f32.mxu0 0.0
        %v933 = vand.u32 %v312, 4294901760
        %v934 = vsub.f32 %v312, %v933
        %935 = vmatmul.mubr.f32.gmra.mrb[0].mxu0 %v934
        %v936 = vpop.f32.mrb[0].mxu0
        %v937 = vadd.f32 %v740, %v936
        %v938 = vpop.f32.mrb[0].mxu0
        %v939 = vadd.f32 %v742, %v938
        %940 = vdwg.mxu0
        %v941 = vand.u32 %v264, 4294901760
        %942 = vmatprep.subr.mxu0 %v941
        %v943 = vand.u32 %v263, 4294901760
        %944 = vmatpush1.msra.mxu0 %v943
        %945 = vmatprep.subr.mxu0 0.0
        %946 = vmatpush1.msra.mxu0 0.0
        %947 = vmatprep.subr.mxu0 0.0
        %948 = vmatpush1.msra.mxu0 0.0
        %949 = vmatprep.subr.mxu0 0.0
        %950 = vmatpush1.msra.mxu0 0.0
        %951 = vmatprep.subr.mxu0 0.0
        %952 = vmatpush1.msra.mxu0 0.0
        %953 = vmatprep.subr.mxu0 0.0
        %954 = vmatpush1.msra.mxu0 0.0
        %955 = vmatprep.subr.mxu0 0.0
        %956 = vmatpush1.msra.mxu0 0.0
        %957 = vmatprep.subr.mxu0 0.0
        %958 = vmatpush1.msra.mxu0 0.0
        %959 = vmatprep.subr.mxu0 0.0
        %960 = vmatpush1.msra.mxu0 0.0
        %961 = vmatprep.subr.mxu0 0.0
        %962 = vmatpush1.msra.mxu0 0.0
        %963 = vmatprep.subr.mxu0 0.0
        %964 = vmatpush1.msra.mxu0 0.0
        %965 = vmatprep.subr.mxu0 0.0
        %966 = vmatpush1.msra.mxu0 0.0
        %967 = vmatprep.subr.mxu0 0.0
        %968 = vmatpush1.msra.mxu0 0.0
        %969 = vmatprep.subr.mxu0 0.0
        %970 = vmatpush1.msra.mxu0 0.0
        %971 = vmatprep.subr.mxu0 0.0
        %972 = vmatpush1.msra.mxu0 0.0
        %973 = vmatprep.subr.mxu0 0.0
        %974 = vmatpush1.msra.mxu0 0.0
        %975 = vmatprep.subr.mxu0 0.0
        %976 = vmatpush1.msra.mxu0 0.0
        %977 = vmatprep.subr.mxu0 0.0
        %978 = vmatpush1.msra.mxu0 0.0
        %979 = vmatprep.subr.mxu0 0.0
        %980 = vmatpush1.msra.mxu0 0.0
        %981 = vmatprep.subr.mxu0 0.0
        %982 = vmatpush1.msra.mxu0 0.0
        %983 = vmatprep.subr.mxu0 0.0
        %984 = vmatpush1.msra.mxu0 0.0
        %985 = vmatprep.subr.mxu0 0.0
        %986 = vmatpush1.msra.mxu0 0.0
        %987 = vmatprep.subr.mxu0 0.0
        %988 = vmatpush1.msra.mxu0 0.0
        %989 = vmatprep.subr.mxu0 0.0
        %990 = vmatpush1.msra.mxu0 0.0
        %991 = vmatprep.subr.mxu0 0.0
        %992 = vmatpush1.msra.mxu0 0.0
        %993 = vmatprep.subr.mxu0 0.0
        %994 = vmatpush1.msra.mxu0 0.0
        %995 = vmatprep.subr.mxu0 0.0
        %996 = vmatpush1.msra.mxu0 0.0
        %997 = vmatprep.subr.mxu0 0.0
        %998 = vmatpush1.msra.mxu0 0.0
        %999 = vmatprep.subr.mxu0 0.0
        %1000 = vmatpush1.msra.mxu0 0.0
        %1001 = vmatprep.subr.mxu0 0.0
        %1002 = vmatpush1.msra.mxu0 0.0
        %1003 = vmatprep.subr.mxu0 0.0
        %1004 = vmatpush1.msra.mxu0 0.0
        %1005 = vmatprep.subr.mxu0 0.0
        %1006 = vmatpush1.msra.mxu0 0.0
        %1007 = vmatprep.mubr.f32.mxu0 0.0
        %v1008 = vand.u32 %v267, 4294901760
        %v1009 = vsub.f32 %v267, %v1008
        %v1010 = vand.u32 %v1009, 4294901760
        %1011 = vmatmul.mubr.f32.gmra.mrb[0].mxu0 %v1010
        %v1012 = vpop.f32.mrb[0].mxu0
        %v1013 = vadd.f32 %v817, %v1012
        %v1014 = vpop.f32.mrb[0].mxu0
        %v1015 = vadd.f32 %v819, %v1014
        %1016 = vmatprep.mubr.f32.mxu0 0.0
        %v1017 = vand.u32 %v270, 4294901760
        %v1018 = vsub.f32 %v270, %v1017
        %v1019 = vand.u32 %v1018, 4294901760
        %1020 = vmatmul.mubr.f32.gmra.mrb[0].mxu0 %v1019
        %v1021 = vpop.f32.mrb[0].mxu0
        %v1022 = vadd.f32 %v825, %v1021
        %v1023 = vpop.f32.mrb[0].mxu0
        %v1024 = vadd.f32 %v827, %v1023
        %1025 = vmatprep.mubr.f32.mxu0 0.0
        %v1026 = vand.u32 %v273, 4294901760
        %v1027 = vsub.f32 %v273, %v1026
        %v1028 = vand.u32 %v1027, 4294901760
        %1029 = vmatmul.mubr.f32.gmra.mrb[0].mxu0 %v1028
        %v1030 = vpop.f32.mrb[0].mxu0
        %v1031 = vadd.f32 %v833, %v1030
        %v1032 = vpop.f32.mrb[0].mxu0
        %v1033 = vadd.f32 %v835, %v1032
        %1034 = vmatprep.mubr.f32.mxu0 0.0
        %v1035 = vand.u32 %v276, 4294901760
        %v1036 = vsub.f32 %v276, %v1035
        %v1037 = vand.u32 %v1036, 4294901760
        %1038 = vmatmul.mubr.f32.gmra.mrb[0].mxu0 %v1037
        %v1039 = vpop.f32.mrb[0].mxu0
        %v1040 = vadd.f32 %v841, %v1039
        %v1041 = vpop.f32.mrb[0].mxu0
        %v1042 = vadd.f32 %v843, %v1041
        %1043 = vmatprep.mubr.f32.mxu0 0.0
        %v1044 = vand.u32 %v279, 4294901760
        %v1045 = vsub.f32 %v279, %v1044
        %v1046 = vand.u32 %v1045, 4294901760
        %1047 = vmatmul.mubr.f32.gmra.mrb[0].mxu0 %v1046
        %v1048 = vpop.f32.mrb[0].mxu0
        %v1049 = vadd.f32 %v849, %v1048
        %v1050 = vpop.f32.mrb[0].mxu0
        %v1051 = vadd.f32 %v851, %v1050
        %1052 = vmatprep.mubr.f32.mxu0 0.0
        %v1053 = vand.u32 %v282, 4294901760
        %v1054 = vsub.f32 %v282, %v1053
        %v1055 = vand.u32 %v1054, 4294901760
        %1056 = vmatmul.mubr.f32.gmra.mrb[0].mxu0 %v1055
        %v1057 = vpop.f32.mrb[0].mxu0
        %v1058 = vadd.f32 %v857, %v1057
        %v1059 = vpop.f32.mrb[0].mxu0
        %v1060 = vadd.f32 %v859, %v1059
        %1061 = vmatprep.mubr.f32.mxu0 0.0
        %v1062 = vand.u32 %v285, 4294901760
        %v1063 = vsub.f32 %v285, %v1062
        %v1064 = vand.u32 %v1063, 4294901760
        %1065 = vmatmul.mubr.f32.gmra.mrb[0].mxu0 %v1064
        %v1066 = vpop.f32.mrb[0].mxu0
        %v1067 = vadd.f32 %v865, %v1066
        %v1068 = vpop.f32.mrb[0].mxu0
        %v1069 = vadd.f32 %v867, %v1068
        %1070 = vmatprep.mubr.f32.mxu0 0.0
        %v1071 = vand.u32 %v288, 4294901760
        %v1072 = vsub.f32 %v288, %v1071
        %v1073 = vand.u32 %v1072, 4294901760
        %1074 = vmatmul.mubr.f32.gmra.mrb[0].mxu0 %v1073
        %v1075 = vpop.f32.mrb[0].mxu0
        %v1076 = vadd.f32 %v873, %v1075
        %v1077 = vpop.f32.mrb[0].mxu0
        %v1078 = vadd.f32 %v875, %v1077
        %1079 = vmatprep.mubr.f32.mxu0 0.0
        %v1080 = vand.u32 %v291, 4294901760
        %v1081 = vsub.f32 %v291, %v1080
        %v1082 = vand.u32 %v1081, 4294901760
        %1083 = vmatmul.mubr.f32.gmra.mrb[0].mxu0 %v1082
        %v1084 = vpop.f32.mrb[0].mxu0
        %v1085 = vadd.f32 %v881, %v1084
        %v1086 = vpop.f32.mrb[0].mxu0
        %v1087 = vadd.f32 %v883, %v1086
        %1088 = vmatprep.mubr.f32.mxu0 0.0
        %v1089 = vand.u32 %v294, 4294901760
        %v1090 = vsub.f32 %v294, %v1089
        %v1091 = vand.u32 %v1090, 4294901760
        %1092 = vmatmul.mubr.f32.gmra.mrb[0].mxu0 %v1091
        %v1093 = vpop.f32.mrb[0].mxu0
        %v1094 = vadd.f32 %v889, %v1093
        %v1095 = vpop.f32.mrb[0].mxu0
        %v1096 = vadd.f32 %v891, %v1095
        %1097 = vmatprep.mubr.f32.mxu0 0.0
        %v1098 = vand.u32 %v297, 4294901760
        %v1099 = vsub.f32 %v297, %v1098
        %v1100 = vand.u32 %v1099, 4294901760
        %1101 = vmatmul.mubr.f32.gmra.mrb[0].mxu0 %v1100
        %v1102 = vpop.f32.mrb[0].mxu0
        %v1103 = vadd.f32 %v897, %v1102
        %v1104 = vpop.f32.mrb[0].mxu0
        %v1105 = vadd.f32 %v899, %v1104
        %1106 = vmatprep.mubr.f32.mxu0 0.0
        %v1107 = vand.u32 %v300, 4294901760
        %v1108 = vsub.f32 %v300, %v1107
        %v1109 = vand.u32 %v1108, 4294901760
        %1110 = vmatmul.mubr.f32.gmra.mrb[0].mxu0 %v1109
        %v1111 = vpop.f32.mrb[0].mxu0
        %v1112 = vadd.f32 %v905, %v1111
        %v1113 = vpop.f32.mrb[0].mxu0
        %v1114 = vadd.f32 %v907, %v1113
        %1115 = vmatprep.mubr.f32.mxu0 0.0
        %v1116 = vand.u32 %v303, 4294901760
        %v1117 = vsub.f32 %v303, %v1116
        %v1118 = vand.u32 %v1117, 4294901760
        %1119 = vmatmul.mubr.f32.gmra.mrb[0].mxu0 %v1118
        %v1120 = vpop.f32.mrb[0].mxu0
        %v1121 = vadd.f32 %v913, %v1120
        %v1122 = vpop.f32.mrb[0].mxu0
        %v1123 = vadd.f32 %v915, %v1122
        %1124 = vmatprep.mubr.f32.mxu0 0.0
        %v1125 = vand.u32 %v306, 4294901760
        %v1126 = vsub.f32 %v306, %v1125
        %v1127 = vand.u32 %v1126, 4294901760
        %1128 = vmatmul.mubr.f32.gmra.mrb[0].mxu0 %v1127
        %v1129 = vpop.f32.mrb[0].mxu0
        %v1130 = vadd.f32 %v921, %v1129
        %v1131 = vpop.f32.mrb[0].mxu0
        %v1132 = vadd.f32 %v923, %v1131
        %1133 = vmatprep.mubr.f32.mxu0 0.0
        %v1134 = vand.u32 %v309, 4294901760
        %v1135 = vsub.f32 %v309, %v1134
        %v1136 = vand.u32 %v1135, 4294901760
        %1137 = vmatmul.mubr.f32.gmra.mrb[0].mxu0 %v1136
        %v1138 = vpop.f32.mrb[0].mxu0
        %v1139 = vadd.f32 %v929, %v1138
        %v1140 = vpop.f32.mrb[0].mxu0
        %v1141 = vadd.f32 %v931, %v1140
        %1142 = vmatprep.mubr.f32.mxu0 0.0
        %v1143 = vand.u32 %v312, 4294901760
        %v1144 = vsub.f32 %v312, %v1143
        %v1145 = vand.u32 %v1144, 4294901760
        %1146 = vmatmul.mubr.f32.gmra.mrb[0].mxu0 %v1145
        %v1147 = vpop.f32.mrb[0].mxu0
        %v1148 = vadd.f32 %v937, %v1147
        %v1149 = vpop.f32.mrb[0].mxu0
        %v1150 = vadd.f32 %v939, %v1149
        %1151 = vdwg.mxu0
        %v1152 = vand.u32 %v264, 4294901760
        %v1153 = vsub.f32 %v264, %v1152
        %v1154 = vand.u32 %v1153, 4294901760
        %1155 = vmatprep.subr.mxu0 %v1154
        %v1156 = vand.u32 %v263, 4294901760
        %v1157 = vsub.f32 %v263, %v1156
        %v1158 = vand.u32 %v1157, 4294901760
        %1159 = vmatpush1.msra.mxu0 %v1158
        %1160 = vmatprep.subr.mxu0 0.0
        %1161 = vmatpush1.msra.mxu0 0.0
        %1162 = vmatprep.subr.mxu0 0.0
        %1163 = vmatpush1.msra.mxu0 0.0
        %1164 = vmatprep.subr.mxu0 0.0
        %1165 = vmatpush1.msra.mxu0 0.0
        %1166 = vmatprep.subr.mxu0 0.0
        %1167 = vmatpush1.msra.mxu0 0.0
        %1168 = vmatprep.subr.mxu0 0.0
        %1169 = vmatpush1.msra.mxu0 0.0
        %1170 = vmatprep.subr.mxu0 0.0
        %1171 = vmatpush1.msra.mxu0 0.0
        %1172 = vmatprep.subr.mxu0 0.0
        %1173 = vmatpush1.msra.mxu0 0.0
        %1174 = vmatprep.subr.mxu0 0.0
        %1175 = vmatpush1.msra.mxu0 0.0
        %1176 = vmatprep.subr.mxu0 0.0
        %1177 = vmatpush1.msra.mxu0 0.0
        %1178 = vmatprep.subr.mxu0 0.0
        %1179 = vmatpush1.msra.mxu0 0.0
        %1180 = vmatprep.subr.mxu0 0.0
        %1181 = vmatpush1.msra.mxu0 0.0
        %1182 = vmatprep.subr.mxu0 0.0
        %1183 = vmatpush1.msra.mxu0 0.0
        %1184 = vmatprep.subr.mxu0 0.0
        %1185 = vmatpush1.msra.mxu0 0.0
        %1186 = vmatprep.subr.mxu0 0.0
        %1187 = vmatpush1.msra.mxu0 0.0
        %1188 = vmatprep.subr.mxu0 0.0
        %1189 = vmatpush1.msra.mxu0 0.0
        %1190 = vmatprep.subr.mxu0 0.0
        %1191 = vmatpush1.msra.mxu0 0.0
        %1192 = vmatprep.subr.mxu0 0.0
        %1193 = vmatpush1.msra.mxu0 0.0
        %1194 = vmatprep.subr.mxu0 0.0
        %1195 = vmatpush1.msra.mxu0 0.0
        %1196 = vmatprep.subr.mxu0 0.0
        %1197 = vmatpush1.msra.mxu0 0.0
        %1198 = vmatprep.subr.mxu0 0.0
        %1199 = vmatpush1.msra.mxu0 0.0
        %1200 = vmatprep.subr.mxu0 0.0
        %1201 = vmatpush1.msra.mxu0 0.0
        %1202 = vmatprep.subr.mxu0 0.0
        %1203 = vmatpush1.msra.mxu0 0.0
        %1204 = vmatprep.subr.mxu0 0.0
        %1205 = vmatpush1.msra.mxu0 0.0
        %1206 = vmatprep.subr.mxu0 0.0
        %1207 = vmatpush1.msra.mxu0 0.0
        %1208 = vmatprep.subr.mxu0 0.0
        %1209 = vmatpush1.msra.mxu0 0.0
        %1210 = vmatprep.subr.mxu0 0.0
        %1211 = vmatpush1.msra.mxu0 0.0
        %1212 = vmatprep.subr.mxu0 0.0
        %1213 = vmatpush1.msra.mxu0 0.0
        %1214 = vmatprep.subr.mxu0 0.0
        %1215 = vmatpush1.msra.mxu0 0.0
        %1216 = vmatprep.subr.mxu0 0.0
        %1217 = vmatpush1.msra.mxu0 0.0
        %1218 = vmatprep.subr.mxu0 0.0
        %1219 = vmatpush1.msra.mxu0 0.0
        %1220 = vmatprep.subr.mxu0 0.0
        %1221 = vmatpush1.msra.mxu0 0.0
        %1222 = vmatprep.mubr.f32.mxu0 0.0
        %v1223 = vand.u32 %v267, 4294901760
        %1224 = vmatmul.mubr.f32.gmra.mrb[0].mxu0 %v1223
        %v1225 = vpop.f32.mrb[0].mxu0
        %v1226 = vadd.f32 %v1013, %v1225
        %v1227 = vpop.f32.mrb[0].mxu0
        %v1228 = vadd.f32 %v1015, %v1227
        %1229 = vmatprep.mubr.f32.mxu0 0.0
        %v1230 = vand.u32 %v270, 4294901760
        %1231 = vmatmul.mubr.f32.gmra.mrb[0].mxu0 %v1230
        %v1232 = vpop.f32.mrb[0].mxu0
        %v1233 = vadd.f32 %v1022, %v1232
        %v1234 = vpop.f32.mrb[0].mxu0
        %v1235 = vadd.f32 %v1024, %v1234
        %1236 = vmatprep.mubr.f32.mxu0 0.0
        %v1237 = vand.u32 %v273, 4294901760
        %1238 = vmatmul.mubr.f32.gmra.mrb[0].mxu0 %v1237
        %v1239 = vpop.f32.mrb[0].mxu0
        %v1240 = vadd.f32 %v1031, %v1239
        %v1241 = vpop.f32.mrb[0].mxu0
        %v1242 = vadd.f32 %v1033, %v1241
        %1243 = vmatprep.mubr.f32.mxu0 0.0
        %v1244 = vand.u32 %v276, 4294901760
        %1245 = vmatmul.mubr.f32.gmra.mrb[0].mxu0 %v1244
        %v1246 = vpop.f32.mrb[0].mxu0
        %v1247 = vadd.f32 %v1040, %v1246
        %v1248 = vpop.f32.mrb[0].mxu0
        %v1249 = vadd.f32 %v1042, %v1248
        %1250 = vmatprep.mubr.f32.mxu0 0.0
        %v1251 = vand.u32 %v279, 4294901760
        %1252 = vmatmul.mubr.f32.gmra.mrb[0].mxu0 %v1251
        %v1253 = vpop.f32.mrb[0].mxu0
        %v1254 = vadd.f32 %v1049, %v1253
        %v1255 = vpop.f32.mrb[0].mxu0
        %v1256 = vadd.f32 %v1051, %v1255
        %1257 = vmatprep.mubr.f32.mxu0 0.0
        %v1258 = vand.u32 %v282, 4294901760
        %1259 = vmatmul.mubr.f32.gmra.mrb[0].mxu0 %v1258
        %v1260 = vpop.f32.mrb[0].mxu0
        %v1261 = vadd.f32 %v1058, %v1260
        %v1262 = vpop.f32.mrb[0].mxu0
        %v1263 = vadd.f32 %v1060, %v1262
        %1264 = vmatprep.mubr.f32.mxu0 0.0
        %v1265 = vand.u32 %v285, 4294901760
        %1266 = vmatmul.mubr.f32.gmra.mrb[0].mxu0 %v1265
        %v1267 = vpop.f32.mrb[0].mxu0
        %v1268 = vadd.f32 %v1067, %v1267
        %v1269 = vpop.f32.mrb[0].mxu0
        %v1270 = vadd.f32 %v1069, %v1269
        %1271 = vmatprep.mubr.f32.mxu0 0.0
        %v1272 = vand.u32 %v288, 4294901760
        %1273 = vmatmul.mubr.f32.gmra.mrb[0].mxu0 %v1272
        %v1274 = vpop.f32.mrb[0].mxu0
        %v1275 = vadd.f32 %v1076, %v1274
        %v1276 = vpop.f32.mrb[0].mxu0
        %v1277 = vadd.f32 %v1078, %v1276
        %1278 = vmatprep.mubr.f32.mxu0 0.0
        %v1279 = vand.u32 %v291, 4294901760
        %1280 = vmatmul.mubr.f32.gmra.mrb[0].mxu0 %v1279
        %v1281 = vpop.f32.mrb[0].mxu0
        %v1282 = vadd.f32 %v1085, %v1281
        %v1283 = vpop.f32.mrb[0].mxu0
        %v1284 = vadd.f32 %v1087, %v1283
        %1285 = vmatprep.mubr.f32.mxu0 0.0
        %v1286 = vand.u32 %v294, 4294901760
        %1287 = vmatmul.mubr.f32.gmra.mrb[0].mxu0 %v1286
        %v1288 = vpop.f32.mrb[0].mxu0
        %v1289 = vadd.f32 %v1094, %v1288
        %v1290 = vpop.f32.mrb[0].mxu0
        %v1291 = vadd.f32 %v1096, %v1290
        %1292 = vmatprep.mubr.f32.mxu0 0.0
        %v1293 = vand.u32 %v297, 4294901760
        %1294 = vmatmul.mubr.f32.gmra.mrb[0].mxu0 %v1293
        %v1295 = vpop.f32.mrb[0].mxu0
        %v1296 = vadd.f32 %v1103, %v1295
        %v1297 = vpop.f32.mrb[0].mxu0
        %v1298 = vadd.f32 %v1105, %v1297
        %1299 = vmatprep.mubr.f32.mxu0 0.0
        %v1300 = vand.u32 %v300, 4294901760
        %1301 = vmatmul.mubr.f32.gmra.mrb[0].mxu0 %v1300
        %v1302 = vpop.f32.mrb[0].mxu0
        %v1303 = vadd.f32 %v1112, %v1302
        %v1304 = vpop.f32.mrb[0].mxu0
        %v1305 = vadd.f32 %v1114, %v1304
        %1306 = vmatprep.mubr.f32.mxu0 0.0
        %v1307 = vand.u32 %v303, 4294901760
        %1308 = vmatmul.mubr.f32.gmra.mrb[0].mxu0 %v1307
        %v1309 = vpop.f32.mrb[0].mxu0
        %v1310 = vadd.f32 %v1121, %v1309
        %v1311 = vpop.f32.mrb[0].mxu0
        %v1312 = vadd.f32 %v1123, %v1311
        %1313 = vmatprep.mubr.f32.mxu0 0.0
        %v1314 = vand.u32 %v306, 4294901760
        %1315 = vmatmul.mubr.f32.gmra.mrb[0].mxu0 %v1314
        %v1316 = vpop.f32.mrb[0].mxu0
        %v1317 = vadd.f32 %v1130, %v1316
        %v1318 = vpop.f32.mrb[0].mxu0
        %v1319 = vadd.f32 %v1132, %v1318
        %1320 = vmatprep.mubr.f32.mxu0 0.0
        %v1321 = vand.u32 %v309, 4294901760
        %1322 = vmatmul.mubr.f32.gmra.mrb[0].mxu0 %v1321
        %v1323 = vpop.f32.mrb[0].mxu0
        %v1324 = vadd.f32 %v1139, %v1323
        %v1325 = vpop.f32.mrb[0].mxu0
        %v1326 = vadd.f32 %v1141, %v1325
        %1327 = vmatprep.mubr.f32.mxu0 0.0
        %v1328 = vand.u32 %v312, 4294901760
        %1329 = vmatmul.mubr.f32.gmra.mrb[0].mxu0 %v1328
        %v1330 = vpop.f32.mrb[0].mxu0
        %v1331 = vadd.f32 %v1148, %v1330
        %v1332 = vpop.f32.mrb[0].mxu0
        %v1333 = vadd.f32 %v1150, %v1332
        %1334 = vdwg.mxu0
        %v1335 = vand.u32 %v264, 4294901760
        %1336 = vmatprep.subr.mxu0 %v1335
        %v1337 = vand.u32 %v263, 4294901760
        %1338 = vmatpush1.msra.mxu0 %v1337
        %1339 = vmatprep.subr.mxu0 0.0
        %1340 = vmatpush1.msra.mxu0 0.0
        %1341 = vmatprep.subr.mxu0 0.0
        %1342 = vmatpush1.msra.mxu0 0.0
        %1343 = vmatprep.subr.mxu0 0.0
        %1344 = vmatpush1.msra.mxu0 0.0
        %1345 = vmatprep.subr.mxu0 0.0
        %1346 = vmatpush1.msra.mxu0 0.0
        %1347 = vmatprep.subr.mxu0 0.0
        %1348 = vmatpush1.msra.mxu0 0.0
        %1349 = vmatprep.subr.mxu0 0.0
        %1350 = vmatpush1.msra.mxu0 0.0
        %1351 = vmatprep.subr.mxu0 0.0
        %1352 = vmatpush1.msra.mxu0 0.0
        %1353 = vmatprep.subr.mxu0 0.0
        %1354 = vmatpush1.msra.mxu0 0.0
        %1355 = vmatprep.subr.mxu0 0.0
        %1356 = vmatpush1.msra.mxu0 0.0
        %1357 = vmatprep.subr.mxu0 0.0
        %1358 = vmatpush1.msra.mxu0 0.0
        %1359 = vmatprep.subr.mxu0 0.0
        %1360 = vmatpush1.msra.mxu0 0.0
        %1361 = vmatprep.subr.mxu0 0.0
        %1362 = vmatpush1.msra.mxu0 0.0
        %1363 = vmatprep.subr.mxu0 0.0
        %1364 = vmatpush1.msra.mxu0 0.0
        %1365 = vmatprep.subr.mxu0 0.0
        %1366 = vmatpush1.msra.mxu0 0.0
        %1367 = vmatprep.subr.mxu0 0.0
        %1368 = vmatpush1.msra.mxu0 0.0
        %1369 = vmatprep.subr.mxu0 0.0
        %1370 = vmatpush1.msra.mxu0 0.0
        %1371 = vmatprep.subr.mxu0 0.0
        %1372 = vmatpush1.msra.mxu0 0.0
        %1373 = vmatprep.subr.mxu0 0.0
        %1374 = vmatpush1.msra.mxu0 0.0
        %1375 = vmatprep.subr.mxu0 0.0
        %1376 = vmatpush1.msra.mxu0 0.0
        %1377 = vmatprep.subr.mxu0 0.0
        %1378 = vmatpush1.msra.mxu0 0.0
        %1379 = vmatprep.subr.mxu0 0.0
        %1380 = vmatpush1.msra.mxu0 0.0
        %1381 = vmatprep.subr.mxu0 0.0
        %1382 = vmatpush1.msra.mxu0 0.0
        %1383 = vmatprep.subr.mxu0 0.0
        %1384 = vmatpush1.msra.mxu0 0.0
        %1385 = vmatprep.subr.mxu0 0.0
        %1386 = vmatpush1.msra.mxu0 0.0
        %1387 = vmatprep.subr.mxu0 0.0
        %1388 = vmatpush1.msra.mxu0 0.0
        %1389 = vmatprep.subr.mxu0 0.0
        %1390 = vmatpush1.msra.mxu0 0.0
        %1391 = vmatprep.subr.mxu0 0.0
        %1392 = vmatpush1.msra.mxu0 0.0
        %1393 = vmatprep.subr.mxu0 0.0
        %1394 = vmatpush1.msra.mxu0 0.0
        %1395 = vmatprep.subr.mxu0 0.0
        %1396 = vmatpush1.msra.mxu0 0.0
        %1397 = vmatprep.subr.mxu0 0.0
        %1398 = vmatpush1.msra.mxu0 0.0
        %1399 = vmatprep.subr.mxu0 0.0
        %1400 = vmatpush1.msra.mxu0 0.0
        %1401 = vmatprep.mubr.f32.mxu0 0.0
        %v1402 = vand.u32 %v267, 4294901760
        %1403 = vmatmul.mubr.f32.gmra.mrb[0].mxu0 %v1402
        %v1404 = vpop.f32.mrb[0].mxu0
        %v1405 = vadd.f32 %v1226, %v1404
        %v1406 = vpop.f32.mrb[0].mxu0
        %v1407 = vadd.f32 %v1228, %v1406
        %1408 = vmatprep.mubr.f32.mxu0 0.0
        %v1409 = vand.u32 %v270, 4294901760
        %1410 = vmatmul.mubr.f32.gmra.mrb[0].mxu0 %v1409
        %v1411 = vpop.f32.mrb[0].mxu0
        %v1412 = vadd.f32 %v1233, %v1411
        %v1413 = vpop.f32.mrb[0].mxu0
        %v1414 = vadd.f32 %v1235, %v1413
        %1415 = vmatprep.mubr.f32.mxu0 0.0
        %v1416 = vand.u32 %v273, 4294901760
        %1417 = vmatmul.mubr.f32.gmra.mrb[0].mxu0 %v1416
        %v1418 = vpop.f32.mrb[0].mxu0
        %v1419 = vadd.f32 %v1240, %v1418
        %v1420 = vpop.f32.mrb[0].mxu0
        %v1421 = vadd.f32 %v1242, %v1420
        %1422 = vmatprep.mubr.f32.mxu0 0.0
        %v1423 = vand.u32 %v276, 4294901760
        %1424 = vmatmul.mubr.f32.gmra.mrb[0].mxu0 %v1423
        %v1425 = vpop.f32.mrb[0].mxu0
        %v1426 = vadd.f32 %v1247, %v1425
        %v1427 = vpop.f32.mrb[0].mxu0
        %v1428 = vadd.f32 %v1249, %v1427
        %1429 = vmatprep.mubr.f32.mxu0 0.0
        %v1430 = vand.u32 %v279, 4294901760
        %1431 = vmatmul.mubr.f32.gmra.mrb[0].mxu0 %v1430
        %v1432 = vpop.f32.mrb[0].mxu0
        %v1433 = vadd.f32 %v1254, %v1432
        %v1434 = vpop.f32.mrb[0].mxu0
        %v1435 = vadd.f32 %v1256, %v1434
        %1436 = vmatprep.mubr.f32.mxu0 0.0
        %v1437 = vand.u32 %v282, 4294901760
        %1438 = vmatmul.mubr.f32.gmra.mrb[0].mxu0 %v1437
        %v1439 = vpop.f32.mrb[0].mxu0
        %v1440 = vadd.f32 %v1261, %v1439
        %v1441 = vpop.f32.mrb[0].mxu0
        %v1442 = vadd.f32 %v1263, %v1441
        %1443 = vmatprep.mubr.f32.mxu0 0.0
        %v1444 = vand.u32 %v285, 4294901760
        %1445 = vmatmul.mubr.f32.gmra.mrb[0].mxu0 %v1444
        %v1446 = vpop.f32.mrb[0].mxu0
        %v1447 = vadd.f32 %v1268, %v1446
        %v1448 = vpop.f32.mrb[0].mxu0
        %v1449 = vadd.f32 %v1270, %v1448
        %1450 = vmatprep.mubr.f32.mxu0 0.0
        %v1451 = vand.u32 %v288, 4294901760
        %1452 = vmatmul.mubr.f32.gmra.mrb[0].mxu0 %v1451
        %v1453 = vpop.f32.mrb[0].mxu0
        %v1454 = vadd.f32 %v1275, %v1453
        %v1455 = vpop.f32.mrb[0].mxu0
        %v1456 = vadd.f32 %v1277, %v1455
        %1457 = vmatprep.mubr.f32.mxu0 0.0
        %v1458 = vand.u32 %v291, 4294901760
        %1459 = vmatmul.mubr.f32.gmra.mrb[0].mxu0 %v1458
        %v1460 = vpop.f32.mrb[0].mxu0
        %v1461 = vadd.f32 %v1282, %v1460
        %v1462 = vpop.f32.mrb[0].mxu0
        %v1463 = vadd.f32 %v1284, %v1462
        %1464 = vmatprep.mubr.f32.mxu0 0.0
        %v1465 = vand.u32 %v294, 4294901760
        %1466 = vmatmul.mubr.f32.gmra.mrb[0].mxu0 %v1465
        %v1467 = vpop.f32.mrb[0].mxu0
        %v1468 = vadd.f32 %v1289, %v1467
        %v1469 = vpop.f32.mrb[0].mxu0
        %v1470 = vadd.f32 %v1291, %v1469
        %1471 = vmatprep.mubr.f32.mxu0 0.0
        %v1472 = vand.u32 %v297, 4294901760
        %1473 = vmatmul.mubr.f32.gmra.mrb[0].mxu0 %v1472
        %v1474 = vpop.f32.mrb[0].mxu0
        %v1475 = vadd.f32 %v1296, %v1474
        %v1476 = vpop.f32.mrb[0].mxu0
        %v1477 = vadd.f32 %v1298, %v1476
        %1478 = vmatprep.mubr.f32.mxu0 0.0
        %v1479 = vand.u32 %v300, 4294901760
        %1480 = vmatmul.mubr.f32.gmra.mrb[0].mxu0 %v1479
        %v1481 = vpop.f32.mrb[0].mxu0
        %v1482 = vadd.f32 %v1303, %v1481
        %v1483 = vpop.f32.mrb[0].mxu0
        %v1484 = vadd.f32 %v1305, %v1483
        %1485 = vmatprep.mubr.f32.mxu0 0.0
        %v1486 = vand.u32 %v303, 4294901760
        %1487 = vmatmul.mubr.f32.gmra.mrb[0].mxu0 %v1486
        %v1488 = vpop.f32.mrb[0].mxu0
        %v1489 = vadd.f32 %v1310, %v1488
        %v1490 = vpop.f32.mrb[0].mxu0
        %v1491 = vadd.f32 %v1312, %v1490
        %1492 = vmatprep.mubr.f32.mxu0 0.0
        %v1493 = vand.u32 %v306, 4294901760
        %1494 = vmatmul.mubr.f32.gmra.mrb[0].mxu0 %v1493
        %v1495 = vpop.f32.mrb[0].mxu0
        %v1496 = vadd.f32 %v1317, %v1495
        %v1497 = vpop.f32.mrb[0].mxu0
        %v1498 = vadd.f32 %v1319, %v1497
        %1499 = vmatprep.mubr.f32.mxu0 0.0
        %v1500 = vand.u32 %v309, 4294901760
        %1501 = vmatmul.mubr.f32.gmra.mrb[0].mxu0 %v1500
        %v1502 = vpop.f32.mrb[0].mxu0
        %v1503 = vadd.f32 %v1324, %v1502
        %v1504 = vpop.f32.mrb[0].mxu0
        %v1505 = vadd.f32 %v1326, %v1504
        %1506 = vmatprep.mubr.f32.mxu0 0.0
        %v1507 = vand.u32 %v312, 4294901760
        %1508 = vmatmul.mubr.f32.gmra.mrb[0].mxu0 %v1507
        %v1509 = vpop.f32.mrb[0].mxu0
        %v1510 = vadd.f32 %v1331, %v1509
        %v1511 = vpop.f32.mrb[0].mxu0
        %v1512 = vadd.f32 %v1333, %v1511
        %1513 = vdwg.mxu0
        %v1514 = vld [vmem:[%s2] sm:$0x3]
        %v1516 = vlaneseq
        %v1517 = vshrl.u32 %v1516, 7
        %v1518 = vsub.s32 0, %v1517
        %v1519 = vrot.slane %v1514, %v1518
        %v1520 = vlaneseq
        %v1521 = vshrl.u32 %v1520, 7
        %v1522 = vsub.s32 1, %v1521
        %v1523 = vrot.slane %v1514, %v1522
        %v1526 = vsub.f32 %v1519, %v1405
        %v1527 = vsub.f32 %v1523, %v1407
        %v1528 = vsub.f32 %v1519, %v1412
        %v1529 = vsub.f32 %v1523, %v1414
        %v1530 = vsub.f32 %v1519, %v1419
        %v1531 = vsub.f32 %v1523, %v1421
        %v1532 = vsub.f32 %v1519, %v1426
        %v1533 = vsub.f32 %v1523, %v1428
        %v1534 = vsub.f32 %v1519, %v1433
        %v1535 = vsub.f32 %v1523, %v1435
        %v1536 = vsub.f32 %v1519, %v1440
        %v1537 = vsub.f32 %v1523, %v1442
        %v1538 = vsub.f32 %v1519, %v1447
        %v1539 = vsub.f32 %v1523, %v1449
        %v1540 = vsub.f32 %v1519, %v1454
        %v1541 = vsub.f32 %v1523, %v1456
        %v1542 = vsub.f32 %v1519, %v1461
        %v1543 = vsub.f32 %v1523, %v1463
        %v1544 = vsub.f32 %v1519, %v1468
        %v1545 = vsub.f32 %v1523, %v1470
        %v1546 = vsub.f32 %v1519, %v1475
        %v1547 = vsub.f32 %v1523, %v1477
        %v1548 = vsub.f32 %v1519, %v1482
        %v1549 = vsub.f32 %v1523, %v1484
        %v1550 = vsub.f32 %v1519, %v1489
        %v1551 = vsub.f32 %v1523, %v1491
        %v1552 = vsub.f32 %v1519, %v1496
        %v1553 = vsub.f32 %v1523, %v1498
        %v1554 = vsub.f32 %v1519, %v1503
        %v1555 = vsub.f32 %v1523, %v1505
        %v1556 = vsub.f32 %v1519, %v1510
        %v1557 = vsub.f32 %v1523, %v1512
        %v1558 = vand.u32 2147483647, %v1526
        %v1559 = vand.u32 2147483647, %v1527
        %v1560 = vand.u32 2147483647, %v1528
        %v1561 = vand.u32 2147483647, %v1529
        %v1562 = vand.u32 2147483647, %v1530
        %v1563 = vand.u32 2147483647, %v1531
        %v1564 = vand.u32 2147483647, %v1532
        %v1565 = vand.u32 2147483647, %v1533
        %v1566 = vand.u32 2147483647, %v1534
        %v1567 = vand.u32 2147483647, %v1535
        %v1568 = vand.u32 2147483647, %v1536
        %v1569 = vand.u32 2147483647, %v1537
        %v1570 = vand.u32 2147483647, %v1538
        %v1571 = vand.u32 2147483647, %v1539
        %v1572 = vand.u32 2147483647, %v1540
        %v1573 = vand.u32 2147483647, %v1541
        %v1574 = vand.u32 2147483647, %v1542
        %v1575 = vand.u32 2147483647, %v1543
        %v1576 = vand.u32 2147483647, %v1544
        %v1577 = vand.u32 2147483647, %v1545
        %v1578 = vand.u32 2147483647, %v1546
        %v1579 = vand.u32 2147483647, %v1547
        %v1580 = vand.u32 2147483647, %v1548
        %v1581 = vand.u32 2147483647, %v1549
        %v1582 = vand.u32 2147483647, %v1550
        %v1583 = vand.u32 2147483647, %v1551
        %v1584 = vand.u32 2147483647, %v1552
        %v1585 = vand.u32 2147483647, %v1553
        %v1586 = vand.u32 2147483647, %v1554
        %v1587 = vand.u32 2147483647, %v1555
        %v1588 = vand.u32 2147483647, %v1556
        %v1589 = vand.u32 2147483647, %v1557
        %v1590 = vsub.f32 1.0, %v1558
        %v1591 = vsub.f32 1.0, %v1559
        %v1592 = vsub.f32 1.0, %v1560
        %v1593 = vsub.f32 1.0, %v1561
        %v1594 = vsub.f32 1.0, %v1562
        %v1595 = vsub.f32 1.0, %v1563
        %v1596 = vsub.f32 1.0, %v1564
        %v1597 = vsub.f32 1.0, %v1565
        %v1598 = vsub.f32 1.0, %v1566
        %v1599 = vsub.f32 1.0, %v1567
        %v1600 = vsub.f32 1.0, %v1568
        %v1601 = vsub.f32 1.0, %v1569
        %v1602 = vsub.f32 1.0, %v1570
        %v1603 = vsub.f32 1.0, %v1571
        %v1604 = vsub.f32 1.0, %v1572
        %v1605 = vsub.f32 1.0, %v1573
        %v1606 = vsub.f32 1.0, %v1574
        %v1607 = vsub.f32 1.0, %v1575
        %v1608 = vsub.f32 1.0, %v1576
        %v1609 = vsub.f32 1.0, %v1577
        %v1610 = vsub.f32 1.0, %v1578
        %v1611 = vsub.f32 1.0, %v1579
        %v1612 = vsub.f32 1.0, %v1580
        %v1613 = vsub.f32 1.0, %v1581
        %v1614 = vsub.f32 1.0, %v1582
        %v1615 = vsub.f32 1.0, %v1583
        %v1616 = vsub.f32 1.0, %v1584
        %v1617 = vsub.f32 1.0, %v1585
        %v1618 = vsub.f32 1.0, %v1586
        %v1619 = vsub.f32 1.0, %v1587
        %v1620 = vsub.f32 1.0, %v1588
        %v1621 = vsub.f32 1.0, %v1589
        %v1622 = vmax.f32 %v1590, 0.0
        %v1623 = vmax.f32 %v1591, 0.0
        %v1624 = vmax.f32 %v1592, 0.0
        %v1625 = vmax.f32 %v1593, 0.0
        %v1626 = vmax.f32 %v1594, 0.0
        %v1627 = vmax.f32 %v1595, 0.0
        %v1628 = vmax.f32 %v1596, 0.0
        %v1629 = vmax.f32 %v1597, 0.0
        %v1630 = vmax.f32 %v1598, 0.0
        %v1631 = vmax.f32 %v1599, 0.0
        %v1632 = vmax.f32 %v1600, 0.0
        %v1633 = vmax.f32 %v1601, 0.0
        %v1634 = vmax.f32 %v1602, 0.0
        %v1635 = vmax.f32 %v1603, 0.0
        %v1636 = vmax.f32 %v1604, 0.0
        %v1637 = vmax.f32 %v1605, 0.0
        %v1638 = vmax.f32 %v1606, 0.0
        %v1639 = vmax.f32 %v1607, 0.0
        %v1640 = vmax.f32 %v1608, 0.0
        %v1641 = vmax.f32 %v1609, 0.0
        %v1642 = vmax.f32 %v1610, 0.0
        %v1643 = vmax.f32 %v1611, 0.0
        %v1644 = vmax.f32 %v1612, 0.0
        %v1645 = vmax.f32 %v1613, 0.0
        %v1646 = vmax.f32 %v1614, 0.0
        %v1647 = vmax.f32 %v1615, 0.0
        %v1648 = vmax.f32 %v1616, 0.0
        %v1649 = vmax.f32 %v1617, 0.0
        %v1650 = vmax.f32 %v1618, 0.0
        %v1651 = vmax.f32 %v1619, 0.0
        %v1652 = vmax.f32 %v1620, 0.0
        %v1653 = vmax.f32 %v1621, 0.0
        %v1654 = vld [vmem:[%s3] sm:$0xff]
        %v1655 = vld [vmem:[%s3 + $0x8] sm:$0xff]
        %v1656 = vld [vmem:[%s3 + $0x10] sm:$0xff]
        %v1657 = vld [vmem:[%s3 + $0x18] sm:$0xff]
        %v1658 = vld [vmem:[%s3 + $0x20] sm:$0xff]
        %v1659 = vld [vmem:[%s3 + $0x28] sm:$0xff]
        %v1660 = vld [vmem:[%s3 + $0x30] sm:$0xff]
        %v1661 = vld [vmem:[%s3 + $0x38] sm:$0xff]
        %v1662 = vld [vmem:[%s3 + $0x40] sm:$0xff]
        %v1663 = vld [vmem:[%s3 + $0x48] sm:$0xff]
        %v1664 = vld [vmem:[%s3 + $0x50] sm:$0xff]
        %v1665 = vld [vmem:[%s3 + $0x58] sm:$0xff]
        %v1666 = vld [vmem:[%s3 + $0x60] sm:$0xff]
        %v1667 = vld [vmem:[%s3 + $0x68] sm:$0xff]
        %v1668 = vld [vmem:[%s3 + $0x70] sm:$0xff]
        %v1669 = vld [vmem:[%s3 + $0x78] sm:$0xff]
        %v1670 = vld [vmem:[%s3 + $0x80] sm:$0xff]
        %v1671 = vld [vmem:[%s3 + $0x88] sm:$0xff]
        %v1672 = vld [vmem:[%s3 + $0x90] sm:$0xff]
        %v1673 = vld [vmem:[%s3 + $0x98] sm:$0xff]
        %v1674 = vld [vmem:[%s3 + $0xa0] sm:$0xff]
        %v1675 = vld [vmem:[%s3 + $0xa8] sm:$0xff]
        %v1676 = vld [vmem:[%s3 + $0xb0] sm:$0xff]
        %v1677 = vld [vmem:[%s3 + $0xb8] sm:$0xff]
        %v1678 = vld [vmem:[%s3 + $0xc0] sm:$0xff]
        %v1679 = vld [vmem:[%s3 + $0xc8] sm:$0xff]
        %v1680 = vld [vmem:[%s3 + $0xd0] sm:$0xff]
        %v1681 = vld [vmem:[%s3 + $0xd8] sm:$0xff]
        %v1682 = vld [vmem:[%s3 + $0xe0] sm:$0xff]
        %v1683 = vld [vmem:[%s3 + $0xe8] sm:$0xff]
        %v1684 = vld [vmem:[%s3 + $0xf0] sm:$0xff]
        %v1685 = vld [vmem:[%s3 + $0xf8] sm:$0xff]
        %1686 = vmatprep.subr.mxu0 0.0
        %v1687 = vand.u32 %v1654, 4294901760
        %1688 = vmatpush1.msra.mxu0 %v1687
        %1689 = vmatprep.subr.mxu0 0.0
        %v1690 = vand.u32 %v1655, 4294901760
        %1691 = vmatpush1.msra.mxu0 %v1690
        %1692 = vmatprep.subr.mxu0 0.0
        %v1693 = vand.u32 %v1656, 4294901760
        %1694 = vmatpush1.msra.mxu0 %v1693
        %1695 = vmatprep.subr.mxu0 0.0
        %v1696 = vand.u32 %v1657, 4294901760
        %1697 = vmatpush1.msra.mxu0 %v1696
        %1698 = vmatprep.subr.mxu0 0.0
        %v1699 = vand.u32 %v1658, 4294901760
        %1700 = vmatpush1.msra.mxu0 %v1699
        %1701 = vmatprep.subr.mxu0 0.0
        %v1702 = vand.u32 %v1659, 4294901760
        %1703 = vmatpush1.msra.mxu0 %v1702
        %1704 = vmatprep.subr.mxu0 0.0
        %v1705 = vand.u32 %v1660, 4294901760
        %1706 = vmatpush1.msra.mxu0 %v1705
        %1707 = vmatprep.subr.mxu0 0.0
        %v1708 = vand.u32 %v1661, 4294901760
        %1709 = vmatpush1.msra.mxu0 %v1708
        %1710 = vmatprep.subr.mxu0 0.0
        %v1711 = vand.u32 %v1662, 4294901760
        %1712 = vmatpush1.msra.mxu0 %v1711
        %1713 = vmatprep.subr.mxu0 0.0
        %v1714 = vand.u32 %v1663, 4294901760
        %1715 = vmatpush1.msra.mxu0 %v1714
        %1716 = vmatprep.subr.mxu0 0.0
        %v1717 = vand.u32 %v1664, 4294901760
        %1718 = vmatpush1.msra.mxu0 %v1717
        %1719 = vmatprep.subr.mxu0 0.0
        %v1720 = vand.u32 %v1665, 4294901760
        %1721 = vmatpush1.msra.mxu0 %v1720
        %1722 = vmatprep.subr.mxu0 0.0
        %v1723 = vand.u32 %v1666, 4294901760
        %1724 = vmatpush1.msra.mxu0 %v1723
        %1725 = vmatprep.subr.mxu0 0.0
        %v1726 = vand.u32 %v1667, 4294901760
        %1727 = vmatpush1.msra.mxu0 %v1726
        %1728 = vmatprep.subr.mxu0 0.0
        %v1729 = vand.u32 %v1668, 4294901760
        %1730 = vmatpush1.msra.mxu0 %v1729
        %1731 = vmatprep.subr.mxu0 0.0
        %v1732 = vand.u32 %v1669, 4294901760
        %1733 = vmatpush1.msra.mxu0 %v1732
        %1734 = vmatprep.subr.mxu0 0.0
        %v1735 = vand.u32 %v1670, 4294901760
        %1736 = vmatpush1.msra.mxu0 %v1735
        %1737 = vmatprep.subr.mxu0 0.0
        %v1738 = vand.u32 %v1671, 4294901760
        %1739 = vmatpush1.msra.mxu0 %v1738
        %1740 = vmatprep.subr.mxu0 0.0
        %v1741 = vand.u32 %v1672, 4294901760
        %1742 = vmatpush1.msra.mxu0 %v1741
        %1743 = vmatprep.subr.mxu0 0.0
        %v1744 = vand.u32 %v1673, 4294901760
        %1745 = vmatpush1.msra.mxu0 %v1744
        %1746 = vmatprep.subr.mxu0 0.0
        %v1747 = vand.u32 %v1674, 4294901760
        %1748 = vmatpush1.msra.mxu0 %v1747
        %1749 = vmatprep.subr.mxu0 0.0
        %v1750 = vand.u32 %v1675, 4294901760
        %1751 = vmatpush1.msra.mxu0 %v1750
        %1752 = vmatprep.subr.mxu0 0.0
        %v1753 = vand.u32 %v1676, 4294901760
        %1754 = vmatpush1.msra.mxu0 %v1753
        %1755 = vmatprep.subr.mxu0 0.0
        %v1756 = vand.u32 %v1677, 4294901760
        %1757 = vmatpush1.msra.mxu0 %v1756
        %1758 = vmatprep.subr.mxu0 0.0
        %v1759 = vand.u32 %v1678, 4294901760
        %1760 = vmatpush1.msra.mxu0 %v1759
        %1761 = vmatprep.subr.mxu0 0.0
        %v1762 = vand.u32 %v1679, 4294901760
        %1763 = vmatpush1.msra.mxu0 %v1762
        %1764 = vmatprep.subr.mxu0 0.0
        %v1765 = vand.u32 %v1680, 4294901760
        %1766 = vmatpush1.msra.mxu0 %v1765
        %1767 = vmatprep.subr.mxu0 0.0
        %v1768 = vand.u32 %v1681, 4294901760
        %1769 = vmatpush1.msra.mxu0 %v1768
        %1770 = vmatprep.subr.mxu0 0.0
        %v1771 = vand.u32 %v1682, 4294901760
        %1772 = vmatpush1.msra.mxu0 %v1771
        %1773 = vmatprep.subr.mxu0 0.0
        %v1774 = vand.u32 %v1683, 4294901760
        %1775 = vmatpush1.msra.mxu0 %v1774
        %1776 = vmatprep.subr.mxu0 0.0
        %v1777 = vand.u32 %v1684, 4294901760
        %1778 = vmatpush1.msra.mxu0 %v1777
        %1779 = vmatprep.subr.mxu0 0.0
        %v1780 = vand.u32 %v1685, 4294901760
        %1781 = vmatpush1.msra.mxu0 %v1780
        %v1782 = vand.u32 %v1623, 4294901760
        %v1783 = vsub.f32 %v1623, %v1782
        %v1784 = vand.u32 %v1783, 4294901760
        %v1785 = vsub.f32 %v1783, %v1784
        %v1786 = vand.u32 %v1785, 4294901760
        %1787 = vmatprep.mubr.f32.mxu0 %v1786
        %v1788 = vand.u32 %v1622, 4294901760
        %v1789 = vsub.f32 %v1622, %v1788
        %v1790 = vand.u32 %v1789, 4294901760
        %v1791 = vsub.f32 %v1789, %v1790
        %v1792 = vand.u32 %v1791, 4294901760
        %1793 = vmatmul.mubr.f32.gmra.mrb[0].mxu0 %v1792
        %v1794 = vpop.f32.mrb[0].mxu0
        %v1795 = vadd.f32 0.0, %v1794
        %v1796 = vpop.f32.mrb[0].mxu0
        %v1797 = vand.u32 %v1625, 4294901760
        %v1798 = vsub.f32 %v1625, %v1797
        %v1799 = vand.u32 %v1798, 4294901760
        %v1800 = vsub.f32 %v1798, %v1799
        %v1801 = vand.u32 %v1800, 4294901760
        %1802 = vmatprep.mubr.f32.mxu0 %v1801
        %v1803 = vand.u32 %v1624, 4294901760
        %v1804 = vsub.f32 %v1624, %v1803
        %v1805 = vand.u32 %v1804, 4294901760
        %v1806 = vsub.f32 %v1804, %v1805
        %v1807 = vand.u32 %v1806, 4294901760
        %1808 = vmatmul.mubr.f32.gmra.mrb[0].mxu0 %v1807
        %v1809 = vpop.f32.mrb[0].mxu0
        %v1810 = vadd.f32 0.0, %v1809
        %v1811 = vpop.f32.mrb[0].mxu0
        %v1812 = vand.u32 %v1627, 4294901760
        %v1813 = vsub.f32 %v1627, %v1812
        %v1814 = vand.u32 %v1813, 4294901760
        %v1815 = vsub.f32 %v1813, %v1814
        %v1816 = vand.u32 %v1815, 4294901760
        %1817 = vmatprep.mubr.f32.mxu0 %v1816
        %v1818 = vand.u32 %v1626, 4294901760
        %v1819 = vsub.f32 %v1626, %v1818
        %v1820 = vand.u32 %v1819, 4294901760
        %v1821 = vsub.f32 %v1819, %v1820
        %v1822 = vand.u32 %v1821, 4294901760
        %1823 = vmatmul.mubr.f32.gmra.mrb[0].mxu0 %v1822
        %v1824 = vpop.f32.mrb[0].mxu0
        %v1825 = vadd.f32 0.0, %v1824
        %v1826 = vpop.f32.mrb[0].mxu0
        %v1827 = vand.u32 %v1629, 4294901760
        %v1828 = vsub.f32 %v1629, %v1827
        %v1829 = vand.u32 %v1828, 4294901760
        %v1830 = vsub.f32 %v1828, %v1829
        %v1831 = vand.u32 %v1830, 4294901760
        %1832 = vmatprep.mubr.f32.mxu0 %v1831
        %v1833 = vand.u32 %v1628, 4294901760
        %v1834 = vsub.f32 %v1628, %v1833
        %v1835 = vand.u32 %v1834, 4294901760
        %v1836 = vsub.f32 %v1834, %v1835
        %v1837 = vand.u32 %v1836, 4294901760
        %1838 = vmatmul.mubr.f32.gmra.mrb[0].mxu0 %v1837
        %v1839 = vpop.f32.mrb[0].mxu0
        %v1840 = vadd.f32 0.0, %v1839
        %v1841 = vpop.f32.mrb[0].mxu0
        %v1842 = vand.u32 %v1631, 4294901760
        %v1843 = vsub.f32 %v1631, %v1842
        %v1844 = vand.u32 %v1843, 4294901760
        %v1845 = vsub.f32 %v1843, %v1844
        %v1846 = vand.u32 %v1845, 4294901760
        %1847 = vmatprep.mubr.f32.mxu0 %v1846
        %v1848 = vand.u32 %v1630, 4294901760
        %v1849 = vsub.f32 %v1630, %v1848
        %v1850 = vand.u32 %v1849, 4294901760
        %v1851 = vsub.f32 %v1849, %v1850
        %v1852 = vand.u32 %v1851, 4294901760
        %1853 = vmatmul.mubr.f32.gmra.mrb[0].mxu0 %v1852
        %v1854 = vpop.f32.mrb[0].mxu0
        %v1855 = vadd.f32 0.0, %v1854
        %v1856 = vpop.f32.mrb[0].mxu0
        %v1857 = vand.u32 %v1633, 4294901760
        %v1858 = vsub.f32 %v1633, %v1857
        %v1859 = vand.u32 %v1858, 4294901760
        %v1860 = vsub.f32 %v1858, %v1859
        %v1861 = vand.u32 %v1860, 4294901760
        %1862 = vmatprep.mubr.f32.mxu0 %v1861
        %v1863 = vand.u32 %v1632, 4294901760
        %v1864 = vsub.f32 %v1632, %v1863
        %v1865 = vand.u32 %v1864, 4294901760
        %v1866 = vsub.f32 %v1864, %v1865
        %v1867 = vand.u32 %v1866, 4294901760
        %1868 = vmatmul.mubr.f32.gmra.mrb[0].mxu0 %v1867
        %v1869 = vpop.f32.mrb[0].mxu0
        %v1870 = vadd.f32 0.0, %v1869
        %v1871 = vpop.f32.mrb[0].mxu0
        %v1872 = vand.u32 %v1635, 4294901760
        %v1873 = vsub.f32 %v1635, %v1872
        %v1874 = vand.u32 %v1873, 4294901760
        %v1875 = vsub.f32 %v1873, %v1874
        %v1876 = vand.u32 %v1875, 4294901760
        %1877 = vmatprep.mubr.f32.mxu0 %v1876
        %v1878 = vand.u32 %v1634, 4294901760
        %v1879 = vsub.f32 %v1634, %v1878
        %v1880 = vand.u32 %v1879, 4294901760
        %v1881 = vsub.f32 %v1879, %v1880
        %v1882 = vand.u32 %v1881, 4294901760
        %1883 = vmatmul.mubr.f32.gmra.mrb[0].mxu0 %v1882
        %v1884 = vpop.f32.mrb[0].mxu0
        %v1885 = vadd.f32 0.0, %v1884
        %v1886 = vpop.f32.mrb[0].mxu0
        %v1887 = vand.u32 %v1637, 4294901760
        %v1888 = vsub.f32 %v1637, %v1887
        %v1889 = vand.u32 %v1888, 4294901760
        %v1890 = vsub.f32 %v1888, %v1889
        %v1891 = vand.u32 %v1890, 4294901760
        %1892 = vmatprep.mubr.f32.mxu0 %v1891
        %v1893 = vand.u32 %v1636, 4294901760
        %v1894 = vsub.f32 %v1636, %v1893
        %v1895 = vand.u32 %v1894, 4294901760
        %v1896 = vsub.f32 %v1894, %v1895
        %v1897 = vand.u32 %v1896, 4294901760
        %1898 = vmatmul.mubr.f32.gmra.mrb[0].mxu0 %v1897
        %v1899 = vpop.f32.mrb[0].mxu0
        %v1900 = vadd.f32 0.0, %v1899
        %v1901 = vpop.f32.mrb[0].mxu0
        %v1902 = vand.u32 %v1639, 4294901760
        %v1903 = vsub.f32 %v1639, %v1902
        %v1904 = vand.u32 %v1903, 4294901760
        %v1905 = vsub.f32 %v1903, %v1904
        %v1906 = vand.u32 %v1905, 4294901760
        %1907 = vmatprep.mubr.f32.mxu0 %v1906
        %v1908 = vand.u32 %v1638, 4294901760
        %v1909 = vsub.f32 %v1638, %v1908
        %v1910 = vand.u32 %v1909, 4294901760
        %v1911 = vsub.f32 %v1909, %v1910
        %v1912 = vand.u32 %v1911, 4294901760
        %1913 = vmatmul.mubr.f32.gmra.mrb[0].mxu0 %v1912
        %v1914 = vpop.f32.mrb[0].mxu0
        %v1915 = vadd.f32 0.0, %v1914
        %v1916 = vpop.f32.mrb[0].mxu0
        %v1917 = vand.u32 %v1641, 4294901760
        %v1918 = vsub.f32 %v1641, %v1917
        %v1919 = vand.u32 %v1918, 4294901760
        %v1920 = vsub.f32 %v1918, %v1919
        %v1921 = vand.u32 %v1920, 4294901760
        %1922 = vmatprep.mubr.f32.mxu0 %v1921
        %v1923 = vand.u32 %v1640, 4294901760
        %v1924 = vsub.f32 %v1640, %v1923
        %v1925 = vand.u32 %v1924, 4294901760
        %v1926 = vsub.f32 %v1924, %v1925
        %v1927 = vand.u32 %v1926, 4294901760
        %1928 = vmatmul.mubr.f32.gmra.mrb[0].mxu0 %v1927
        %v1929 = vpop.f32.mrb[0].mxu0
        %v1930 = vadd.f32 0.0, %v1929
        %v1931 = vpop.f32.mrb[0].mxu0
        %v1932 = vand.u32 %v1643, 4294901760
        %v1933 = vsub.f32 %v1643, %v1932
        %v1934 = vand.u32 %v1933, 4294901760
        %v1935 = vsub.f32 %v1933, %v1934
        %v1936 = vand.u32 %v1935, 4294901760
        %1937 = vmatprep.mubr.f32.mxu0 %v1936
        %v1938 = vand.u32 %v1642, 4294901760
        %v1939 = vsub.f32 %v1642, %v1938
        %v1940 = vand.u32 %v1939, 4294901760
        %v1941 = vsub.f32 %v1939, %v1940
        %v1942 = vand.u32 %v1941, 4294901760
        %1943 = vmatmul.mubr.f32.gmra.mrb[0].mxu0 %v1942
        %v1944 = vpop.f32.mrb[0].mxu0
        %v1945 = vadd.f32 0.0, %v1944
        %v1946 = vpop.f32.mrb[0].mxu0
        %v1947 = vand.u32 %v1645, 4294901760
        %v1948 = vsub.f32 %v1645, %v1947
        %v1949 = vand.u32 %v1948, 4294901760
        %v1950 = vsub.f32 %v1948, %v1949
        %v1951 = vand.u32 %v1950, 4294901760
        %1952 = vmatprep.mubr.f32.mxu0 %v1951
        %v1953 = vand.u32 %v1644, 4294901760
        %v1954 = vsub.f32 %v1644, %v1953
        %v1955 = vand.u32 %v1954, 4294901760
        %v1956 = vsub.f32 %v1954, %v1955
        %v1957 = vand.u32 %v1956, 4294901760
        %1958 = vmatmul.mubr.f32.gmra.mrb[0].mxu0 %v1957
        %v1959 = vpop.f32.mrb[0].mxu0
        %v1960 = vadd.f32 0.0, %v1959
        %v1961 = vpop.f32.mrb[0].mxu0
        %v1962 = vand.u32 %v1647, 4294901760
        %v1963 = vsub.f32 %v1647, %v1962
        %v1964 = vand.u32 %v1963, 4294901760
        %v1965 = vsub.f32 %v1963, %v1964
        %v1966 = vand.u32 %v1965, 4294901760
        %1967 = vmatprep.mubr.f32.mxu0 %v1966
        %v1968 = vand.u32 %v1646, 4294901760
        %v1969 = vsub.f32 %v1646, %v1968
        %v1970 = vand.u32 %v1969, 4294901760
        %v1971 = vsub.f32 %v1969, %v1970
        %v1972 = vand.u32 %v1971, 4294901760
        %1973 = vmatmul.mubr.f32.gmra.mrb[0].mxu0 %v1972
        %v1974 = vpop.f32.mrb[0].mxu0
        %v1975 = vadd.f32 0.0, %v1974
        %v1976 = vpop.f32.mrb[0].mxu0
        %v1977 = vand.u32 %v1649, 4294901760
        %v1978 = vsub.f32 %v1649, %v1977
        %v1979 = vand.u32 %v1978, 4294901760
        %v1980 = vsub.f32 %v1978, %v1979
        %v1981 = vand.u32 %v1980, 4294901760
        %1982 = vmatprep.mubr.f32.mxu0 %v1981
        %v1983 = vand.u32 %v1648, 4294901760
        %v1984 = vsub.f32 %v1648, %v1983
        %v1985 = vand.u32 %v1984, 4294901760
        %v1986 = vsub.f32 %v1984, %v1985
        %v1987 = vand.u32 %v1986, 4294901760
        %1988 = vmatmul.mubr.f32.gmra.mrb[0].mxu0 %v1987
        %v1989 = vpop.f32.mrb[0].mxu0
        %v1990 = vadd.f32 0.0, %v1989
        %v1991 = vpop.f32.mrb[0].mxu0
        %v1992 = vand.u32 %v1651, 4294901760
        %v1993 = vsub.f32 %v1651, %v1992
        %v1994 = vand.u32 %v1993, 4294901760
        %v1995 = vsub.f32 %v1993, %v1994
        %v1996 = vand.u32 %v1995, 4294901760
        %1997 = vmatprep.mubr.f32.mxu0 %v1996
        %v1998 = vand.u32 %v1650, 4294901760
        %v1999 = vsub.f32 %v1650, %v1998
        %v2000 = vand.u32 %v1999, 4294901760
        %v2001 = vsub.f32 %v1999, %v2000
        %v2002 = vand.u32 %v2001, 4294901760
        %2003 = vmatmul.mubr.f32.gmra.mrb[0].mxu0 %v2002
        %v2004 = vpop.f32.mrb[0].mxu0
        %v2005 = vadd.f32 0.0, %v2004
        %v2006 = vpop.f32.mrb[0].mxu0
        %v2007 = vand.u32 %v1653, 4294901760
        %v2008 = vsub.f32 %v1653, %v2007
        %v2009 = vand.u32 %v2008, 4294901760
        %v2010 = vsub.f32 %v2008, %v2009
        %v2011 = vand.u32 %v2010, 4294901760
        %2012 = vmatprep.mubr.f32.mxu0 %v2011
        %v2013 = vand.u32 %v1652, 4294901760
        %v2014 = vsub.f32 %v1652, %v2013
        %v2015 = vand.u32 %v2014, 4294901760
        %v2016 = vsub.f32 %v2014, %v2015
        %v2017 = vand.u32 %v2016, 4294901760
        %2018 = vmatmul.mubr.f32.gmra.mrb[0].mxu0 %v2017
        %v2019 = vpop.f32.mrb[0].mxu0
        %v2020 = vadd.f32 0.0, %v2019
        %v2021 = vpop.f32.mrb[0].mxu0
        %2022 = vdwg.mxu0
        %2023 = vmatprep.subr.mxu0 0.0
        %v2024 = vand.u32 %v1654, 4294901760
        %v2025 = vsub.f32 %v1654, %v2024
        %v2026 = vand.u32 %v2025, 4294901760
        %v2027 = vsub.f32 %v2025, %v2026
        %v2028 = vand.u32 %v2027, 4294901760
        %2029 = vmatpush1.msra.mxu0 %v2028
        %2030 = vmatprep.subr.mxu0 0.0
        %v2031 = vand.u32 %v1655, 4294901760
        %v2032 = vsub.f32 %v1655, %v2031
        %v2033 = vand.u32 %v2032, 4294901760
        %v2034 = vsub.f32 %v2032, %v2033
        %v2035 = vand.u32 %v2034, 4294901760
        %2036 = vmatpush1.msra.mxu0 %v2035
        %2037 = vmatprep.subr.mxu0 0.0
        %v2038 = vand.u32 %v1656, 4294901760
        %v2039 = vsub.f32 %v1656, %v2038
        %v2040 = vand.u32 %v2039, 4294901760
        %v2041 = vsub.f32 %v2039, %v2040
        %v2042 = vand.u32 %v2041, 4294901760
        %2043 = vmatpush1.msra.mxu0 %v2042
        %2044 = vmatprep.subr.mxu0 0.0
        %v2045 = vand.u32 %v1657, 4294901760
        %v2046 = vsub.f32 %v1657, %v2045
        %v2047 = vand.u32 %v2046, 4294901760
        %v2048 = vsub.f32 %v2046, %v2047
        %v2049 = vand.u32 %v2048, 4294901760
        %2050 = vmatpush1.msra.mxu0 %v2049
        %2051 = vmatprep.subr.mxu0 0.0
        %v2052 = vand.u32 %v1658, 4294901760
        %v2053 = vsub.f32 %v1658, %v2052
        %v2054 = vand.u32 %v2053, 4294901760
        %v2055 = vsub.f32 %v2053, %v2054
        %v2056 = vand.u32 %v2055, 4294901760
        %2057 = vmatpush1.msra.mxu0 %v2056
        %2058 = vmatprep.subr.mxu0 0.0
        %v2059 = vand.u32 %v1659, 4294901760
        %v2060 = vsub.f32 %v1659, %v2059
        %v2061 = vand.u32 %v2060, 4294901760
        %v2062 = vsub.f32 %v2060, %v2061
        %v2063 = vand.u32 %v2062, 4294901760
        %2064 = vmatpush1.msra.mxu0 %v2063
        %2065 = vmatprep.subr.mxu0 0.0
        %v2066 = vand.u32 %v1660, 4294901760
        %v2067 = vsub.f32 %v1660, %v2066
        %v2068 = vand.u32 %v2067, 4294901760
        %v2069 = vsub.f32 %v2067, %v2068
        %v2070 = vand.u32 %v2069, 4294901760
        %2071 = vmatpush1.msra.mxu0 %v2070
        %2072 = vmatprep.subr.mxu0 0.0
        %v2073 = vand.u32 %v1661, 4294901760
        %v2074 = vsub.f32 %v1661, %v2073
        %v2075 = vand.u32 %v2074, 4294901760
        %v2076 = vsub.f32 %v2074, %v2075
        %v2077 = vand.u32 %v2076, 4294901760
        %2078 = vmatpush1.msra.mxu0 %v2077
        %2079 = vmatprep.subr.mxu0 0.0
        %v2080 = vand.u32 %v1662, 4294901760
        %v2081 = vsub.f32 %v1662, %v2080
        %v2082 = vand.u32 %v2081, 4294901760
        %v2083 = vsub.f32 %v2081, %v2082
        %v2084 = vand.u32 %v2083, 4294901760
        %2085 = vmatpush1.msra.mxu0 %v2084
        %2086 = vmatprep.subr.mxu0 0.0
        %v2087 = vand.u32 %v1663, 4294901760
        %v2088 = vsub.f32 %v1663, %v2087
        %v2089 = vand.u32 %v2088, 4294901760
        %v2090 = vsub.f32 %v2088, %v2089
        %v2091 = vand.u32 %v2090, 4294901760
        %2092 = vmatpush1.msra.mxu0 %v2091
        %2093 = vmatprep.subr.mxu0 0.0
        %v2094 = vand.u32 %v1664, 4294901760
        %v2095 = vsub.f32 %v1664, %v2094
        %v2096 = vand.u32 %v2095, 4294901760
        %v2097 = vsub.f32 %v2095, %v2096
        %v2098 = vand.u32 %v2097, 4294901760
        %2099 = vmatpush1.msra.mxu0 %v2098
        %2100 = vmatprep.subr.mxu0 0.0
        %v2101 = vand.u32 %v1665, 4294901760
        %v2102 = vsub.f32 %v1665, %v2101
        %v2103 = vand.u32 %v2102, 4294901760
        %v2104 = vsub.f32 %v2102, %v2103
        %v2105 = vand.u32 %v2104, 4294901760
        %2106 = vmatpush1.msra.mxu0 %v2105
        %2107 = vmatprep.subr.mxu0 0.0
        %v2108 = vand.u32 %v1666, 4294901760
        %v2109 = vsub.f32 %v1666, %v2108
        %v2110 = vand.u32 %v2109, 4294901760
        %v2111 = vsub.f32 %v2109, %v2110
        %v2112 = vand.u32 %v2111, 4294901760
        %2113 = vmatpush1.msra.mxu0 %v2112
        %2114 = vmatprep.subr.mxu0 0.0
        %v2115 = vand.u32 %v1667, 4294901760
        %v2116 = vsub.f32 %v1667, %v2115
        %v2117 = vand.u32 %v2116, 4294901760
        %v2118 = vsub.f32 %v2116, %v2117
        %v2119 = vand.u32 %v2118, 4294901760
        %2120 = vmatpush1.msra.mxu0 %v2119
        %2121 = vmatprep.subr.mxu0 0.0
        %v2122 = vand.u32 %v1668, 4294901760
        %v2123 = vsub.f32 %v1668, %v2122
        %v2124 = vand.u32 %v2123, 4294901760
        %v2125 = vsub.f32 %v2123, %v2124
        %v2126 = vand.u32 %v2125, 4294901760
        %2127 = vmatpush1.msra.mxu0 %v2126
        %2128 = vmatprep.subr.mxu0 0.0
        %v2129 = vand.u32 %v1669, 4294901760
        %v2130 = vsub.f32 %v1669, %v2129
        %v2131 = vand.u32 %v2130, 4294901760
        %v2132 = vsub.f32 %v2130, %v2131
        %v2133 = vand.u32 %v2132, 4294901760
        %2134 = vmatpush1.msra.mxu0 %v2133
        %2135 = vmatprep.subr.mxu0 0.0
        %v2136 = vand.u32 %v1670, 4294901760
        %v2137 = vsub.f32 %v1670, %v2136
        %v2138 = vand.u32 %v2137, 4294901760
        %v2139 = vsub.f32 %v2137, %v2138
        %v2140 = vand.u32 %v2139, 4294901760
        %2141 = vmatpush1.msra.mxu0 %v2140
        %2142 = vmatprep.subr.mxu0 0.0
        %v2143 = vand.u32 %v1671, 4294901760
        %v2144 = vsub.f32 %v1671, %v2143
        %v2145 = vand.u32 %v2144, 4294901760
        %v2146 = vsub.f32 %v2144, %v2145
        %v2147 = vand.u32 %v2146, 4294901760
        %2148 = vmatpush1.msra.mxu0 %v2147
        %2149 = vmatprep.subr.mxu0 0.0
        %v2150 = vand.u32 %v1672, 4294901760
        %v2151 = vsub.f32 %v1672, %v2150
        %v2152 = vand.u32 %v2151, 4294901760
        %v2153 = vsub.f32 %v2151, %v2152
        %v2154 = vand.u32 %v2153, 4294901760
        %2155 = vmatpush1.msra.mxu0 %v2154
        %2156 = vmatprep.subr.mxu0 0.0
        %v2157 = vand.u32 %v1673, 4294901760
        %v2158 = vsub.f32 %v1673, %v2157
        %v2159 = vand.u32 %v2158, 4294901760
        %v2160 = vsub.f32 %v2158, %v2159
        %v2161 = vand.u32 %v2160, 4294901760
        %2162 = vmatpush1.msra.mxu0 %v2161
        %2163 = vmatprep.subr.mxu0 0.0
        %v2164 = vand.u32 %v1674, 4294901760
        %v2165 = vsub.f32 %v1674, %v2164
        %v2166 = vand.u32 %v2165, 4294901760
        %v2167 = vsub.f32 %v2165, %v2166
        %v2168 = vand.u32 %v2167, 4294901760
        %2169 = vmatpush1.msra.mxu0 %v2168
        %2170 = vmatprep.subr.mxu0 0.0
        %v2171 = vand.u32 %v1675, 4294901760
        %v2172 = vsub.f32 %v1675, %v2171
        %v2173 = vand.u32 %v2172, 4294901760
        %v2174 = vsub.f32 %v2172, %v2173
        %v2175 = vand.u32 %v2174, 4294901760
        %2176 = vmatpush1.msra.mxu0 %v2175
        %2177 = vmatprep.subr.mxu0 0.0
        %v2178 = vand.u32 %v1676, 4294901760
        %v2179 = vsub.f32 %v1676, %v2178
        %v2180 = vand.u32 %v2179, 4294901760
        %v2181 = vsub.f32 %v2179, %v2180
        %v2182 = vand.u32 %v2181, 4294901760
        %2183 = vmatpush1.msra.mxu0 %v2182
        %2184 = vmatprep.subr.mxu0 0.0
        %v2185 = vand.u32 %v1677, 4294901760
        %v2186 = vsub.f32 %v1677, %v2185
        %v2187 = vand.u32 %v2186, 4294901760
        %v2188 = vsub.f32 %v2186, %v2187
        %v2189 = vand.u32 %v2188, 4294901760
        %2190 = vmatpush1.msra.mxu0 %v2189
        %2191 = vmatprep.subr.mxu0 0.0
        %v2192 = vand.u32 %v1678, 4294901760
        %v2193 = vsub.f32 %v1678, %v2192
        %v2194 = vand.u32 %v2193, 4294901760
        %v2195 = vsub.f32 %v2193, %v2194
        %v2196 = vand.u32 %v2195, 4294901760
        %2197 = vmatpush1.msra.mxu0 %v2196
        %2198 = vmatprep.subr.mxu0 0.0
        %v2199 = vand.u32 %v1679, 4294901760
        %v2200 = vsub.f32 %v1679, %v2199
        %v2201 = vand.u32 %v2200, 4294901760
        %v2202 = vsub.f32 %v2200, %v2201
        %v2203 = vand.u32 %v2202, 4294901760
        %2204 = vmatpush1.msra.mxu0 %v2203
        %2205 = vmatprep.subr.mxu0 0.0
        %v2206 = vand.u32 %v1680, 4294901760
        %v2207 = vsub.f32 %v1680, %v2206
        %v2208 = vand.u32 %v2207, 4294901760
        %v2209 = vsub.f32 %v2207, %v2208
        %v2210 = vand.u32 %v2209, 4294901760
        %2211 = vmatpush1.msra.mxu0 %v2210
        %2212 = vmatprep.subr.mxu0 0.0
        %v2213 = vand.u32 %v1681, 4294901760
        %v2214 = vsub.f32 %v1681, %v2213
        %v2215 = vand.u32 %v2214, 4294901760
        %v2216 = vsub.f32 %v2214, %v2215
        %v2217 = vand.u32 %v2216, 4294901760
        %2218 = vmatpush1.msra.mxu0 %v2217
        %2219 = vmatprep.subr.mxu0 0.0
        %v2220 = vand.u32 %v1682, 4294901760
        %v2221 = vsub.f32 %v1682, %v2220
        %v2222 = vand.u32 %v2221, 4294901760
        %v2223 = vsub.f32 %v2221, %v2222
        %v2224 = vand.u32 %v2223, 4294901760
        %2225 = vmatpush1.msra.mxu0 %v2224
        %2226 = vmatprep.subr.mxu0 0.0
        %v2227 = vand.u32 %v1683, 4294901760
        %v2228 = vsub.f32 %v1683, %v2227
        %v2229 = vand.u32 %v2228, 4294901760
        %v2230 = vsub.f32 %v2228, %v2229
        %v2231 = vand.u32 %v2230, 4294901760
        %2232 = vmatpush1.msra.mxu0 %v2231
        %2233 = vmatprep.subr.mxu0 0.0
        %v2234 = vand.u32 %v1684, 4294901760
        %v2235 = vsub.f32 %v1684, %v2234
        %v2236 = vand.u32 %v2235, 4294901760
        %v2237 = vsub.f32 %v2235, %v2236
        %v2238 = vand.u32 %v2237, 4294901760
        %2239 = vmatpush1.msra.mxu0 %v2238
        %2240 = vmatprep.subr.mxu0 0.0
        %v2241 = vand.u32 %v1685, 4294901760
        %v2242 = vsub.f32 %v1685, %v2241
        %v2243 = vand.u32 %v2242, 4294901760
        %v2244 = vsub.f32 %v2242, %v2243
        %v2245 = vand.u32 %v2244, 4294901760
        %2246 = vmatpush1.msra.mxu0 %v2245
        %v2247 = vand.u32 %v1623, 4294901760
        %2248 = vmatprep.mubr.f32.mxu0 %v2247
        %v2249 = vand.u32 %v1622, 4294901760
        %2250 = vmatmul.mubr.f32.gmra.mrb[0].mxu0 %v2249
        %v2251 = vpop.f32.mrb[0].mxu0
        %v2252 = vadd.f32 %v1795, %v2251
        %v2253 = vpop.f32.mrb[0].mxu0
        %v2254 = vand.u32 %v1625, 4294901760
        %2255 = vmatprep.mubr.f32.mxu0 %v2254
        %v2256 = vand.u32 %v1624, 4294901760
        %2257 = vmatmul.mubr.f32.gmra.mrb[0].mxu0 %v2256
        %v2258 = vpop.f32.mrb[0].mxu0
        %v2259 = vadd.f32 %v1810, %v2258
        %v2260 = vpop.f32.mrb[0].mxu0
        %v2261 = vand.u32 %v1627, 4294901760
        %2262 = vmatprep.mubr.f32.mxu0 %v2261
        %v2263 = vand.u32 %v1626, 4294901760
        %2264 = vmatmul.mubr.f32.gmra.mrb[0].mxu0 %v2263
        %v2265 = vpop.f32.mrb[0].mxu0
        %v2266 = vadd.f32 %v1825, %v2265
        %v2267 = vpop.f32.mrb[0].mxu0
        %v2268 = vand.u32 %v1629, 4294901760
        %2269 = vmatprep.mubr.f32.mxu0 %v2268
        %v2270 = vand.u32 %v1628, 4294901760
        %2271 = vmatmul.mubr.f32.gmra.mrb[0].mxu0 %v2270
        %v2272 = vpop.f32.mrb[0].mxu0
        %v2273 = vadd.f32 %v1840, %v2272
        %v2274 = vpop.f32.mrb[0].mxu0
        %v2275 = vand.u32 %v1631, 4294901760
        %2276 = vmatprep.mubr.f32.mxu0 %v2275
        %v2277 = vand.u32 %v1630, 4294901760
        %2278 = vmatmul.mubr.f32.gmra.mrb[0].mxu0 %v2277
        %v2279 = vpop.f32.mrb[0].mxu0
        %v2280 = vadd.f32 %v1855, %v2279
        %v2281 = vpop.f32.mrb[0].mxu0
        %v2282 = vand.u32 %v1633, 4294901760
        %2283 = vmatprep.mubr.f32.mxu0 %v2282
        %v2284 = vand.u32 %v1632, 4294901760
        %2285 = vmatmul.mubr.f32.gmra.mrb[0].mxu0 %v2284
        %v2286 = vpop.f32.mrb[0].mxu0
        %v2287 = vadd.f32 %v1870, %v2286
        %v2288 = vpop.f32.mrb[0].mxu0
        %v2289 = vand.u32 %v1635, 4294901760
        %2290 = vmatprep.mubr.f32.mxu0 %v2289
        %v2291 = vand.u32 %v1634, 4294901760
        %2292 = vmatmul.mubr.f32.gmra.mrb[0].mxu0 %v2291
        %v2293 = vpop.f32.mrb[0].mxu0
        %v2294 = vadd.f32 %v1885, %v2293
        %v2295 = vpop.f32.mrb[0].mxu0
        %v2296 = vand.u32 %v1637, 4294901760
        %2297 = vmatprep.mubr.f32.mxu0 %v2296
        %v2298 = vand.u32 %v1636, 4294901760
        %2299 = vmatmul.mubr.f32.gmra.mrb[0].mxu0 %v2298
        %v2300 = vpop.f32.mrb[0].mxu0
        %v2301 = vadd.f32 %v1900, %v2300
        %v2302 = vpop.f32.mrb[0].mxu0
        %v2303 = vand.u32 %v1639, 4294901760
        %2304 = vmatprep.mubr.f32.mxu0 %v2303
        %v2305 = vand.u32 %v1638, 4294901760
        %2306 = vmatmul.mubr.f32.gmra.mrb[0].mxu0 %v2305
        %v2307 = vpop.f32.mrb[0].mxu0
        %v2308 = vadd.f32 %v1915, %v2307
        %v2309 = vpop.f32.mrb[0].mxu0
        %v2310 = vand.u32 %v1641, 4294901760
        %2311 = vmatprep.mubr.f32.mxu0 %v2310
        %v2312 = vand.u32 %v1640, 4294901760
        %2313 = vmatmul.mubr.f32.gmra.mrb[0].mxu0 %v2312
        %v2314 = vpop.f32.mrb[0].mxu0
        %v2315 = vadd.f32 %v1930, %v2314
        %v2316 = vpop.f32.mrb[0].mxu0
        %v2317 = vand.u32 %v1643, 4294901760
        %2318 = vmatprep.mubr.f32.mxu0 %v2317
        %v2319 = vand.u32 %v1642, 4294901760
        %2320 = vmatmul.mubr.f32.gmra.mrb[0].mxu0 %v2319
        %v2321 = vpop.f32.mrb[0].mxu0
        %v2322 = vadd.f32 %v1945, %v2321
        %v2323 = vpop.f32.mrb[0].mxu0
        %v2324 = vand.u32 %v1645, 4294901760
        %2325 = vmatprep.mubr.f32.mxu0 %v2324
        %v2326 = vand.u32 %v1644, 4294901760
        %2327 = vmatmul.mubr.f32.gmra.mrb[0].mxu0 %v2326
        %v2328 = vpop.f32.mrb[0].mxu0
        %v2329 = vadd.f32 %v1960, %v2328
        %v2330 = vpop.f32.mrb[0].mxu0
        %v2331 = vand.u32 %v1647, 4294901760
        %2332 = vmatprep.mubr.f32.mxu0 %v2331
        %v2333 = vand.u32 %v1646, 4294901760
        %2334 = vmatmul.mubr.f32.gmra.mrb[0].mxu0 %v2333
        %v2335 = vpop.f32.mrb[0].mxu0
        %v2336 = vadd.f32 %v1975, %v2335
        %v2337 = vpop.f32.mrb[0].mxu0
        %v2338 = vand.u32 %v1649, 4294901760
        %2339 = vmatprep.mubr.f32.mxu0 %v2338
        %v2340 = vand.u32 %v1648, 4294901760
        %2341 = vmatmul.mubr.f32.gmra.mrb[0].mxu0 %v2340
        %v2342 = vpop.f32.mrb[0].mxu0
        %v2343 = vadd.f32 %v1990, %v2342
        %v2344 = vpop.f32.mrb[0].mxu0
        %v2345 = vand.u32 %v1651, 4294901760
        %2346 = vmatprep.mubr.f32.mxu0 %v2345
        %v2347 = vand.u32 %v1650, 4294901760
        %2348 = vmatmul.mubr.f32.gmra.mrb[0].mxu0 %v2347
        %v2349 = vpop.f32.mrb[0].mxu0
        %v2350 = vadd.f32 %v2005, %v2349
        %v2351 = vpop.f32.mrb[0].mxu0
        %v2352 = vand.u32 %v1653, 4294901760
        %2353 = vmatprep.mubr.f32.mxu0 %v2352
        %v2354 = vand.u32 %v1652, 4294901760
        %2355 = vmatmul.mubr.f32.gmra.mrb[0].mxu0 %v2354
        %v2356 = vpop.f32.mrb[0].mxu0
        %v2357 = vadd.f32 %v2020, %v2356
        %v2358 = vpop.f32.mrb[0].mxu0
        %2359 = vdwg.mxu0
        %2360 = vmatprep.subr.mxu0 0.0
        %v2361 = vand.u32 %v1654, 4294901760
        %v2362 = vsub.f32 %v1654, %v2361
        %2363 = vmatpush1.msra.mxu0 %v2362
        %2364 = vmatprep.subr.mxu0 0.0
        %v2365 = vand.u32 %v1655, 4294901760
        %v2366 = vsub.f32 %v1655, %v2365
        %2367 = vmatpush1.msra.mxu0 %v2366
        %2368 = vmatprep.subr.mxu0 0.0
        %v2369 = vand.u32 %v1656, 4294901760
        %v2370 = vsub.f32 %v1656, %v2369
        %2371 = vmatpush1.msra.mxu0 %v2370
        %2372 = vmatprep.subr.mxu0 0.0
        %v2373 = vand.u32 %v1657, 4294901760
        %v2374 = vsub.f32 %v1657, %v2373
        %2375 = vmatpush1.msra.mxu0 %v2374
        %2376 = vmatprep.subr.mxu0 0.0
        %v2377 = vand.u32 %v1658, 4294901760
        %v2378 = vsub.f32 %v1658, %v2377
        %2379 = vmatpush1.msra.mxu0 %v2378
        %2380 = vmatprep.subr.mxu0 0.0
        %v2381 = vand.u32 %v1659, 4294901760
        %v2382 = vsub.f32 %v1659, %v2381
        %2383 = vmatpush1.msra.mxu0 %v2382
        %2384 = vmatprep.subr.mxu0 0.0
        %v2385 = vand.u32 %v1660, 4294901760
        %v2386 = vsub.f32 %v1660, %v2385
        %2387 = vmatpush1.msra.mxu0 %v2386
        %2388 = vmatprep.subr.mxu0 0.0
        %v2389 = vand.u32 %v1661, 4294901760
        %v2390 = vsub.f32 %v1661, %v2389
        %2391 = vmatpush1.msra.mxu0 %v2390
        %2392 = vmatprep.subr.mxu0 0.0
        %v2393 = vand.u32 %v1662, 4294901760
        %v2394 = vsub.f32 %v1662, %v2393
        %2395 = vmatpush1.msra.mxu0 %v2394
        %2396 = vmatprep.subr.mxu0 0.0
        %v2397 = vand.u32 %v1663, 4294901760
        %v2398 = vsub.f32 %v1663, %v2397
        %2399 = vmatpush1.msra.mxu0 %v2398
        %2400 = vmatprep.subr.mxu0 0.0
        %v2401 = vand.u32 %v1664, 4294901760
        %v2402 = vsub.f32 %v1664, %v2401
        %2403 = vmatpush1.msra.mxu0 %v2402
        %2404 = vmatprep.subr.mxu0 0.0
        %v2405 = vand.u32 %v1665, 4294901760
        %v2406 = vsub.f32 %v1665, %v2405
        %2407 = vmatpush1.msra.mxu0 %v2406
        %2408 = vmatprep.subr.mxu0 0.0
        %v2409 = vand.u32 %v1666, 4294901760
        %v2410 = vsub.f32 %v1666, %v2409
        %2411 = vmatpush1.msra.mxu0 %v2410
        %2412 = vmatprep.subr.mxu0 0.0
        %v2413 = vand.u32 %v1667, 4294901760
        %v2414 = vsub.f32 %v1667, %v2413
        %2415 = vmatpush1.msra.mxu0 %v2414
        %2416 = vmatprep.subr.mxu0 0.0
        %v2417 = vand.u32 %v1668, 4294901760
        %v2418 = vsub.f32 %v1668, %v2417
        %2419 = vmatpush1.msra.mxu0 %v2418
        %2420 = vmatprep.subr.mxu0 0.0
        %v2421 = vand.u32 %v1669, 4294901760
        %v2422 = vsub.f32 %v1669, %v2421
        %2423 = vmatpush1.msra.mxu0 %v2422
        %2424 = vmatprep.subr.mxu0 0.0
        %v2425 = vand.u32 %v1670, 4294901760
        %v2426 = vsub.f32 %v1670, %v2425
        %2427 = vmatpush1.msra.mxu0 %v2426
        %2428 = vmatprep.subr.mxu0 0.0
        %v2429 = vand.u32 %v1671, 4294901760
        %v2430 = vsub.f32 %v1671, %v2429
        %2431 = vmatpush1.msra.mxu0 %v2430
        %2432 = vmatprep.subr.mxu0 0.0
        %v2433 = vand.u32 %v1672, 4294901760
        %v2434 = vsub.f32 %v1672, %v2433
        %2435 = vmatpush1.msra.mxu0 %v2434
        %2436 = vmatprep.subr.mxu0 0.0
        %v2437 = vand.u32 %v1673, 4294901760
        %v2438 = vsub.f32 %v1673, %v2437
        %2439 = vmatpush1.msra.mxu0 %v2438
        %2440 = vmatprep.subr.mxu0 0.0
        %v2441 = vand.u32 %v1674, 4294901760
        %v2442 = vsub.f32 %v1674, %v2441
        %2443 = vmatpush1.msra.mxu0 %v2442
        %2444 = vmatprep.subr.mxu0 0.0
        %v2445 = vand.u32 %v1675, 4294901760
        %v2446 = vsub.f32 %v1675, %v2445
        %2447 = vmatpush1.msra.mxu0 %v2446
        %2448 = vmatprep.subr.mxu0 0.0
        %v2449 = vand.u32 %v1676, 4294901760
        %v2450 = vsub.f32 %v1676, %v2449
        %2451 = vmatpush1.msra.mxu0 %v2450
        %2452 = vmatprep.subr.mxu0 0.0
        %v2453 = vand.u32 %v1677, 4294901760
        %v2454 = vsub.f32 %v1677, %v2453
        %2455 = vmatpush1.msra.mxu0 %v2454
        %2456 = vmatprep.subr.mxu0 0.0
        %v2457 = vand.u32 %v1678, 4294901760
        %v2458 = vsub.f32 %v1678, %v2457
        %2459 = vmatpush1.msra.mxu0 %v2458
        %2460 = vmatprep.subr.mxu0 0.0
        %v2461 = vand.u32 %v1679, 4294901760
        %v2462 = vsub.f32 %v1679, %v2461
        %2463 = vmatpush1.msra.mxu0 %v2462
        %2464 = vmatprep.subr.mxu0 0.0
        %v2465 = vand.u32 %v1680, 4294901760
        %v2466 = vsub.f32 %v1680, %v2465
        %2467 = vmatpush1.msra.mxu0 %v2466
        %2468 = vmatprep.subr.mxu0 0.0
        %v2469 = vand.u32 %v1681, 4294901760
        %v2470 = vsub.f32 %v1681, %v2469
        %2471 = vmatpush1.msra.mxu0 %v2470
        %2472 = vmatprep.subr.mxu0 0.0
        %v2473 = vand.u32 %v1682, 4294901760
        %v2474 = vsub.f32 %v1682, %v2473
        %2475 = vmatpush1.msra.mxu0 %v2474
        %2476 = vmatprep.subr.mxu0 0.0
        %v2477 = vand.u32 %v1683, 4294901760
        %v2478 = vsub.f32 %v1683, %v2477
        %2479 = vmatpush1.msra.mxu0 %v2478
        %2480 = vmatprep.subr.mxu0 0.0
        %v2481 = vand.u32 %v1684, 4294901760
        %v2482 = vsub.f32 %v1684, %v2481
        %2483 = vmatpush1.msra.mxu0 %v2482
        %2484 = vmatprep.subr.mxu0 0.0
        %v2485 = vand.u32 %v1685, 4294901760
        %v2486 = vsub.f32 %v1685, %v2485
        %2487 = vmatpush1.msra.mxu0 %v2486
        %v2488 = vand.u32 %v1623, 4294901760
        %v2489 = vsub.f32 %v1623, %v2488
        %2490 = vmatprep.mubr.f32.mxu0 %v2489
        %v2491 = vand.u32 %v1622, 4294901760
        %v2492 = vsub.f32 %v1622, %v2491
        %2493 = vmatmul.mubr.f32.gmra.mrb[0].mxu0 %v2492
        %v2494 = vpop.f32.mrb[0].mxu0
        %v2495 = vadd.f32 %v2252, %v2494
        %v2496 = vpop.f32.mrb[0].mxu0
        %v2497 = vand.u32 %v1625, 4294901760
        %v2498 = vsub.f32 %v1625, %v2497
        %2499 = vmatprep.mubr.f32.mxu0 %v2498
        %v2500 = vand.u32 %v1624, 4294901760
        %v2501 = vsub.f32 %v1624, %v2500
        %2502 = vmatmul.mubr.f32.gmra.mrb[0].mxu0 %v2501
        %v2503 = vpop.f32.mrb[0].mxu0
        %v2504 = vadd.f32 %v2259, %v2503
        %v2505 = vpop.f32.mrb[0].mxu0
        %v2506 = vand.u32 %v1627, 4294901760
        %v2507 = vsub.f32 %v1627, %v2506
        %2508 = vmatprep.mubr.f32.mxu0 %v2507
        %v2509 = vand.u32 %v1626, 4294901760
        %v2510 = vsub.f32 %v1626, %v2509
        %2511 = vmatmul.mubr.f32.gmra.mrb[0].mxu0 %v2510
        %v2512 = vpop.f32.mrb[0].mxu0
        %v2513 = vadd.f32 %v2266, %v2512
        %v2514 = vpop.f32.mrb[0].mxu0
        %v2515 = vand.u32 %v1629, 4294901760
        %v2516 = vsub.f32 %v1629, %v2515
        %2517 = vmatprep.mubr.f32.mxu0 %v2516
        %v2518 = vand.u32 %v1628, 4294901760
        %v2519 = vsub.f32 %v1628, %v2518
        %2520 = vmatmul.mubr.f32.gmra.mrb[0].mxu0 %v2519
        %v2521 = vpop.f32.mrb[0].mxu0
        %v2522 = vadd.f32 %v2273, %v2521
        %v2523 = vpop.f32.mrb[0].mxu0
        %v2524 = vand.u32 %v1631, 4294901760
        %v2525 = vsub.f32 %v1631, %v2524
        %2526 = vmatprep.mubr.f32.mxu0 %v2525
        %v2527 = vand.u32 %v1630, 4294901760
        %v2528 = vsub.f32 %v1630, %v2527
        %2529 = vmatmul.mubr.f32.gmra.mrb[0].mxu0 %v2528
        %v2530 = vpop.f32.mrb[0].mxu0
        %v2531 = vadd.f32 %v2280, %v2530
        %v2532 = vpop.f32.mrb[0].mxu0
        %v2533 = vand.u32 %v1633, 4294901760
        %v2534 = vsub.f32 %v1633, %v2533
        %2535 = vmatprep.mubr.f32.mxu0 %v2534
        %v2536 = vand.u32 %v1632, 4294901760
        %v2537 = vsub.f32 %v1632, %v2536
        %2538 = vmatmul.mubr.f32.gmra.mrb[0].mxu0 %v2537
        %v2539 = vpop.f32.mrb[0].mxu0
        %v2540 = vadd.f32 %v2287, %v2539
        %v2541 = vpop.f32.mrb[0].mxu0
        %v2542 = vand.u32 %v1635, 4294901760
        %v2543 = vsub.f32 %v1635, %v2542
        %2544 = vmatprep.mubr.f32.mxu0 %v2543
        %v2545 = vand.u32 %v1634, 4294901760
        %v2546 = vsub.f32 %v1634, %v2545
        %2547 = vmatmul.mubr.f32.gmra.mrb[0].mxu0 %v2546
        %v2548 = vpop.f32.mrb[0].mxu0
        %v2549 = vadd.f32 %v2294, %v2548
        %v2550 = vpop.f32.mrb[0].mxu0
        %v2551 = vand.u32 %v1637, 4294901760
        %v2552 = vsub.f32 %v1637, %v2551
        %2553 = vmatprep.mubr.f32.mxu0 %v2552
        %v2554 = vand.u32 %v1636, 4294901760
        %v2555 = vsub.f32 %v1636, %v2554
        %2556 = vmatmul.mubr.f32.gmra.mrb[0].mxu0 %v2555
        %v2557 = vpop.f32.mrb[0].mxu0
        %v2558 = vadd.f32 %v2301, %v2557
        %v2559 = vpop.f32.mrb[0].mxu0
        %v2560 = vand.u32 %v1639, 4294901760
        %v2561 = vsub.f32 %v1639, %v2560
        %2562 = vmatprep.mubr.f32.mxu0 %v2561
        %v2563 = vand.u32 %v1638, 4294901760
        %v2564 = vsub.f32 %v1638, %v2563
        %2565 = vmatmul.mubr.f32.gmra.mrb[0].mxu0 %v2564
        %v2566 = vpop.f32.mrb[0].mxu0
        %v2567 = vadd.f32 %v2308, %v2566
        %v2568 = vpop.f32.mrb[0].mxu0
        %v2569 = vand.u32 %v1641, 4294901760
        %v2570 = vsub.f32 %v1641, %v2569
        %2571 = vmatprep.mubr.f32.mxu0 %v2570
        %v2572 = vand.u32 %v1640, 4294901760
        %v2573 = vsub.f32 %v1640, %v2572
        %2574 = vmatmul.mubr.f32.gmra.mrb[0].mxu0 %v2573
        %v2575 = vpop.f32.mrb[0].mxu0
        %v2576 = vadd.f32 %v2315, %v2575
        %v2577 = vpop.f32.mrb[0].mxu0
        %v2578 = vand.u32 %v1643, 4294901760
        %v2579 = vsub.f32 %v1643, %v2578
        %2580 = vmatprep.mubr.f32.mxu0 %v2579
        %v2581 = vand.u32 %v1642, 4294901760
        %v2582 = vsub.f32 %v1642, %v2581
        %2583 = vmatmul.mubr.f32.gmra.mrb[0].mxu0 %v2582
        %v2584 = vpop.f32.mrb[0].mxu0
        %v2585 = vadd.f32 %v2322, %v2584
        %v2586 = vpop.f32.mrb[0].mxu0
        %v2587 = vand.u32 %v1645, 4294901760
        %v2588 = vsub.f32 %v1645, %v2587
        %2589 = vmatprep.mubr.f32.mxu0 %v2588
        %v2590 = vand.u32 %v1644, 4294901760
        %v2591 = vsub.f32 %v1644, %v2590
        %2592 = vmatmul.mubr.f32.gmra.mrb[0].mxu0 %v2591
        %v2593 = vpop.f32.mrb[0].mxu0
        %v2594 = vadd.f32 %v2329, %v2593
        %v2595 = vpop.f32.mrb[0].mxu0
        %v2596 = vand.u32 %v1647, 4294901760
        %v2597 = vsub.f32 %v1647, %v2596
        %2598 = vmatprep.mubr.f32.mxu0 %v2597
        %v2599 = vand.u32 %v1646, 4294901760
        %v2600 = vsub.f32 %v1646, %v2599
        %2601 = vmatmul.mubr.f32.gmra.mrb[0].mxu0 %v2600
        %v2602 = vpop.f32.mrb[0].mxu0
        %v2603 = vadd.f32 %v2336, %v2602
        %v2604 = vpop.f32.mrb[0].mxu0
        %v2605 = vand.u32 %v1649, 4294901760
        %v2606 = vsub.f32 %v1649, %v2605
        %2607 = vmatprep.mubr.f32.mxu0 %v2606
        %v2608 = vand.u32 %v1648, 4294901760
        %v2609 = vsub.f32 %v1648, %v2608
        %2610 = vmatmul.mubr.f32.gmra.mrb[0].mxu0 %v2609
        %v2611 = vpop.f32.mrb[0].mxu0
        %v2612 = vadd.f32 %v2343, %v2611
        %v2613 = vpop.f32.mrb[0].mxu0
        %v2614 = vand.u32 %v1651, 4294901760
        %v2615 = vsub.f32 %v1651, %v2614
        %2616 = vmatprep.mubr.f32.mxu0 %v2615
        %v2617 = vand.u32 %v1650, 4294901760
        %v2618 = vsub.f32 %v1650, %v2617
        %2619 = vmatmul.mubr.f32.gmra.mrb[0].mxu0 %v2618
        %v2620 = vpop.f32.mrb[0].mxu0
        %v2621 = vadd.f32 %v2350, %v2620
        %v2622 = vpop.f32.mrb[0].mxu0
        %v2623 = vand.u32 %v1653, 4294901760
        %v2624 = vsub.f32 %v1653, %v2623
        %2625 = vmatprep.mubr.f32.mxu0 %v2624
        %v2626 = vand.u32 %v1652, 4294901760
        %v2627 = vsub.f32 %v1652, %v2626
        %2628 = vmatmul.mubr.f32.gmra.mrb[0].mxu0 %v2627
        %v2629 = vpop.f32.mrb[0].mxu0
        %v2630 = vadd.f32 %v2357, %v2629
        %v2631 = vpop.f32.mrb[0].mxu0
        %2632 = vdwg.mxu0
        %2633 = vmatprep.subr.mxu0 0.0
        %v2634 = vand.u32 %v1654, 4294901760
        %2635 = vmatpush1.msra.mxu0 %v2634
        %2636 = vmatprep.subr.mxu0 0.0
        %v2637 = vand.u32 %v1655, 4294901760
        %2638 = vmatpush1.msra.mxu0 %v2637
        %2639 = vmatprep.subr.mxu0 0.0
        %v2640 = vand.u32 %v1656, 4294901760
        %2641 = vmatpush1.msra.mxu0 %v2640
        %2642 = vmatprep.subr.mxu0 0.0
        %v2643 = vand.u32 %v1657, 4294901760
        %2644 = vmatpush1.msra.mxu0 %v2643
        %2645 = vmatprep.subr.mxu0 0.0
        %v2646 = vand.u32 %v1658, 4294901760
        %2647 = vmatpush1.msra.mxu0 %v2646
        %2648 = vmatprep.subr.mxu0 0.0
        %v2649 = vand.u32 %v1659, 4294901760
        %2650 = vmatpush1.msra.mxu0 %v2649
        %2651 = vmatprep.subr.mxu0 0.0
        %v2652 = vand.u32 %v1660, 4294901760
        %2653 = vmatpush1.msra.mxu0 %v2652
        %2654 = vmatprep.subr.mxu0 0.0
        %v2655 = vand.u32 %v1661, 4294901760
        %2656 = vmatpush1.msra.mxu0 %v2655
        %2657 = vmatprep.subr.mxu0 0.0
        %v2658 = vand.u32 %v1662, 4294901760
        %2659 = vmatpush1.msra.mxu0 %v2658
        %2660 = vmatprep.subr.mxu0 0.0
        %v2661 = vand.u32 %v1663, 4294901760
        %2662 = vmatpush1.msra.mxu0 %v2661
        %2663 = vmatprep.subr.mxu0 0.0
        %v2664 = vand.u32 %v1664, 4294901760
        %2665 = vmatpush1.msra.mxu0 %v2664
        %2666 = vmatprep.subr.mxu0 0.0
        %v2667 = vand.u32 %v1665, 4294901760
        %2668 = vmatpush1.msra.mxu0 %v2667
        %2669 = vmatprep.subr.mxu0 0.0
        %v2670 = vand.u32 %v1666, 4294901760
        %2671 = vmatpush1.msra.mxu0 %v2670
        %2672 = vmatprep.subr.mxu0 0.0
        %v2673 = vand.u32 %v1667, 4294901760
        %2674 = vmatpush1.msra.mxu0 %v2673
        %2675 = vmatprep.subr.mxu0 0.0
        %v2676 = vand.u32 %v1668, 4294901760
        %2677 = vmatpush1.msra.mxu0 %v2676
        %2678 = vmatprep.subr.mxu0 0.0
        %v2679 = vand.u32 %v1669, 4294901760
        %2680 = vmatpush1.msra.mxu0 %v2679
        %2681 = vmatprep.subr.mxu0 0.0
        %v2682 = vand.u32 %v1670, 4294901760
        %2683 = vmatpush1.msra.mxu0 %v2682
        %2684 = vmatprep.subr.mxu0 0.0
        %v2685 = vand.u32 %v1671, 4294901760
        %2686 = vmatpush1.msra.mxu0 %v2685
        %2687 = vmatprep.subr.mxu0 0.0
        %v2688 = vand.u32 %v1672, 4294901760
        %2689 = vmatpush1.msra.mxu0 %v2688
        %2690 = vmatprep.subr.mxu0 0.0
        %v2691 = vand.u32 %v1673, 4294901760
        %2692 = vmatpush1.msra.mxu0 %v2691
        %2693 = vmatprep.subr.mxu0 0.0
        %v2694 = vand.u32 %v1674, 4294901760
        %2695 = vmatpush1.msra.mxu0 %v2694
        %2696 = vmatprep.subr.mxu0 0.0
        %v2697 = vand.u32 %v1675, 4294901760
        %2698 = vmatpush1.msra.mxu0 %v2697
        %2699 = vmatprep.subr.mxu0 0.0
        %v2700 = vand.u32 %v1676, 4294901760
        %2701 = vmatpush1.msra.mxu0 %v2700
        %2702 = vmatprep.subr.mxu0 0.0
        %v2703 = vand.u32 %v1677, 4294901760
        %2704 = vmatpush1.msra.mxu0 %v2703
        %2705 = vmatprep.subr.mxu0 0.0
        %v2706 = vand.u32 %v1678, 4294901760
        %2707 = vmatpush1.msra.mxu0 %v2706
        %2708 = vmatprep.subr.mxu0 0.0
        %v2709 = vand.u32 %v1679, 4294901760
        %2710 = vmatpush1.msra.mxu0 %v2709
        %2711 = vmatprep.subr.mxu0 0.0
        %v2712 = vand.u32 %v1680, 4294901760
        %2713 = vmatpush1.msra.mxu0 %v2712
        %2714 = vmatprep.subr.mxu0 0.0
        %v2715 = vand.u32 %v1681, 4294901760
        %2716 = vmatpush1.msra.mxu0 %v2715
        %2717 = vmatprep.subr.mxu0 0.0
        %v2718 = vand.u32 %v1682, 4294901760
        %2719 = vmatpush1.msra.mxu0 %v2718
        %2720 = vmatprep.subr.mxu0 0.0
        %v2721 = vand.u32 %v1683, 4294901760
        %2722 = vmatpush1.msra.mxu0 %v2721
        %2723 = vmatprep.subr.mxu0 0.0
        %v2724 = vand.u32 %v1684, 4294901760
        %2725 = vmatpush1.msra.mxu0 %v2724
        %2726 = vmatprep.subr.mxu0 0.0
        %v2727 = vand.u32 %v1685, 4294901760
        %2728 = vmatpush1.msra.mxu0 %v2727
        %v2729 = vand.u32 %v1623, 4294901760
        %v2730 = vsub.f32 %v1623, %v2729
        %v2731 = vand.u32 %v2730, 4294901760
        %2732 = vmatprep.mubr.f32.mxu0 %v2731
        %v2733 = vand.u32 %v1622, 4294901760
        %v2734 = vsub.f32 %v1622, %v2733
        %v2735 = vand.u32 %v2734, 4294901760
        %2736 = vmatmul.mubr.f32.gmra.mrb[0].mxu0 %v2735
        %v2737 = vpop.f32.mrb[0].mxu0
        %v2738 = vadd.f32 %v2495, %v2737
        %v2739 = vpop.f32.mrb[0].mxu0
        %v2740 = vand.u32 %v1625, 4294901760
        %v2741 = vsub.f32 %v1625, %v2740
        %v2742 = vand.u32 %v2741, 4294901760
        %2743 = vmatprep.mubr.f32.mxu0 %v2742
        %v2744 = vand.u32 %v1624, 4294901760
        %v2745 = vsub.f32 %v1624, %v2744
        %v2746 = vand.u32 %v2745, 4294901760
        %2747 = vmatmul.mubr.f32.gmra.mrb[0].mxu0 %v2746
        %v2748 = vpop.f32.mrb[0].mxu0
        %v2749 = vadd.f32 %v2504, %v2748
        %v2750 = vpop.f32.mrb[0].mxu0
        %v2751 = vand.u32 %v1627, 4294901760
        %v2752 = vsub.f32 %v1627, %v2751
        %v2753 = vand.u32 %v2752, 4294901760
        %2754 = vmatprep.mubr.f32.mxu0 %v2753
        %v2755 = vand.u32 %v1626, 4294901760
        %v2756 = vsub.f32 %v1626, %v2755
        %v2757 = vand.u32 %v2756, 4294901760
        %2758 = vmatmul.mubr.f32.gmra.mrb[0].mxu0 %v2757
        %v2759 = vpop.f32.mrb[0].mxu0
        %v2760 = vadd.f32 %v2513, %v2759
        %v2761 = vpop.f32.mrb[0].mxu0
        %v2762 = vand.u32 %v1629, 4294901760
        %v2763 = vsub.f32 %v1629, %v2762
        %v2764 = vand.u32 %v2763, 4294901760
        %2765 = vmatprep.mubr.f32.mxu0 %v2764
        %v2766 = vand.u32 %v1628, 4294901760
        %v2767 = vsub.f32 %v1628, %v2766
        %v2768 = vand.u32 %v2767, 4294901760
        %2769 = vmatmul.mubr.f32.gmra.mrb[0].mxu0 %v2768
        %v2770 = vpop.f32.mrb[0].mxu0
        %v2771 = vadd.f32 %v2522, %v2770
        %v2772 = vpop.f32.mrb[0].mxu0
        %v2773 = vand.u32 %v1631, 4294901760
        %v2774 = vsub.f32 %v1631, %v2773
        %v2775 = vand.u32 %v2774, 4294901760
        %2776 = vmatprep.mubr.f32.mxu0 %v2775
        %v2777 = vand.u32 %v1630, 4294901760
        %v2778 = vsub.f32 %v1630, %v2777
        %v2779 = vand.u32 %v2778, 4294901760
        %2780 = vmatmul.mubr.f32.gmra.mrb[0].mxu0 %v2779
        %v2781 = vpop.f32.mrb[0].mxu0
        %v2782 = vadd.f32 %v2531, %v2781
        %v2783 = vpop.f32.mrb[0].mxu0
        %v2784 = vand.u32 %v1633, 4294901760
        %v2785 = vsub.f32 %v1633, %v2784
        %v2786 = vand.u32 %v2785, 4294901760
        %2787 = vmatprep.mubr.f32.mxu0 %v2786
        %v2788 = vand.u32 %v1632, 4294901760
        %v2789 = vsub.f32 %v1632, %v2788
        %v2790 = vand.u32 %v2789, 4294901760
        %2791 = vmatmul.mubr.f32.gmra.mrb[0].mxu0 %v2790
        %v2792 = vpop.f32.mrb[0].mxu0
        %v2793 = vadd.f32 %v2540, %v2792
        %v2794 = vpop.f32.mrb[0].mxu0
        %v2795 = vand.u32 %v1635, 4294901760
        %v2796 = vsub.f32 %v1635, %v2795
        %v2797 = vand.u32 %v2796, 4294901760
        %2798 = vmatprep.mubr.f32.mxu0 %v2797
        %v2799 = vand.u32 %v1634, 4294901760
        %v2800 = vsub.f32 %v1634, %v2799
        %v2801 = vand.u32 %v2800, 4294901760
        %2802 = vmatmul.mubr.f32.gmra.mrb[0].mxu0 %v2801
        %v2803 = vpop.f32.mrb[0].mxu0
        %v2804 = vadd.f32 %v2549, %v2803
        %v2805 = vpop.f32.mrb[0].mxu0
        %v2806 = vand.u32 %v1637, 4294901760
        %v2807 = vsub.f32 %v1637, %v2806
        %v2808 = vand.u32 %v2807, 4294901760
        %2809 = vmatprep.mubr.f32.mxu0 %v2808
        %v2810 = vand.u32 %v1636, 4294901760
        %v2811 = vsub.f32 %v1636, %v2810
        %v2812 = vand.u32 %v2811, 4294901760
        %2813 = vmatmul.mubr.f32.gmra.mrb[0].mxu0 %v2812
        %v2814 = vpop.f32.mrb[0].mxu0
        %v2815 = vadd.f32 %v2558, %v2814
        %v2816 = vpop.f32.mrb[0].mxu0
        %v2817 = vand.u32 %v1639, 4294901760
        %v2818 = vsub.f32 %v1639, %v2817
        %v2819 = vand.u32 %v2818, 4294901760
        %2820 = vmatprep.mubr.f32.mxu0 %v2819
        %v2821 = vand.u32 %v1638, 4294901760
        %v2822 = vsub.f32 %v1638, %v2821
        %v2823 = vand.u32 %v2822, 4294901760
        %2824 = vmatmul.mubr.f32.gmra.mrb[0].mxu0 %v2823
        %v2825 = vpop.f32.mrb[0].mxu0
        %v2826 = vadd.f32 %v2567, %v2825
        %v2827 = vpop.f32.mrb[0].mxu0
        %v2828 = vand.u32 %v1641, 4294901760
        %v2829 = vsub.f32 %v1641, %v2828
        %v2830 = vand.u32 %v2829, 4294901760
        %2831 = vmatprep.mubr.f32.mxu0 %v2830
        %v2832 = vand.u32 %v1640, 4294901760
        %v2833 = vsub.f32 %v1640, %v2832
        %v2834 = vand.u32 %v2833, 4294901760
        %2835 = vmatmul.mubr.f32.gmra.mrb[0].mxu0 %v2834
        %v2836 = vpop.f32.mrb[0].mxu0
        %v2837 = vadd.f32 %v2576, %v2836
        %v2838 = vpop.f32.mrb[0].mxu0
        %v2839 = vand.u32 %v1643, 4294901760
        %v2840 = vsub.f32 %v1643, %v2839
        %v2841 = vand.u32 %v2840, 4294901760
        %2842 = vmatprep.mubr.f32.mxu0 %v2841
        %v2843 = vand.u32 %v1642, 4294901760
        %v2844 = vsub.f32 %v1642, %v2843
        %v2845 = vand.u32 %v2844, 4294901760
        %2846 = vmatmul.mubr.f32.gmra.mrb[0].mxu0 %v2845
        %v2847 = vpop.f32.mrb[0].mxu0
        %v2848 = vadd.f32 %v2585, %v2847
        %v2849 = vpop.f32.mrb[0].mxu0
        %v2850 = vand.u32 %v1645, 4294901760
        %v2851 = vsub.f32 %v1645, %v2850
        %v2852 = vand.u32 %v2851, 4294901760
        %2853 = vmatprep.mubr.f32.mxu0 %v2852
        %v2854 = vand.u32 %v1644, 4294901760
        %v2855 = vsub.f32 %v1644, %v2854
        %v2856 = vand.u32 %v2855, 4294901760
        %2857 = vmatmul.mubr.f32.gmra.mrb[0].mxu0 %v2856
        %v2858 = vpop.f32.mrb[0].mxu0
        %v2859 = vadd.f32 %v2594, %v2858
        %v2860 = vpop.f32.mrb[0].mxu0
        %v2861 = vand.u32 %v1647, 4294901760
        %v2862 = vsub.f32 %v1647, %v2861
        %v2863 = vand.u32 %v2862, 4294901760
        %2864 = vmatprep.mubr.f32.mxu0 %v2863
        %v2865 = vand.u32 %v1646, 4294901760
        %v2866 = vsub.f32 %v1646, %v2865
        %v2867 = vand.u32 %v2866, 4294901760
        %2868 = vmatmul.mubr.f32.gmra.mrb[0].mxu0 %v2867
        %v2869 = vpop.f32.mrb[0].mxu0
        %v2870 = vadd.f32 %v2603, %v2869
        %v2871 = vpop.f32.mrb[0].mxu0
        %v2872 = vand.u32 %v1649, 4294901760
        %v2873 = vsub.f32 %v1649, %v2872
        %v2874 = vand.u32 %v2873, 4294901760
        %2875 = vmatprep.mubr.f32.mxu0 %v2874
        %v2876 = vand.u32 %v1648, 4294901760
        %v2877 = vsub.f32 %v1648, %v2876
        %v2878 = vand.u32 %v2877, 4294901760
        %2879 = vmatmul.mubr.f32.gmra.mrb[0].mxu0 %v2878
        %v2880 = vpop.f32.mrb[0].mxu0
        %v2881 = vadd.f32 %v2612, %v2880
        %v2882 = vpop.f32.mrb[0].mxu0
        %v2883 = vand.u32 %v1651, 4294901760
        %v2884 = vsub.f32 %v1651, %v2883
        %v2885 = vand.u32 %v2884, 4294901760
        %2886 = vmatprep.mubr.f32.mxu0 %v2885
        %v2887 = vand.u32 %v1650, 4294901760
        %v2888 = vsub.f32 %v1650, %v2887
        %v2889 = vand.u32 %v2888, 4294901760
        %2890 = vmatmul.mubr.f32.gmra.mrb[0].mxu0 %v2889
        %v2891 = vpop.f32.mrb[0].mxu0
        %v2892 = vadd.f32 %v2621, %v2891
        %v2893 = vpop.f32.mrb[0].mxu0
        %v2894 = vand.u32 %v1653, 4294901760
        %v2895 = vsub.f32 %v1653, %v2894
        %v2896 = vand.u32 %v2895, 4294901760
        %2897 = vmatprep.mubr.f32.mxu0 %v2896
        %v2898 = vand.u32 %v1652, 4294901760
        %v2899 = vsub.f32 %v1652, %v2898
        %v2900 = vand.u32 %v2899, 4294901760
        %2901 = vmatmul.mubr.f32.gmra.mrb[0].mxu0 %v2900
        %v2902 = vpop.f32.mrb[0].mxu0
        %v2903 = vadd.f32 %v2630, %v2902
        %v2904 = vpop.f32.mrb[0].mxu0
        %2905 = vdwg.mxu0
        %2906 = vmatprep.subr.mxu0 0.0
        %v2907 = vand.u32 %v1654, 4294901760
        %v2908 = vsub.f32 %v1654, %v2907
        %v2909 = vand.u32 %v2908, 4294901760
        %2910 = vmatpush1.msra.mxu0 %v2909
        %2911 = vmatprep.subr.mxu0 0.0
        %v2912 = vand.u32 %v1655, 4294901760
        %v2913 = vsub.f32 %v1655, %v2912
        %v2914 = vand.u32 %v2913, 4294901760
        %2915 = vmatpush1.msra.mxu0 %v2914
        %2916 = vmatprep.subr.mxu0 0.0
        %v2917 = vand.u32 %v1656, 4294901760
        %v2918 = vsub.f32 %v1656, %v2917
        %v2919 = vand.u32 %v2918, 4294901760
        %2920 = vmatpush1.msra.mxu0 %v2919
        %2921 = vmatprep.subr.mxu0 0.0
        %v2922 = vand.u32 %v1657, 4294901760
        %v2923 = vsub.f32 %v1657, %v2922
        %v2924 = vand.u32 %v2923, 4294901760
        %2925 = vmatpush1.msra.mxu0 %v2924
        %2926 = vmatprep.subr.mxu0 0.0
        %v2927 = vand.u32 %v1658, 4294901760
        %v2928 = vsub.f32 %v1658, %v2927
        %v2929 = vand.u32 %v2928, 4294901760
        %2930 = vmatpush1.msra.mxu0 %v2929
        %2931 = vmatprep.subr.mxu0 0.0
        %v2932 = vand.u32 %v1659, 4294901760
        %v2933 = vsub.f32 %v1659, %v2932
        %v2934 = vand.u32 %v2933, 4294901760
        %2935 = vmatpush1.msra.mxu0 %v2934
        %2936 = vmatprep.subr.mxu0 0.0
        %v2937 = vand.u32 %v1660, 4294901760
        %v2938 = vsub.f32 %v1660, %v2937
        %v2939 = vand.u32 %v2938, 4294901760
        %2940 = vmatpush1.msra.mxu0 %v2939
        %2941 = vmatprep.subr.mxu0 0.0
        %v2942 = vand.u32 %v1661, 4294901760
        %v2943 = vsub.f32 %v1661, %v2942
        %v2944 = vand.u32 %v2943, 4294901760
        %2945 = vmatpush1.msra.mxu0 %v2944
        %2946 = vmatprep.subr.mxu0 0.0
        %v2947 = vand.u32 %v1662, 4294901760
        %v2948 = vsub.f32 %v1662, %v2947
        %v2949 = vand.u32 %v2948, 4294901760
        %2950 = vmatpush1.msra.mxu0 %v2949
        %2951 = vmatprep.subr.mxu0 0.0
        %v2952 = vand.u32 %v1663, 4294901760
        %v2953 = vsub.f32 %v1663, %v2952
        %v2954 = vand.u32 %v2953, 4294901760
        %2955 = vmatpush1.msra.mxu0 %v2954
        %2956 = vmatprep.subr.mxu0 0.0
        %v2957 = vand.u32 %v1664, 4294901760
        %v2958 = vsub.f32 %v1664, %v2957
        %v2959 = vand.u32 %v2958, 4294901760
        %2960 = vmatpush1.msra.mxu0 %v2959
        %2961 = vmatprep.subr.mxu0 0.0
        %v2962 = vand.u32 %v1665, 4294901760
        %v2963 = vsub.f32 %v1665, %v2962
        %v2964 = vand.u32 %v2963, 4294901760
        %2965 = vmatpush1.msra.mxu0 %v2964
        %2966 = vmatprep.subr.mxu0 0.0
        %v2967 = vand.u32 %v1666, 4294901760
        %v2968 = vsub.f32 %v1666, %v2967
        %v2969 = vand.u32 %v2968, 4294901760
        %2970 = vmatpush1.msra.mxu0 %v2969
        %2971 = vmatprep.subr.mxu0 0.0
        %v2972 = vand.u32 %v1667, 4294901760
        %v2973 = vsub.f32 %v1667, %v2972
        %v2974 = vand.u32 %v2973, 4294901760
        %2975 = vmatpush1.msra.mxu0 %v2974
        %2976 = vmatprep.subr.mxu0 0.0
        %v2977 = vand.u32 %v1668, 4294901760
        %v2978 = vsub.f32 %v1668, %v2977
        %v2979 = vand.u32 %v2978, 4294901760
        %2980 = vmatpush1.msra.mxu0 %v2979
        %2981 = vmatprep.subr.mxu0 0.0
        %v2982 = vand.u32 %v1669, 4294901760
        %v2983 = vsub.f32 %v1669, %v2982
        %v2984 = vand.u32 %v2983, 4294901760
        %2985 = vmatpush1.msra.mxu0 %v2984
        %2986 = vmatprep.subr.mxu0 0.0
        %v2987 = vand.u32 %v1670, 4294901760
        %v2988 = vsub.f32 %v1670, %v2987
        %v2989 = vand.u32 %v2988, 4294901760
        %2990 = vmatpush1.msra.mxu0 %v2989
        %2991 = vmatprep.subr.mxu0 0.0
        %v2992 = vand.u32 %v1671, 4294901760
        %v2993 = vsub.f32 %v1671, %v2992
        %v2994 = vand.u32 %v2993, 4294901760
        %2995 = vmatpush1.msra.mxu0 %v2994
        %2996 = vmatprep.subr.mxu0 0.0
        %v2997 = vand.u32 %v1672, 4294901760
        %v2998 = vsub.f32 %v1672, %v2997
        %v2999 = vand.u32 %v2998, 4294901760
        %3000 = vmatpush1.msra.mxu0 %v2999
        %3001 = vmatprep.subr.mxu0 0.0
        %v3002 = vand.u32 %v1673, 4294901760
        %v3003 = vsub.f32 %v1673, %v3002
        %v3004 = vand.u32 %v3003, 4294901760
        %3005 = vmatpush1.msra.mxu0 %v3004
        %3006 = vmatprep.subr.mxu0 0.0
        %v3007 = vand.u32 %v1674, 4294901760
        %v3008 = vsub.f32 %v1674, %v3007
        %v3009 = vand.u32 %v3008, 4294901760
        %3010 = vmatpush1.msra.mxu0 %v3009
        %3011 = vmatprep.subr.mxu0 0.0
        %v3012 = vand.u32 %v1675, 4294901760
        %v3013 = vsub.f32 %v1675, %v3012
        %v3014 = vand.u32 %v3013, 4294901760
        %3015 = vmatpush1.msra.mxu0 %v3014
        %3016 = vmatprep.subr.mxu0 0.0
        %v3017 = vand.u32 %v1676, 4294901760
        %v3018 = vsub.f32 %v1676, %v3017
        %v3019 = vand.u32 %v3018, 4294901760
        %3020 = vmatpush1.msra.mxu0 %v3019
        %3021 = vmatprep.subr.mxu0 0.0
        %v3022 = vand.u32 %v1677, 4294901760
        %v3023 = vsub.f32 %v1677, %v3022
        %v3024 = vand.u32 %v3023, 4294901760
        %3025 = vmatpush1.msra.mxu0 %v3024
        %3026 = vmatprep.subr.mxu0 0.0
        %v3027 = vand.u32 %v1678, 4294901760
        %v3028 = vsub.f32 %v1678, %v3027
        %v3029 = vand.u32 %v3028, 4294901760
        %3030 = vmatpush1.msra.mxu0 %v3029
        %3031 = vmatprep.subr.mxu0 0.0
        %v3032 = vand.u32 %v1679, 4294901760
        %v3033 = vsub.f32 %v1679, %v3032
        %v3034 = vand.u32 %v3033, 4294901760
        %3035 = vmatpush1.msra.mxu0 %v3034
        %3036 = vmatprep.subr.mxu0 0.0
        %v3037 = vand.u32 %v1680, 4294901760
        %v3038 = vsub.f32 %v1680, %v3037
        %v3039 = vand.u32 %v3038, 4294901760
        %3040 = vmatpush1.msra.mxu0 %v3039
        %3041 = vmatprep.subr.mxu0 0.0
        %v3042 = vand.u32 %v1681, 4294901760
        %v3043 = vsub.f32 %v1681, %v3042
        %v3044 = vand.u32 %v3043, 4294901760
        %3045 = vmatpush1.msra.mxu0 %v3044
        %3046 = vmatprep.subr.mxu0 0.0
        %v3047 = vand.u32 %v1682, 4294901760
        %v3048 = vsub.f32 %v1682, %v3047
        %v3049 = vand.u32 %v3048, 4294901760
        %3050 = vmatpush1.msra.mxu0 %v3049
        %3051 = vmatprep.subr.mxu0 0.0
        %v3052 = vand.u32 %v1683, 4294901760
        %v3053 = vsub.f32 %v1683, %v3052
        %v3054 = vand.u32 %v3053, 4294901760
        %3055 = vmatpush1.msra.mxu0 %v3054
        %3056 = vmatprep.subr.mxu0 0.0
        %v3057 = vand.u32 %v1684, 4294901760
        %v3058 = vsub.f32 %v1684, %v3057
        %v3059 = vand.u32 %v3058, 4294901760
        %3060 = vmatpush1.msra.mxu0 %v3059
        %3061 = vmatprep.subr.mxu0 0.0
        %v3062 = vand.u32 %v1685, 4294901760
        %v3063 = vsub.f32 %v1685, %v3062
        %v3064 = vand.u32 %v3063, 4294901760
        %3065 = vmatpush1.msra.mxu0 %v3064
        %v3066 = vand.u32 %v1623, 4294901760
        %3067 = vmatprep.mubr.f32.mxu0 %v3066
        %v3068 = vand.u32 %v1622, 4294901760
        %3069 = vmatmul.mubr.f32.gmra.mrb[0].mxu0 %v3068
        %v3070 = vpop.f32.mrb[0].mxu0
        %v3071 = vadd.f32 %v2738, %v3070
        %v3072 = vpop.f32.mrb[0].mxu0
        %v3073 = vand.u32 %v1625, 4294901760
        %3074 = vmatprep.mubr.f32.mxu0 %v3073
        %v3075 = vand.u32 %v1624, 4294901760
        %3076 = vmatmul.mubr.f32.gmra.mrb[0].mxu0 %v3075
        %v3077 = vpop.f32.mrb[0].mxu0
        %v3078 = vadd.f32 %v2749, %v3077
        %v3079 = vpop.f32.mrb[0].mxu0
        %v3080 = vand.u32 %v1627, 4294901760
        %3081 = vmatprep.mubr.f32.mxu0 %v3080
        %v3082 = vand.u32 %v1626, 4294901760
        %3083 = vmatmul.mubr.f32.gmra.mrb[0].mxu0 %v3082
        %v3084 = vpop.f32.mrb[0].mxu0
        %v3085 = vadd.f32 %v2760, %v3084
        %v3086 = vpop.f32.mrb[0].mxu0
        %v3087 = vand.u32 %v1629, 4294901760
        %3088 = vmatprep.mubr.f32.mxu0 %v3087
        %v3089 = vand.u32 %v1628, 4294901760
        %3090 = vmatmul.mubr.f32.gmra.mrb[0].mxu0 %v3089
        %v3091 = vpop.f32.mrb[0].mxu0
        %v3092 = vadd.f32 %v2771, %v3091
        %v3093 = vpop.f32.mrb[0].mxu0
        %v3094 = vand.u32 %v1631, 4294901760
        %3095 = vmatprep.mubr.f32.mxu0 %v3094
        %v3096 = vand.u32 %v1630, 4294901760
        %3097 = vmatmul.mubr.f32.gmra.mrb[0].mxu0 %v3096
        %v3098 = vpop.f32.mrb[0].mxu0
        %v3099 = vadd.f32 %v2782, %v3098
        %v3100 = vpop.f32.mrb[0].mxu0
        %v3101 = vand.u32 %v1633, 4294901760
        %3102 = vmatprep.mubr.f32.mxu0 %v3101
        %v3103 = vand.u32 %v1632, 4294901760
        %3104 = vmatmul.mubr.f32.gmra.mrb[0].mxu0 %v3103
        %v3105 = vpop.f32.mrb[0].mxu0
        %v3106 = vadd.f32 %v2793, %v3105
        %v3107 = vpop.f32.mrb[0].mxu0
        %v3108 = vand.u32 %v1635, 4294901760
        %3109 = vmatprep.mubr.f32.mxu0 %v3108
        %v3110 = vand.u32 %v1634, 4294901760
        %3111 = vmatmul.mubr.f32.gmra.mrb[0].mxu0 %v3110
        %v3112 = vpop.f32.mrb[0].mxu0
        %v3113 = vadd.f32 %v2804, %v3112
        %v3114 = vpop.f32.mrb[0].mxu0
        %v3115 = vand.u32 %v1637, 4294901760
        %3116 = vmatprep.mubr.f32.mxu0 %v3115
        %v3117 = vand.u32 %v1636, 4294901760
        %3118 = vmatmul.mubr.f32.gmra.mrb[0].mxu0 %v3117
        %v3119 = vpop.f32.mrb[0].mxu0
        %v3120 = vadd.f32 %v2815, %v3119
        %v3121 = vpop.f32.mrb[0].mxu0
        %v3122 = vand.u32 %v1639, 4294901760
        %3123 = vmatprep.mubr.f32.mxu0 %v3122
        %v3124 = vand.u32 %v1638, 4294901760
        %3125 = vmatmul.mubr.f32.gmra.mrb[0].mxu0 %v3124
        %v3126 = vpop.f32.mrb[0].mxu0
        %v3127 = vadd.f32 %v2826, %v3126
        %v3128 = vpop.f32.mrb[0].mxu0
        %v3129 = vand.u32 %v1641, 4294901760
        %3130 = vmatprep.mubr.f32.mxu0 %v3129
        %v3131 = vand.u32 %v1640, 4294901760
        %3132 = vmatmul.mubr.f32.gmra.mrb[0].mxu0 %v3131
        %v3133 = vpop.f32.mrb[0].mxu0
        %v3134 = vadd.f32 %v2837, %v3133
        %v3135 = vpop.f32.mrb[0].mxu0
        %v3136 = vand.u32 %v1643, 4294901760
        %3137 = vmatprep.mubr.f32.mxu0 %v3136
        %v3138 = vand.u32 %v1642, 4294901760
        %3139 = vmatmul.mubr.f32.gmra.mrb[0].mxu0 %v3138
        %v3140 = vpop.f32.mrb[0].mxu0
        %v3141 = vadd.f32 %v2848, %v3140
        %v3142 = vpop.f32.mrb[0].mxu0
        %v3143 = vand.u32 %v1645, 4294901760
        %3144 = vmatprep.mubr.f32.mxu0 %v3143
        %v3145 = vand.u32 %v1644, 4294901760
        %3146 = vmatmul.mubr.f32.gmra.mrb[0].mxu0 %v3145
        %v3147 = vpop.f32.mrb[0].mxu0
        %v3148 = vadd.f32 %v2859, %v3147
        %v3149 = vpop.f32.mrb[0].mxu0
        %v3150 = vand.u32 %v1647, 4294901760
        %3151 = vmatprep.mubr.f32.mxu0 %v3150
        %v3152 = vand.u32 %v1646, 4294901760
        %3153 = vmatmul.mubr.f32.gmra.mrb[0].mxu0 %v3152
        %v3154 = vpop.f32.mrb[0].mxu0
        %v3155 = vadd.f32 %v2870, %v3154
        %v3156 = vpop.f32.mrb[0].mxu0
        %v3157 = vand.u32 %v1649, 4294901760
        %3158 = vmatprep.mubr.f32.mxu0 %v3157
        %v3159 = vand.u32 %v1648, 4294901760
        %3160 = vmatmul.mubr.f32.gmra.mrb[0].mxu0 %v3159
        %v3161 = vpop.f32.mrb[0].mxu0
        %v3162 = vadd.f32 %v2881, %v3161
        %v3163 = vpop.f32.mrb[0].mxu0
        %v3164 = vand.u32 %v1651, 4294901760
        %3165 = vmatprep.mubr.f32.mxu0 %v3164
        %v3166 = vand.u32 %v1650, 4294901760
        %3167 = vmatmul.mubr.f32.gmra.mrb[0].mxu0 %v3166
        %v3168 = vpop.f32.mrb[0].mxu0
        %v3169 = vadd.f32 %v2892, %v3168
        %v3170 = vpop.f32.mrb[0].mxu0
        %v3171 = vand.u32 %v1653, 4294901760
        %3172 = vmatprep.mubr.f32.mxu0 %v3171
        %v3173 = vand.u32 %v1652, 4294901760
        %3174 = vmatmul.mubr.f32.gmra.mrb[0].mxu0 %v3173
        %v3175 = vpop.f32.mrb[0].mxu0
        %v3176 = vadd.f32 %v2903, %v3175
        %v3177 = vpop.f32.mrb[0].mxu0
        %3178 = vdwg.mxu0
        %3179 = vmatprep.subr.mxu0 0.0
        %v3180 = vand.u32 %v1654, 4294901760
        %3181 = vmatpush1.msra.mxu0 %v3180
        %3182 = vmatprep.subr.mxu0 0.0
        %v3183 = vand.u32 %v1655, 4294901760
        %3184 = vmatpush1.msra.mxu0 %v3183
        %3185 = vmatprep.subr.mxu0 0.0
        %v3186 = vand.u32 %v1656, 4294901760
        %3187 = vmatpush1.msra.mxu0 %v3186
        %3188 = vmatprep.subr.mxu0 0.0
        %v3189 = vand.u32 %v1657, 4294901760
        %3190 = vmatpush1.msra.mxu0 %v3189
        %3191 = vmatprep.subr.mxu0 0.0
        %v3192 = vand.u32 %v1658, 4294901760
        %3193 = vmatpush1.msra.mxu0 %v3192
        %3194 = vmatprep.subr.mxu0 0.0
        %v3195 = vand.u32 %v1659, 4294901760
        %3196 = vmatpush1.msra.mxu0 %v3195
        %3197 = vmatprep.subr.mxu0 0.0
        %v3198 = vand.u32 %v1660, 4294901760
        %3199 = vmatpush1.msra.mxu0 %v3198
        %3200 = vmatprep.subr.mxu0 0.0
        %v3201 = vand.u32 %v1661, 4294901760
        %3202 = vmatpush1.msra.mxu0 %v3201
        %3203 = vmatprep.subr.mxu0 0.0
        %v3204 = vand.u32 %v1662, 4294901760
        %3205 = vmatpush1.msra.mxu0 %v3204
        %3206 = vmatprep.subr.mxu0 0.0
        %v3207 = vand.u32 %v1663, 4294901760
        %3208 = vmatpush1.msra.mxu0 %v3207
        %3209 = vmatprep.subr.mxu0 0.0
        %v3210 = vand.u32 %v1664, 4294901760
        %3211 = vmatpush1.msra.mxu0 %v3210
        %3212 = vmatprep.subr.mxu0 0.0
        %v3213 = vand.u32 %v1665, 4294901760
        %3214 = vmatpush1.msra.mxu0 %v3213
        %3215 = vmatprep.subr.mxu0 0.0
        %v3216 = vand.u32 %v1666, 4294901760
        %3217 = vmatpush1.msra.mxu0 %v3216
        %3218 = vmatprep.subr.mxu0 0.0
        %v3219 = vand.u32 %v1667, 4294901760
        %3220 = vmatpush1.msra.mxu0 %v3219
        %3221 = vmatprep.subr.mxu0 0.0
        %v3222 = vand.u32 %v1668, 4294901760
        %3223 = vmatpush1.msra.mxu0 %v3222
        %3224 = vmatprep.subr.mxu0 0.0
        %v3225 = vand.u32 %v1669, 4294901760
        %3226 = vmatpush1.msra.mxu0 %v3225
        %3227 = vmatprep.subr.mxu0 0.0
        %v3228 = vand.u32 %v1670, 4294901760
        %3229 = vmatpush1.msra.mxu0 %v3228
        %3230 = vmatprep.subr.mxu0 0.0
        %v3231 = vand.u32 %v1671, 4294901760
        %3232 = vmatpush1.msra.mxu0 %v3231
        %3233 = vmatprep.subr.mxu0 0.0
        %v3234 = vand.u32 %v1672, 4294901760
        %3235 = vmatpush1.msra.mxu0 %v3234
        %3236 = vmatprep.subr.mxu0 0.0
        %v3237 = vand.u32 %v1673, 4294901760
        %3238 = vmatpush1.msra.mxu0 %v3237
        %3239 = vmatprep.subr.mxu0 0.0
        %v3240 = vand.u32 %v1674, 4294901760
        %3241 = vmatpush1.msra.mxu0 %v3240
        %3242 = vmatprep.subr.mxu0 0.0
        %v3243 = vand.u32 %v1675, 4294901760
        %3244 = vmatpush1.msra.mxu0 %v3243
        %3245 = vmatprep.subr.mxu0 0.0
        %v3246 = vand.u32 %v1676, 4294901760
        %3247 = vmatpush1.msra.mxu0 %v3246
        %3248 = vmatprep.subr.mxu0 0.0
        %v3249 = vand.u32 %v1677, 4294901760
        %3250 = vmatpush1.msra.mxu0 %v3249
        %3251 = vmatprep.subr.mxu0 0.0
        %v3252 = vand.u32 %v1678, 4294901760
        %3253 = vmatpush1.msra.mxu0 %v3252
        %3254 = vmatprep.subr.mxu0 0.0
        %v3255 = vand.u32 %v1679, 4294901760
        %3256 = vmatpush1.msra.mxu0 %v3255
        %3257 = vmatprep.subr.mxu0 0.0
        %v3258 = vand.u32 %v1680, 4294901760
        %3259 = vmatpush1.msra.mxu0 %v3258
        %3260 = vmatprep.subr.mxu0 0.0
        %v3261 = vand.u32 %v1681, 4294901760
        %3262 = vmatpush1.msra.mxu0 %v3261
        %3263 = vmatprep.subr.mxu0 0.0
        %v3264 = vand.u32 %v1682, 4294901760
        %3265 = vmatpush1.msra.mxu0 %v3264
        %3266 = vmatprep.subr.mxu0 0.0
        %v3267 = vand.u32 %v1683, 4294901760
        %3268 = vmatpush1.msra.mxu0 %v3267
        %3269 = vmatprep.subr.mxu0 0.0
        %v3270 = vand.u32 %v1684, 4294901760
        %3271 = vmatpush1.msra.mxu0 %v3270
        %3272 = vmatprep.subr.mxu0 0.0
        %v3273 = vand.u32 %v1685, 4294901760
        %3274 = vmatpush1.msra.mxu0 %v3273
        %v3275 = vand.u32 %v1623, 4294901760
        %3276 = vmatprep.mubr.f32.mxu0 %v3275
        %v3277 = vand.u32 %v1622, 4294901760
        %3278 = vmatmul.mubr.f32.gmra.mrb[0].mxu0 %v3277
        %v3279 = vpop.f32.mrb[0].mxu0
        %v3280 = vadd.f32 %v3071, %v3279
        %v3281 = vpop.f32.mrb[0].mxu0
        %v3282 = vand.u32 %v1625, 4294901760
        %3283 = vmatprep.mubr.f32.mxu0 %v3282
        %v3284 = vand.u32 %v1624, 4294901760
        %3285 = vmatmul.mubr.f32.gmra.mrb[0].mxu0 %v3284
        %v3286 = vpop.f32.mrb[0].mxu0
        %v3287 = vadd.f32 %v3078, %v3286
        %v3288 = vpop.f32.mrb[0].mxu0
        %v3289 = vand.u32 %v1627, 4294901760
        %3290 = vmatprep.mubr.f32.mxu0 %v3289
        %v3291 = vand.u32 %v1626, 4294901760
        %3292 = vmatmul.mubr.f32.gmra.mrb[0].mxu0 %v3291
        %v3293 = vpop.f32.mrb[0].mxu0
        %v3294 = vadd.f32 %v3085, %v3293
        %v3295 = vpop.f32.mrb[0].mxu0
        %v3296 = vand.u32 %v1629, 4294901760
        %3297 = vmatprep.mubr.f32.mxu0 %v3296
        %v3298 = vand.u32 %v1628, 4294901760
        %3299 = vmatmul.mubr.f32.gmra.mrb[0].mxu0 %v3298
        %v3300 = vpop.f32.mrb[0].mxu0
        %v3301 = vadd.f32 %v3092, %v3300
        %v3302 = vpop.f32.mrb[0].mxu0
        %v3303 = vand.u32 %v1631, 4294901760
        %3304 = vmatprep.mubr.f32.mxu0 %v3303
        %v3305 = vand.u32 %v1630, 4294901760
        %3306 = vmatmul.mubr.f32.gmra.mrb[0].mxu0 %v3305
        %v3307 = vpop.f32.mrb[0].mxu0
        %v3308 = vadd.f32 %v3099, %v3307
        %v3309 = vpop.f32.mrb[0].mxu0
        %v3310 = vand.u32 %v1633, 4294901760
        %3311 = vmatprep.mubr.f32.mxu0 %v3310
        %v3312 = vand.u32 %v1632, 4294901760
        %3313 = vmatmul.mubr.f32.gmra.mrb[0].mxu0 %v3312
        %v3314 = vpop.f32.mrb[0].mxu0
        %v3315 = vadd.f32 %v3106, %v3314
        %v3316 = vpop.f32.mrb[0].mxu0
        %v3317 = vand.u32 %v1635, 4294901760
        %3318 = vmatprep.mubr.f32.mxu0 %v3317
        %v3319 = vand.u32 %v1634, 4294901760
        %3320 = vmatmul.mubr.f32.gmra.mrb[0].mxu0 %v3319
        %v3321 = vpop.f32.mrb[0].mxu0
        %v3322 = vadd.f32 %v3113, %v3321
        %v3323 = vpop.f32.mrb[0].mxu0
        %v3324 = vand.u32 %v1637, 4294901760
        %3325 = vmatprep.mubr.f32.mxu0 %v3324
        %v3326 = vand.u32 %v1636, 4294901760
        %3327 = vmatmul.mubr.f32.gmra.mrb[0].mxu0 %v3326
        %v3328 = vpop.f32.mrb[0].mxu0
        %v3329 = vadd.f32 %v3120, %v3328
        %v3330 = vpop.f32.mrb[0].mxu0
        %v3331 = vand.u32 %v1639, 4294901760
        %3332 = vmatprep.mubr.f32.mxu0 %v3331
        %v3333 = vand.u32 %v1638, 4294901760
        %3334 = vmatmul.mubr.f32.gmra.mrb[0].mxu0 %v3333
        %v3335 = vpop.f32.mrb[0].mxu0
        %v3336 = vadd.f32 %v3127, %v3335
        %v3337 = vpop.f32.mrb[0].mxu0
        %v3338 = vand.u32 %v1641, 4294901760
        %3339 = vmatprep.mubr.f32.mxu0 %v3338
        %v3340 = vand.u32 %v1640, 4294901760
        %3341 = vmatmul.mubr.f32.gmra.mrb[0].mxu0 %v3340
        %v3342 = vpop.f32.mrb[0].mxu0
        %v3343 = vadd.f32 %v3134, %v3342
        %v3344 = vpop.f32.mrb[0].mxu0
        %v3345 = vand.u32 %v1643, 4294901760
        %3346 = vmatprep.mubr.f32.mxu0 %v3345
        %v3347 = vand.u32 %v1642, 4294901760
        %3348 = vmatmul.mubr.f32.gmra.mrb[0].mxu0 %v3347
        %v3349 = vpop.f32.mrb[0].mxu0
        %v3350 = vadd.f32 %v3141, %v3349
        %v3351 = vpop.f32.mrb[0].mxu0
        %v3352 = vand.u32 %v1645, 4294901760
        %3353 = vmatprep.mubr.f32.mxu0 %v3352
        %v3354 = vand.u32 %v1644, 4294901760
        %3355 = vmatmul.mubr.f32.gmra.mrb[0].mxu0 %v3354
        %v3356 = vpop.f32.mrb[0].mxu0
        %v3357 = vadd.f32 %v3148, %v3356
        %v3358 = vpop.f32.mrb[0].mxu0
        %v3359 = vand.u32 %v1647, 4294901760
        %3360 = vmatprep.mubr.f32.mxu0 %v3359
        %v3361 = vand.u32 %v1646, 4294901760
        %3362 = vmatmul.mubr.f32.gmra.mrb[0].mxu0 %v3361
        %v3363 = vpop.f32.mrb[0].mxu0
        %v3364 = vadd.f32 %v3155, %v3363
        %v3365 = vpop.f32.mrb[0].mxu0
        %v3366 = vand.u32 %v1649, 4294901760
        %3367 = vmatprep.mubr.f32.mxu0 %v3366
        %v3368 = vand.u32 %v1648, 4294901760
        %3369 = vmatmul.mubr.f32.gmra.mrb[0].mxu0 %v3368
        %v3370 = vpop.f32.mrb[0].mxu0
        %v3371 = vadd.f32 %v3162, %v3370
        %v3372 = vpop.f32.mrb[0].mxu0
        %v3373 = vand.u32 %v1651, 4294901760
        %3374 = vmatprep.mubr.f32.mxu0 %v3373
        %v3375 = vand.u32 %v1650, 4294901760
        %3376 = vmatmul.mubr.f32.gmra.mrb[0].mxu0 %v3375
        %v3377 = vpop.f32.mrb[0].mxu0
        %v3378 = vadd.f32 %v3169, %v3377
        %v3379 = vpop.f32.mrb[0].mxu0
        %v3380 = vand.u32 %v1653, 4294901760
        %3381 = vmatprep.mubr.f32.mxu0 %v3380
        %v3382 = vand.u32 %v1652, 4294901760
        %3383 = vmatmul.mubr.f32.gmra.mrb[0].mxu0 %v3382
        %v3384 = vpop.f32.mrb[0].mxu0
        %v3385 = vadd.f32 %v3176, %v3384
        %v3386 = vpop.f32.mrb[0].mxu0
        %3387 = vdwg.mxu0
        %3388 = vst [vmem:[%s191] sm:$0xff] %v3280
        %3389 = vst [vmem:[%s191 + $0x8] sm:$0xff] %v3287
        %3390 = vst [vmem:[%s191 + $0x10] sm:$0xff] %v3294
        %3391 = vst [vmem:[%s191 + $0x18] sm:$0xff] %v3301
        %3392 = vst [vmem:[%s191 + $0x20] sm:$0xff] %v3308
        %3393 = vst [vmem:[%s191 + $0x28] sm:$0xff] %v3315
        %3394 = vst [vmem:[%s191 + $0x30] sm:$0xff] %v3322
        %3395 = vst [vmem:[%s191 + $0x38] sm:$0xff] %v3329
        %3396 = vst [vmem:[%s191 + $0x40] sm:$0xff] %v3336
        %3397 = vst [vmem:[%s191 + $0x48] sm:$0xff] %v3343
        %3398 = vst [vmem:[%s191 + $0x50] sm:$0xff] %v3350
        %3399 = vst [vmem:[%s191 + $0x58] sm:$0xff] %v3357
        %3400 = vst [vmem:[%s191 + $0x60] sm:$0xff] %v3364
        %3401 = vst [vmem:[%s191 + $0x68] sm:$0xff] %v3371
        %3402 = vst [vmem:[%s191 + $0x70] sm:$0xff] %v3378
        %3403 = vst [vmem:[%s191 + $0x78] sm:$0xff] %v3385
        %s3404 = sand.u32 %s115, 1
        %s3405 = scalar_lea.sflag [#allocation3], %s3404
        %s3406 = sand.u32 %s115, 1
        %s3407 = smul.addr %s3406, 128
        %s3408 = scalar_lea.vmem [#allocation2], %s3407
        // Predicated region
        $region37: #{tpu_custom_call.1} parent=35 // pred_check
          %p3409 = pneg %p125
        $region38: #{tpu_custom_call.1} parent=35 // pred_check_branch
          %3411 = sbr.rel (%p3409) target = $region40
        $region39: #{tpu_custom_call.1} parent=35 // pred_region
          %s3412 = smul.u32 16, %s18
          %s3414 = ssub.s32 2048, 2048
          %3415 = vsyncadd %s3405, %s3414
          %s3416 = smul.addr %s3412, 128
          %s3417 = scalar_lea.hbm %s4, %s3416
          %s3418 = sshll.u32 %s3408, 4
          %s3419 = int_to_ptr.vmem [resolvable:$true] %s3418
          %3424 = dma.vmem_to_hbm [thread:$0]  %s3419, 2048, %s3417, %s3405, 128, 128, 8
        $region40: #{tpu_custom_call.1} parent=35 // pred_fallthru
          _
      $region36: #{tpu_custom_call.1} parent=5 // pred_fallthru
        _
      %p3425 = scmp.le.s32.totalorder 2, %s13
      // Predicated region
      $region41: #{tpu_custom_call.1} parent=5 // pred_check
        %p3426 = pneg %p3425
      $region42: #{tpu_custom_call.1} parent=5 // pred_check_branch
        %3428 = sbr.rel (%p3426) target = $region44
      $region43: #{tpu_custom_call.1} parent=5 // pred_region
        %s3429 = ssub.s32 %s13, 2
        // Predicated region
        $region45: #{tpu_custom_call.1} parent=43 // pred_check
          %p3430 = pneg %p131
        $region46: #{tpu_custom_call.1} parent=43 // pred_check_branch
          %3432 = sbr.rel (%p3430) target = $region48
        $region47: #{tpu_custom_call.1} parent=43 // pred_region
          %s3433 = sand.u32 %s116, 1
          %s3434 = scalar_lea.sflag [#allocation3], %s3433
          %s3435 = sand.u32 %s116, 1
          %s3436 = smul.addr %s3435, 128
          %s3437 = scalar_lea.vmem [#allocation2], %s3436
          %3438 = dma.done %s3434, 2048
        $region48: #{tpu_custom_call.1} parent=43 // pred_fallthru
          _
      $region44: #{tpu_custom_call.1} parent=5 // pred_fallthru
        _
    $region6: #{tpu_custom_call.1} parent=1 // loop_footer
      %s17 = sadd.s32 1, %s13
    $region7: #{tpu_custom_call.1} parent=1 // loop_footer_branch
      %12 = sbr.rel target = $region3
    $region8: #{tpu_custom_call.1} parent=1 // loop_exit
      _
    %3439 = vsyncpa [#allocation3], 1
    %s3440 = scalar_lea.sflag [#allocation3], 1
    %3441 = vsyncpa %s3440, 1

</llo_original>
